<compile_context>
chip_gen: v6e
topology: v6e:2x2x1
jax: 0.10.0
libtpu: 0.0.40
codegen_flags: <defaults>
</compile_context>

<pallas_src>
import math

import jax
import jax.numpy as jnp
from jax import lax
from jax.experimental import pallas as pl
from jax.experimental.pallas import tpu as pltpu

# ---- model dims (small, deterministic) ----
B = 2          # batch
L = 8          # seq len
D_MODEL = 32
N_HEADS = 4
D_K = 8
D_V = 8
BH = B * N_HEADS
LN_EPS = 1e-5
MASK_FILL = -1000000000.0


def mha_kernel(x_ref, mask_ref, wqkv_ref, wfc_ref, out_ref, attn_ref):
    # x_ref    : [3*B, L, D_MODEL]          rows ordered (qkv, batch) -> s*B + b
    # mask_ref : [B, L, L] int32            nonzero == masked
    # wqkv_ref : [3*B*H, D_MODEL, D_K]      head-major projection weights,
    #                                       batch index = s*(B*H) + b*H + h
    # wfc_ref  : [B*H, D_V, D_MODEL]        head-major output-projection weight
    # out_ref  : [B, L, D_MODEL]
    # attn_ref : [B*H, L, L]                rows ordered b*H + h
    x = x_ref[...]                                            # [3B, L, D]

    # --- Q/K/V projections for all (qkv, batch, head) in ONE batched matmul.
    #     Only leading-dim broadcast / leading-dim merge (no lane reshuffles).
    xb = jnp.broadcast_to(x[:, None], (3 * B, N_HEADS, L, D_MODEL))
    xb = xb.reshape(3 * BH, L, D_MODEL)                       # (s*B+b)*H + h
    proj = lax.dot_general(
        xb, wqkv_ref[...],
        dimension_numbers=(((2,), (1,)), ((0,), (0,))),
        preferred_element_type=jnp.float32)                   # [3*BH, L, D_K]
    q = proj[0:BH]                                            # batch idx b*H+h
    k = proj[BH:2 * BH]
    v = proj[2 * BH:3 * BH]

    # --- scaled dot-product attention, batched over (batch, head).
    scores = jnp.einsum('bqd,bkd->bqk', q, k,
                        preferred_element_type=jnp.float32)
    scores = scores * (1.0 / math.sqrt(D_K))
    mask_bh = jnp.broadcast_to(mask_ref[...][:, None], (B, N_HEADS, L, L))
    mask_bh = mask_bh.reshape(BH, L, L)
    scores = jnp.where(mask_bh > 0, MASK_FILL, scores)        # masked_fill_
    scores = scores - jnp.max(scores, axis=-1, keepdims=True) # stable softmax
    e = jnp.exp(scores)
    denom = jnp.sum(e, axis=-1, keepdims=True)
    r = pl.reciprocal(denom, approx=True)                     # EUP slot
    r = r * (2.0 - denom * r)                                 # 1 Newton step
    attn = e * r                                              # [BH, L, L]
    attn_ref[...] = attn                                      # single store

    ctx = jnp.einsum('bqk,bkd->bqd', attn, v,
                     preferred_element_type=jnp.float32)      # [BH, L, D_V]

    # --- output projection: per-(batch,head) matmul, then sum over heads
    #     (mathematically identical to concat-heads @ W_fc).
    part = jnp.einsum('bld,bdm->blm', ctx, wfc_ref[...],
                      preferred_element_type=jnp.float32)     # [BH, L, D_MODEL]
    out = jnp.sum(part.reshape(B, N_HEADS, L, D_MODEL), axis=1)  # [B, L, D]

    # --- residual add + LayerNorm(d_model) (default weight=1, bias=0).
    out = out + x[0:B]                                        # residual = input_Q
    mean = jnp.mean(out, axis=-1, keepdims=True)
    cen = out - mean
    var = jnp.mean(cen * cen, axis=-1, keepdims=True)
    out_ref[...] = cen * lax.rsqrt(var + LN_EPS)              # single store


def multi_head_attention(input_Q, input_K, input_V, attn_mask, w_q, w_k, w_v, w_fc):
    """input_*: [B, L, D_MODEL] f32; attn_mask: [B, L, L] bool.
    Weights stored as [in, out] (x @ W)."""
    # Pack activations and build head-major, batch-broadcast weight slabs in
    # the wrapper (free XLA layout work; kernel sees 4 inputs / 4 DMAs total).
    x_in = jnp.stack([input_Q, input_K, input_V], axis=0).reshape(3 * B, L, D_MODEL)
    w_qkv_h = (jnp.stack([w_q, w_k, w_v], axis=0)              # [3, D, H*D_K]
               .reshape(3, D_MODEL, N_HEADS, D_K)
               .transpose(0, 2, 1, 3))                         # [3, H, D, D_K]
    w_qkv_b = jnp.broadcast_to(w_qkv_h[:, None],
                               (3, B, N_HEADS, D_MODEL, D_K)
                               ).reshape(3 * BH, D_MODEL, D_K)  # idx s*BH+b*H+h
    w_fc_h = w_fc.reshape(N_HEADS, D_V, D_MODEL)               # [H, D_V, D]
    w_fc_b = jnp.broadcast_to(w_fc_h[None],
                              (B, N_HEADS, D_V, D_MODEL)
                              ).reshape(BH, D_V, D_MODEL)       # idx b*H+h
    mask_i32 = attn_mask.astype(jnp.int32)

    out, attn_bh = pl.pallas_call(
        mha_kernel,
        out_shape=(
            jax.ShapeDtypeStruct((B, L, D_MODEL), jnp.float32),
            jax.ShapeDtypeStruct((BH, L, L), jnp.float32),
        ),
        grid=(1,),
        in_specs=[
            pl.BlockSpec((3 * B, L, D_MODEL), lambda i: (0, 0, 0)),
            pl.BlockSpec((B, L, L), lambda i: (0, 0, 0)),
            pl.BlockSpec((3 * BH, D_MODEL, D_K), lambda i: (0, 0, 0)),
            pl.BlockSpec((BH, D_V, D_MODEL), lambda i: (0, 0, 0)),
        ],
        out_specs=(
            pl.BlockSpec((B, L, D_MODEL), lambda i: (0, 0, 0)),
            pl.BlockSpec((BH, L, L), lambda i: (0, 0, 0)),
        ),
        compiler_params=pltpu.CompilerParams(
            dimension_semantics=("arbitrary",)),
    )(x_in, mask_i32, w_qkv_b, w_fc_b)

    attn = attn_bh.reshape(B, N_HEADS, L, L)   # free relabel outside the kernel
    return out, attn


def reference(input_Q, input_K, input_V, attn_mask, w_q, w_k, w_v, w_fc):
    """Pure-JAX reference mirroring the PyTorch forward."""
    Q = (input_Q @ w_q).reshape(B, L, N_HEADS, D_K).transpose(0, 2, 1, 3)
    K = (input_K @ w_k).reshape(B, L, N_HEADS, D_K).transpose(0, 2, 1, 3)
    V = (input_V @ w_v).reshape(B, L, N_HEADS, D_V).transpose(0, 2, 1, 3)
    scores = jnp.einsum('bhqd,bhkd->bhqk', Q, K) / math.sqrt(D_K)
    scores = jnp.where(attn_mask[:, None, :, :], MASK_FILL, scores)
    attn = jax.nn.softmax(scores, axis=-1)
    context = jnp.einsum('bhqk,bhkd->bhqd', attn, V)
    context = context.transpose(0, 2, 1, 3).reshape(B, L, N_HEADS * D_V)
    out = context @ w_fc + input_Q
    mean = out.mean(-1, keepdims=True)
    var = ((out - mean) ** 2).mean(-1, keepdims=True)
    return (out - mean) / jnp.sqrt(var + LN_EPS), attn


if __name__ == "__main__":
    key = jax.random.PRNGKey(0)
    k1, k2, k3, k4, k5, k6, k7, k8 = jax.random.split(key, 8)

    input_Q = jax.random.normal(k1, (B, L, D_MODEL), jnp.float32)
    input_K = jax.random.normal(k2, (B, L, D_MODEL), jnp.float32)
    input_V = jax.random.normal(k3, (B, L, D_MODEL), jnp.float32)

    # causal-style boolean mask: True == masked position
    causal = jnp.triu(jnp.ones((L, L), jnp.bool_), k=1)
    attn_mask = jnp.broadcast_to(causal, (B, L, L))

    # deterministic "Linear" weights, stored as [in, out] (x @ W)
    scale = 1.0 / math.sqrt(D_MODEL)
    w_q = jax.random.uniform(k4, (D_MODEL, N_HEADS * D_K), jnp.float32, -scale, scale)
    w_k = jax.random.uniform(k5, (D_MODEL, N_HEADS * D_K), jnp.float32, -scale, scale)
    w_v = jax.random.uniform(k6, (D_MODEL, N_HEADS * D_V), jnp.float32, -scale, scale)
    scale_fc = 1.0 / math.sqrt(N_HEADS * D_V)
    w_fc = jax.random.uniform(k7, (N_HEADS * D_V, D_MODEL), jnp.float32, -scale_fc, scale_fc)

    out, attn = multi_head_attention(input_Q, input_K, input_V, attn_mask,
                                     w_q, w_k, w_v, w_fc)
    out = jax.block_until_ready(out)
    attn = jax.block_until_ready(attn)

    ref_out, ref_attn = reference(input_Q, input_K, input_V, attn_mask,
                                  w_q, w_k, w_v, w_fc)
    assert out.shape == (B, L, D_MODEL) and attn.shape == (B, N_HEADS, L, L)
    assert jnp.allclose(out, ref_out, atol=2e-4, rtol=2e-4)
    assert jnp.allclose(attn, ref_attn, atol=1e-4, rtol=1e-4)

    print("KERNEL_OK")
</pallas_src>

<mosaic_0001>
module attributes {stable_mosaic.version = 11 : i64} {
  func.func @mha_kernel(%arg0: i32, %arg1: memref<6x8x32xf32, #tpu.memory_space<vmem>>, %arg2: memref<2x8x8xi32, #tpu.memory_space<vmem>>, %arg3: memref<24x32x8xf32, #tpu.memory_space<vmem>>, %arg4: memref<8x8x32xf32, #tpu.memory_space<vmem>>, %arg5: memref<2x8x32xf32, #tpu.memory_space<vmem>>, %arg6: memref<8x8x8xf32, #tpu.memory_space<vmem>>) attributes {dimension_semantics = [#tpu.dimension_semantics<arbitrary>], iteration_bounds = array<i64: 1>, scalar_prefetch = 0 : i64, scratch_operands = 0 : i64, tpu.core_type = #tpu.core_type<tc>, window_params = [{pipeline_mode = #tpu.pipeline_mode<synchronous>, transform_indices = @transform_0, window_bounds = array<i64: 6, 8, 32>}, {pipeline_mode = #tpu.pipeline_mode<synchronous>, transform_indices = @transform_1, window_bounds = array<i64: 2, 8, 8>}, {pipeline_mode = #tpu.pipeline_mode<synchronous>, transform_indices = @transform_2, window_bounds = array<i64: 24, 32, 8>}, {pipeline_mode = #tpu.pipeline_mode<synchronous>, transform_indices = @transform_3, window_bounds = array<i64: 8, 8, 32>}, {pipeline_mode = #tpu.pipeline_mode<synchronous>, transform_indices = @transform_4, window_bounds = array<i64: 2, 8, 32>}, {pipeline_mode = #tpu.pipeline_mode<synchronous>, transform_indices = @transform_5, window_bounds = array<i64: 8, 8, 8>}]} {
    %c0 = arith.constant 0 : index
    %c0_0 = arith.constant 0 : index
    %c0_1 = arith.constant 0 : index
    %0 = vector.load %arg1[%c0, %c0_0, %c0_1] : memref<6x8x32xf32, #tpu.memory_space<vmem>>, vector<6x8x32xf32>
    %1 = vector.shape_cast %0 : vector<6x8x32xf32> to vector<6x1x8x32xf32>
    %2 = vector.shape_cast %1 : vector<6x1x8x32xf32> to vector<6x1x8x32xf32>
    %3 = vector.broadcast %2 : vector<6x1x8x32xf32> to vector<6x4x8x32xf32>
    %4 = vector.shape_cast %3 : vector<6x4x8x32xf32> to vector<24x8x32xf32>
    %c0_2 = arith.constant 0 : index
    %c0_3 = arith.constant 0 : index
    %c0_4 = arith.constant 0 : index
    %5 = vector.load %arg3[%c0_2, %c0_3, %c0_4] : memref<24x32x8xf32, #tpu.memory_space<vmem>>, vector<24x32x8xf32>
    %cst = arith.constant dense<0.000000e+00> : vector<24x8x8xf32>
    %6 = tpu.matmul %4, %5, %cst {dimension_numbers = #tpu.dot_dimension_numbers<[2], [1], [1], [2], [0, 0, 0, 1, 1, 2], [0], [0]>} : vector<24x8x32xf32>, vector<24x32x8xf32>, vector<24x8x8xf32> -> vector<24x8x8xf32>
    %7 = vector.extract_strided_slice %6 {offsets = [0, 0, 0], sizes = [8, 8, 8], strides = [1, 1, 1]} : vector<24x8x8xf32> to vector<8x8x8xf32>
    %8 = vector.extract_strided_slice %6 {offsets = [8, 0, 0], sizes = [8, 8, 8], strides = [1, 1, 1]} : vector<24x8x8xf32> to vector<8x8x8xf32>
    %9 = vector.extract_strided_slice %6 {offsets = [16, 0, 0], sizes = [8, 8, 8], strides = [1, 1, 1]} : vector<24x8x8xf32> to vector<8x8x8xf32>
    "tpu.trace_start"() <{level = 10 : i32, message = "bqd,bkd->bqk"}> : () -> ()
    %cst_5 = arith.constant dense<0.000000e+00> : vector<8x8x8xf32>
    %10 = tpu.matmul %7, %8, %cst_5 {dimension_numbers = #tpu.dot_dimension_numbers<[2], [2], [1], [1], [0, 0, 0, 1, 1, 1], [0], [0]>} : vector<8x8x8xf32>, vector<8x8x8xf32>, vector<8x8x8xf32> -> vector<8x8x8xf32>
    "tpu.trace_stop"() : () -> ()
    %cst_6 = arith.constant 0.353553385 : f32
    %11 = vector.broadcast %cst_6 : f32 to vector<8x8x8xf32>
    %12 = arith.mulf %10, %11 : vector<8x8x8xf32>
    %c0_7 = arith.constant 0 : index
    %c0_8 = arith.constant 0 : index
    %c0_9 = arith.constant 0 : index
    %13 = vector.load %arg2[%c0_7, %c0_8, %c0_9] : memref<2x8x8xi32, #tpu.memory_space<vmem>>, vector<2x8x8xi32>
    %14 = vector.shape_cast %13 : vector<2x8x8xi32> to vector<2x1x8x8xi32>
    %15 = vector.shape_cast %14 : vector<2x1x8x8xi32> to vector<2x1x8x8xi32>
    %16 = vector.broadcast %15 : vector<2x1x8x8xi32> to vector<2x4x8x8xi32>
    %17 = vector.shape_cast %16 : vector<2x4x8x8xi32> to vector<8x8x8xi32>
    %c0_i32 = arith.constant 0 : i32
    %18 = vector.broadcast %c0_i32 : i32 to vector<8x8x8xi32>
    %19 = arith.cmpi sgt, %17, %18 : vector<8x8x8xi32>
    %cst_10 = arith.constant -1.000000e+09 : f32
    %20 = vector.broadcast %cst_10 : f32 to vector<8x8x8xf32>
    %21 = arith.select %19, %20, %12 : vector<8x8x8xi1>, vector<8x8x8xf32>
    %cst_11 = arith.constant dense<0xFF800000> : vector<8x8xf32>
    %22 = vector.multi_reduction <maximumf>, %21, %cst_11 [2] : vector<8x8x8xf32> to vector<8x8xf32>
    %23 = vector.shape_cast %22 : vector<8x8xf32> to vector<8x8x1xf32>
    %24 = vector.broadcast %23 : vector<8x8x1xf32> to vector<8x8x8xf32>
    %25 = arith.subf %21, %24 : vector<8x8x8xf32>
    %26 = math.exp %25 : vector<8x8x8xf32>
    %cst_12 = arith.constant dense<0.000000e+00> : vector<8x8xf32>
    %27 = vector.multi_reduction <add>, %26, %cst_12 [2] : vector<8x8x8xf32> to vector<8x8xf32>
    %28 = vector.shape_cast %27 : vector<8x8xf32> to vector<8x8x1xf32>
    %29 = tpu.reciprocal %28 {approx = true} : vector<8x8x1xf32> -> vector<8x8x1xf32>
    %30 = arith.mulf %28, %29 : vector<8x8x1xf32>
    %cst_13 = arith.constant 2.000000e+00 : f32
    %31 = vector.broadcast %cst_13 : f32 to vector<8x8x1xf32>
    %32 = arith.subf %31, %30 : vector<8x8x1xf32>
    %33 = arith.mulf %29, %32 : vector<8x8x1xf32>
    %34 = vector.broadcast %33 : vector<8x8x1xf32> to vector<8x8x8xf32>
    %35 = arith.mulf %26, %34 : vector<8x8x8xf32>
    %c0_14 = arith.constant 0 : index
    %c0_15 = arith.constant 0 : index
    %c0_16 = arith.constant 0 : index
    %36 = vector.load %arg6[%c0_14, %c0_15, %c0_16] : memref<8x8x8xf32, #tpu.memory_space<vmem>>, vector<8x8x8xf32>
    tpu.vector_store %arg6[%c0_14, %c0_15, %c0_16], %35 {strides = array<i32>} : memref<8x8x8xf32, #tpu.memory_space<vmem>>, vector<8x8x8xf32>,
    "tpu.trace_start"() <{level = 10 : i32, message = "bqk,bkd->bqd"}> : () -> ()
    %cst_17 = arith.constant dense<0.000000e+00> : vector<8x8x8xf32>
    %37 = tpu.matmul %35, %9, %cst_17 {dimension_numbers = #tpu.dot_dimension_numbers<[2], [1], [1], [2], [0, 0, 0, 1, 1, 2], [0], [0]>} : vector<8x8x8xf32>, vector<8x8x8xf32>, vector<8x8x8xf32> -> vector<8x8x8xf32>
    "tpu.trace_stop"() : () -> ()
    %c0_18 = arith.constant 0 : index
    %c0_19 = arith.constant 0 : index
    %c0_20 = arith.constant 0 : index
    %38 = vector.load %arg4[%c0_18, %c0_19, %c0_20] : memref<8x8x32xf32, #tpu.memory_space<vmem>>, vector<8x8x32xf32>
    "tpu.trace_start"() <{level = 10 : i32, message = "bld,bdm->blm"}> : () -> ()
    %cst_21 = arith.constant dense<0.000000e+00> : vector<8x8x32xf32>
    %39 = tpu.matmul %37, %38, %cst_21 {dimension_numbers = #tpu.dot_dimension_numbers<[2], [1], [1], [2], [0, 0, 0, 1, 1, 2], [0], [0]>} : vector<8x8x8xf32>, vector<8x8x32xf32>, vector<8x8x32xf32> -> vector<8x8x32xf32>
    "tpu.trace_stop"() : () -> ()
    %40 = vector.shape_cast %39 : vector<8x8x32xf32> to vector<2x4x8x32xf32>
    %cst_22 = arith.constant dense<0.000000e+00> : vector<2x8x32xf32>
    %41 = vector.multi_reduction <add>, %40, %cst_22 [1] : vector<2x4x8x32xf32> to vector<2x8x32xf32>
    %42 = vector.extract_strided_slice %0 {offsets = [0, 0, 0], sizes = [2, 8, 32], strides = [1, 1, 1]} : vector<6x8x32xf32> to vector<2x8x32xf32>
    %43 = arith.addf %41, %42 : vector<2x8x32xf32>
    %cst_23 = arith.constant dense<0.000000e+00> : vector<2x8xf32>
    %44 = vector.multi_reduction <add>, %43, %cst_23 [2] : vector<2x8x32xf32> to vector<2x8xf32>
    %45 = vector.shape_cast %44 : vector<2x8xf32> to vector<2x8x1xf32>
    %cst_24 = arith.constant 3.200000e+01 : f32
    %46 = vector.broadcast %cst_24 : f32 to vector<2x8x1xf32>
    %47 = arith.divf %45, %46 : vector<2x8x1xf32>
    %48 = vector.broadcast %47 : vector<2x8x1xf32> to vector<2x8x32xf32>
    %49 = arith.subf %43, %48 : vector<2x8x32xf32>
    %50 = arith.mulf %49, %49 : vector<2x8x32xf32>
    %cst_25 = arith.constant dense<0.000000e+00> : vector<2x8xf32>
    %51 = vector.multi_reduction <add>, %50, %cst_25 [2] : vector<2x8x32xf32> to vector<2x8xf32>
    %52 = vector.shape_cast %51 : vector<2x8xf32> to vector<2x8x1xf32>
    %cst_26 = arith.constant 3.200000e+01 : f32
    %53 = vector.broadcast %cst_26 : f32 to vector<2x8x1xf32>
    %54 = arith.divf %52, %53 : vector<2x8x1xf32>
    %cst_27 = arith.constant 9.99999974E-6 : f32
    %55 = vector.broadcast %cst_27 : f32 to vector<2x8x1xf32>
    %56 = arith.addf %54, %55 : vector<2x8x1xf32>
    %57 = math.rsqrt %56 : vector<2x8x1xf32>
    %58 = vector.broadcast %57 : vector<2x8x1xf32> to vector<2x8x32xf32>
    %59 = arith.mulf %49, %58 : vector<2x8x32xf32>
    %c0_28 = arith.constant 0 : index
    %c0_29 = arith.constant 0 : index
    %c0_30 = arith.constant 0 : index
    %60 = vector.load %arg5[%c0_28, %c0_29, %c0_30] : memref<2x8x32xf32, #tpu.memory_space<vmem>>, vector<2x8x32xf32>
    tpu.vector_store %arg5[%c0_28, %c0_29, %c0_30], %59 {strides = array<i32>} : memref<2x8x32xf32, #tpu.memory_space<vmem>>, vector<2x8x32xf32>,
    return
  }
  func.func @transform_0(%arg0: i32) -> (i32, i32, i32) {
    %c0_i32 = arith.constant 0 : i32
    %c0_i32_0 = arith.constant 0 : i32
    %c0_i32_1 = arith.constant 0 : i32
    %c0_i32_2 = arith.constant 0 : i32
    return %c0_i32, %c0_i32_0, %c0_i32_1 : i32, i32, i32
  }
  func.func @transform_1(%arg0: i32) -> (i32, i32, i32) {
    %c0_i32 = arith.constant 0 : i32
    %c0_i32_0 = arith.constant 0 : i32
    %c0_i32_1 = arith.constant 0 : i32
    %c0_i32_2 = arith.constant 0 : i32
    return %c0_i32, %c0_i32_0, %c0_i32_1 : i32, i32, i32
  }
  func.func @transform_2(%arg0: i32) -> (i32, i32, i32) {
    %c0_i32 = arith.constant 0 : i32
    %c0_i32_0 = arith.constant 0 : i32
    %c0_i32_1 = arith.constant 0 : i32
    %c0_i32_2 = arith.constant 0 : i32
    return %c0_i32, %c0_i32_0, %c0_i32_1 : i32, i32, i32
  }
  func.func @transform_3(%arg0: i32) -> (i32, i32, i32) {
    %c0_i32 = arith.constant 0 : i32
    %c0_i32_0 = arith.constant 0 : i32
    %c0_i32_1 = arith.constant 0 : i32
    %c0_i32_2 = arith.constant 0 : i32
    return %c0_i32, %c0_i32_0, %c0_i32_1 : i32, i32, i32
  }
  func.func @transform_4(%arg0: i32) -> (i32, i32, i32) {
    %c0_i32 = arith.constant 0 : i32
    %c0_i32_0 = arith.constant 0 : i32
    %c0_i32_1 = arith.constant 0 : i32
    %c0_i32_2 = arith.constant 0 : i32
    return %c0_i32, %c0_i32_0, %c0_i32_1 : i32, i32, i32
  }
  func.func @transform_5(%arg0: i32) -> (i32, i32, i32) {
    %c0_i32 = arith.constant 0 : i32
    %c0_i32_0 = arith.constant 0 : i32
    %c0_i32_1 = arith.constant 0 : i32
    %c0_i32_2 = arith.constant 0 : i32
    return %c0_i32, %c0_i32_0, %c0_i32_1 : i32, i32, i32
  }
}

</mosaic_0001>

<llo_original>
// kernel: tpu_custom_call.1
$region0: #{tpu_custom_call.1}
  #allocation0 [shape = 'u32[]', space=smem, size = 0x4, offset = 0x4, fixed_abs, tag = 'smem constant byte address 0x4 - core index']
  #allocation1 [shape = 'u32[144,128]{1,0:T(1,128)}', space=vmem, size = 0x12000, scoped, tag = 'internal scratch']
  %s0 = inlined_call_operand.vmem [shape: f32[6,8,32], index: 0, kind: input, shape index: {}]
  %s1 = inlined_call_operand.vmem [shape: s32[2,8,8], index: 1, kind: input, shape index: {}]
  %s2 = inlined_call_operand.vmem [shape: f32[24,32,8], index: 2, kind: input, shape index: {}]
  %s3 = inlined_call_operand.vmem [shape: f32[8,8,32], index: 3, kind: input, shape index: {}]
  %s4 = inlined_call_operand.hbm [shape: f32[2,8,32], index: 4, kind: output, shape index: {0}]
  %s5 = inlined_call_operand.hbm [shape: f32[8,8,8], index: 5, kind: output, shape index: {1}]
  %6 = xla_tuple %s4, %s5
  %s7 = sld [smem:[#allocation0]]
  $region34: #{tpu_custom_call.1} parent=0
    _
  %s9 = ssub.s32 1, %s7
  %s10 = scalar_select 0, %s9, %s7
  $region1: #{tpu_custom_call.1} parent=0
    #allocation2 [shape = 'u8[8192]{0}', space=vmem, size = 0x2000, scoped, tag = 'output window, operand 0, single buffered']
    #allocation3 [shape = 's32[1]{0}', space=sflag, size = 0x4, scoped, tag = 'scoped memory for tpu_custom_call.1']
    #allocation4 [shape = 'u8[32768]{0}', space=vmem, size = 0x8000, scoped, tag = 'output window, operand 1, single buffered']
    #allocation5 [shape = 's32[1]{0}', space=sflag, size = 0x4, scoped, tag = 'scoped memory for tpu_custom_call.1']
    %11 = vsyncpa [#allocation3], 0
    %12 = vsyncpa [#allocation5], 0
    // Predicated region
    $region2: #{tpu_custom_call.1} parent=1 // pred_check
      _
    $region3: #{tpu_custom_call.1} parent=1 // pred_check_branch
      %14 = sbr.rel (0) target = $region5
    $region4: #{tpu_custom_call.1} parent=1 // pred_region
      _
    $region5: #{tpu_custom_call.1} parent=1 // pred_fallthru
      _
    // Predicated region
    $region6: #{tpu_custom_call.1} parent=1 // pred_check
      _
    $region7: #{tpu_custom_call.1} parent=1 // pred_check_branch
      %16 = sbr.rel (0) target = $region9
    $region8: #{tpu_custom_call.1} parent=1 // pred_region
      _
    $region9: #{tpu_custom_call.1} parent=1 // pred_fallthru
      _
    // Predicated region
    $region10: #{tpu_custom_call.1} parent=1 // pred_check
      _
    $region11: #{tpu_custom_call.1} parent=1 // pred_check_branch
      %18 = sbr.rel (0) target = $region13
    $region12: #{tpu_custom_call.1} parent=1 // pred_region
      _
    $region13: #{tpu_custom_call.1} parent=1 // pred_fallthru
      _
    // Predicated region
    $region14: #{tpu_custom_call.1} parent=1 // pred_check
      _
    $region15: #{tpu_custom_call.1} parent=1 // pred_check_branch
      %20 = sbr.rel (0) target = $region17
    $region16: #{tpu_custom_call.1} parent=1 // pred_region
      _
    $region17: #{tpu_custom_call.1} parent=1 // pred_fallthru
      _
    %v21 = vld [vmem:[%s0] sm:$0xff]
    %v22 = vld [vmem:[%s0 + $0x8] sm:$0xff]
    %v23 = vld [vmem:[%s0 + $0x10] sm:$0xff]
    %v24 = vld [vmem:[%s0 + $0x18] sm:$0xff]
    %v25 = vld [vmem:[%s0 + $0x20] sm:$0xff]
    %v26 = vld [vmem:[%s0 + $0x28] sm:$0xff]
    %v27 = vld [vmem:[%s2] sm:$0xff]
    %v28 = vld [vmem:[%s2 + $0x8] sm:$0xff]
    %v29 = vld [vmem:[%s2 + $0x10] sm:$0xff]
    %v30 = vld [vmem:[%s2 + $0x18] sm:$0xff]
    %v31 = vld [vmem:[%s2 + $0x20] sm:$0xff]
    %v32 = vld [vmem:[%s2 + $0x28] sm:$0xff]
    %v33 = vld [vmem:[%s2 + $0x30] sm:$0xff]
    %v34 = vld [vmem:[%s2 + $0x38] sm:$0xff]
    %v35 = vld [vmem:[%s2 + $0x40] sm:$0xff]
    %v36 = vld [vmem:[%s2 + $0x48] sm:$0xff]
    %v37 = vld [vmem:[%s2 + $0x50] sm:$0xff]
    %v38 = vld [vmem:[%s2 + $0x58] sm:$0xff]
    %v39 = vld [vmem:[%s2 + $0x60] sm:$0xff]
    %v40 = vld [vmem:[%s2 + $0x68] sm:$0xff]
    %v41 = vld [vmem:[%s2 + $0x70] sm:$0xff]
    %v42 = vld [vmem:[%s2 + $0x78] sm:$0xff]
    %v43 = vld [vmem:[%s2 + $0x80] sm:$0xff]
    %v44 = vld [vmem:[%s2 + $0x88] sm:$0xff]
    %v45 = vld [vmem:[%s2 + $0x90] sm:$0xff]
    %v46 = vld [vmem:[%s2 + $0x98] sm:$0xff]
    %v47 = vld [vmem:[%s2 + $0xa0] sm:$0xff]
    %v48 = vld [vmem:[%s2 + $0xa8] sm:$0xff]
    %v49 = vld [vmem:[%s2 + $0xb0] sm:$0xff]
    %v50 = vld [vmem:[%s2 + $0xb8] sm:$0xff]
    %v51 = vld [vmem:[%s2 + $0xc0] sm:$0xff]
    %v52 = vld [vmem:[%s2 + $0xc8] sm:$0xff]
    %v53 = vld [vmem:[%s2 + $0xd0] sm:$0xff]
    %v54 = vld [vmem:[%s2 + $0xd8] sm:$0xff]
    %v55 = vld [vmem:[%s2 + $0xe0] sm:$0xff]
    %v56 = vld [vmem:[%s2 + $0xe8] sm:$0xff]
    %v57 = vld [vmem:[%s2 + $0xf0] sm:$0xff]
    %v58 = vld [vmem:[%s2 + $0xf8] sm:$0xff]
    %v59 = vld [vmem:[%s2 + $0x100] sm:$0xff]
    %v60 = vld [vmem:[%s2 + $0x108] sm:$0xff]
    %v61 = vld [vmem:[%s2 + $0x110] sm:$0xff]
    %v62 = vld [vmem:[%s2 + $0x118] sm:$0xff]
    %v63 = vld [vmem:[%s2 + $0x120] sm:$0xff]
    %v64 = vld [vmem:[%s2 + $0x128] sm:$0xff]
    %v65 = vld [vmem:[%s2 + $0x130] sm:$0xff]
    %v66 = vld [vmem:[%s2 + $0x138] sm:$0xff]
    %v67 = vld [vmem:[%s2 + $0x140] sm:$0xff]
    %v68 = vld [vmem:[%s2 + $0x148] sm:$0xff]
    %v69 = vld [vmem:[%s2 + $0x150] sm:$0xff]
    %v70 = vld [vmem:[%s2 + $0x158] sm:$0xff]
    %v71 = vld [vmem:[%s2 + $0x160] sm:$0xff]
    %v72 = vld [vmem:[%s2 + $0x168] sm:$0xff]
    %v73 = vld [vmem:[%s2 + $0x170] sm:$0xff]
    %v74 = vld [vmem:[%s2 + $0x178] sm:$0xff]
    %v75 = vld [vmem:[%s2 + $0x180] sm:$0xff]
    %v76 = vld [vmem:[%s2 + $0x188] sm:$0xff]
    %v77 = vld [vmem:[%s2 + $0x190] sm:$0xff]
    %v78 = vld [vmem:[%s2 + $0x198] sm:$0xff]
    %v79 = vld [vmem:[%s2 + $0x1a0] sm:$0xff]
    %v80 = vld [vmem:[%s2 + $0x1a8] sm:$0xff]
    %v81 = vld [vmem:[%s2 + $0x1b0] sm:$0xff]
    %v82 = vld [vmem:[%s2 + $0x1b8] sm:$0xff]
    %v83 = vld [vmem:[%s2 + $0x1c0] sm:$0xff]
    %v84 = vld [vmem:[%s2 + $0x1c8] sm:$0xff]
    %v85 = vld [vmem:[%s2 + $0x1d0] sm:$0xff]
    %v86 = vld [vmem:[%s2 + $0x1d8] sm:$0xff]
    %v87 = vld [vmem:[%s2 + $0x1e0] sm:$0xff]
    %v88 = vld [vmem:[%s2 + $0x1e8] sm:$0xff]
    %v89 = vld [vmem:[%s2 + $0x1f0] sm:$0xff]
    %v90 = vld [vmem:[%s2 + $0x1f8] sm:$0xff]
    %v91 = vld [vmem:[%s2 + $0x200] sm:$0xff]
    %v92 = vld [vmem:[%s2 + $0x208] sm:$0xff]
    %v93 = vld [vmem:[%s2 + $0x210] sm:$0xff]
    %v94 = vld [vmem:[%s2 + $0x218] sm:$0xff]
    %v95 = vld [vmem:[%s2 + $0x220] sm:$0xff]
    %v96 = vld [vmem:[%s2 + $0x228] sm:$0xff]
    %v97 = vld [vmem:[%s2 + $0x230] sm:$0xff]
    %v98 = vld [vmem:[%s2 + $0x238] sm:$0xff]
    %v99 = vld [vmem:[%s2 + $0x240] sm:$0xff]
    %v100 = vld [vmem:[%s2 + $0x248] sm:$0xff]
    %v101 = vld [vmem:[%s2 + $0x250] sm:$0xff]
    %v102 = vld [vmem:[%s2 + $0x258] sm:$0xff]
    %v103 = vld [vmem:[%s2 + $0x260] sm:$0xff]
    %v104 = vld [vmem:[%s2 + $0x268] sm:$0xff]
    %v105 = vld [vmem:[%s2 + $0x270] sm:$0xff]
    %v106 = vld [vmem:[%s2 + $0x278] sm:$0xff]
    %v107 = vld [vmem:[%s2 + $0x280] sm:$0xff]
    %v108 = vld [vmem:[%s2 + $0x288] sm:$0xff]
    %v109 = vld [vmem:[%s2 + $0x290] sm:$0xff]
    %v110 = vld [vmem:[%s2 + $0x298] sm:$0xff]
    %v111 = vld [vmem:[%s2 + $0x2a0] sm:$0xff]
    %v112 = vld [vmem:[%s2 + $0x2a8] sm:$0xff]
    %v113 = vld [vmem:[%s2 + $0x2b0] sm:$0xff]
    %v114 = vld [vmem:[%s2 + $0x2b8] sm:$0xff]
    %v115 = vld [vmem:[%s2 + $0x2c0] sm:$0xff]
    %v116 = vld [vmem:[%s2 + $0x2c8] sm:$0xff]
    %v117 = vld [vmem:[%s2 + $0x2d0] sm:$0xff]
    %v118 = vld [vmem:[%s2 + $0x2d8] sm:$0xff]
    %v119 = vld [vmem:[%s2 + $0x2e0] sm:$0xff]
    %v120 = vld [vmem:[%s2 + $0x2e8] sm:$0xff]
    %v121 = vld [vmem:[%s2 + $0x2f0] sm:$0xff]
    %v122 = vld [vmem:[%s2 + $0x2f8] sm:$0xff]
    %vm123 = vcmask 261120
    %v125 = vsel %vm123, %v21, 0
    %127 = vmatprep.subr.mxu0 0.0
    %128 = vmatpush1.msra.mxu0 0.0
    %129 = vmatprep.subr.mxu0 0.0
    %130 = vmatpush1.msra.mxu0 0.0
    %131 = vmatprep.subr.mxu0 0.0
    %132 = vmatpush1.msra.mxu0 0.0
    %133 = vmatprep.subr.mxu0 0.0
    %134 = vmatpush1.msra.mxu0 0.0
    %135 = vmatprep.subr.mxu0 0.0
    %136 = vmatpush1.msra.mxu0 0.0
    %137 = vmatprep.subr.mxu0 0.0
    %138 = vmatpush1.msra.mxu0 0.0
    %139 = vmatprep.subr.mxu0 0.0
    %140 = vmatpush1.msra.mxu0 0.0
    %141 = vmatprep.subr.mxu0 0.0
    %142 = vmatpush1.msra.mxu0 0.0
    %143 = vmatprep.subr.mxu0 0.0
    %144 = vmatpush1.msra.mxu0 0.0
    %145 = vmatprep.subr.mxu0 0.0
    %146 = vmatpush1.msra.mxu0 0.0
    %147 = vmatprep.subr.mxu0 0.0
    %148 = vmatpush1.msra.mxu0 0.0
    %149 = vmatprep.subr.mxu0 0.0
    %150 = vmatpush1.msra.mxu0 0.0
    %151 = vmatprep.subr.mxu0 0.0
    %152 = vmatpush1.msra.mxu0 %v30
    %153 = vmatprep.subr.mxu0 0.0
    %154 = vmatpush1.msra.mxu0 %v29
    %155 = vmatprep.subr.mxu0 0.0
    %156 = vmatpush1.msra.mxu0 %v28
    %157 = vmatprep.subr.mxu0 0.0
    %158 = vmatpush1.msra.mxu0 %v27
    %159 = vmatprep.subr.mxu0 0.0
    %160 = vmatpush2.msra.mxu0 0.0
    %161 = vmatprep.subr.mxu0 0.0
    %162 = vmatpush2.msra.mxu0 0.0
    %163 = vmatprep.subr.mxu0 0.0
    %164 = vmatpush2.msra.mxu0 0.0
    %165 = vmatprep.subr.mxu0 0.0
    %166 = vmatpush2.msra.mxu0 0.0
    %167 = vmatprep.subr.mxu0 0.0
    %168 = vmatpush2.msra.mxu0 0.0
    %169 = vmatprep.subr.mxu0 0.0
    %170 = vmatpush2.msra.mxu0 0.0
    %171 = vmatprep.subr.mxu0 0.0
    %172 = vmatpush2.msra.mxu0 0.0
    %173 = vmatprep.subr.mxu0 0.0
    %174 = vmatpush2.msra.mxu0 0.0
    %175 = vmatprep.subr.mxu0 0.0
    %176 = vmatpush2.msra.mxu0 0.0
    %177 = vmatprep.subr.mxu0 0.0
    %178 = vmatpush2.msra.mxu0 0.0
    %179 = vmatprep.subr.mxu0 0.0
    %180 = vmatpush2.msra.mxu0 0.0
    %181 = vmatprep.subr.mxu0 0.0
    %182 = vmatpush2.msra.mxu0 0.0
    %183 = vmatprep.subr.mxu0 0.0
    %184 = vmatpush2.msra.mxu0 0.0
    %185 = vmatprep.subr.mxu0 0.0
    %186 = vmatpush2.msra.mxu0 0.0
    %187 = vmatprep.subr.mxu0 0.0
    %188 = vmatpush2.msra.mxu0 0.0
    %189 = vmatprep.subr.mxu0 0.0
    %190 = vmatpush2.msra.mxu0 0.0
    %191 = vmatprep.mubr.f32.mxu0 0.0
    %192 = vmatmul.mubr.f32.gmra.mxu0 %v125
    %v193 = vpop.f32.mrf.mxu0
    %v194 = vadd.f32 0.0, %v193
    %v195 = vpop.f32.mrf.mxu0
    %196 = vdwg.mxu0
    %197 = vmatprep.subr.mxu0 0.0
    %198 = vmatpush1.msra.mxu0 0.0
    %199 = vmatprep.subr.mxu0 0.0
    %200 = vmatpush1.msra.mxu0 0.0
    %201 = vmatprep.subr.mxu0 0.0
    %202 = vmatpush1.msra.mxu0 0.0
    %203 = vmatprep.subr.mxu0 0.0
    %204 = vmatpush1.msra.mxu0 0.0
    %205 = vmatprep.subr.mxu0 0.0
    %206 = vmatpush1.msra.mxu0 0.0
    %207 = vmatprep.subr.mxu0 0.0
    %208 = vmatpush1.msra.mxu0 0.0
    %209 = vmatprep.subr.mxu0 0.0
    %210 = vmatpush1.msra.mxu0 0.0
    %211 = vmatprep.subr.mxu0 0.0
    %212 = vmatpush1.msra.mxu0 0.0
    %213 = vmatprep.subr.mxu0 0.0
    %214 = vmatpush1.msra.mxu0 0.0
    %215 = vmatprep.subr.mxu0 0.0
    %216 = vmatpush1.msra.mxu0 0.0
    %217 = vmatprep.subr.mxu0 0.0
    %218 = vmatpush1.msra.mxu0 0.0
    %219 = vmatprep.subr.mxu0 0.0
    %220 = vmatpush1.msra.mxu0 0.0
    %221 = vmatprep.subr.mxu0 0.0
    %222 = vmatpush1.msra.mxu0 %v34
    %223 = vmatprep.subr.mxu0 0.0
    %224 = vmatpush1.msra.mxu0 %v33
    %225 = vmatprep.subr.mxu0 0.0
    %226 = vmatpush1.msra.mxu0 %v32
    %227 = vmatprep.subr.mxu0 0.0
    %228 = vmatpush1.msra.mxu0 %v31
    %229 = vmatprep.subr.mxu0 0.0
    %230 = vmatpush2.msra.mxu0 0.0
    %231 = vmatprep.subr.mxu0 0.0
    %232 = vmatpush2.msra.mxu0 0.0
    %233 = vmatprep.subr.mxu0 0.0
    %234 = vmatpush2.msra.mxu0 0.0
    %235 = vmatprep.subr.mxu0 0.0
    %236 = vmatpush2.msra.mxu0 0.0
    %237 = vmatprep.subr.mxu0 0.0
    %238 = vmatpush2.msra.mxu0 0.0
    %239 = vmatprep.subr.mxu0 0.0
    %240 = vmatpush2.msra.mxu0 0.0
    %241 = vmatprep.subr.mxu0 0.0
    %242 = vmatpush2.msra.mxu0 0.0
    %243 = vmatprep.subr.mxu0 0.0
    %244 = vmatpush2.msra.mxu0 0.0
    %245 = vmatprep.subr.mxu0 0.0
    %246 = vmatpush2.msra.mxu0 0.0
    %247 = vmatprep.subr.mxu0 0.0
    %248 = vmatpush2.msra.mxu0 0.0
    %249 = vmatprep.subr.mxu0 0.0
    %250 = vmatpush2.msra.mxu0 0.0
    %251 = vmatprep.subr.mxu0 0.0
    %252 = vmatpush2.msra.mxu0 0.0
    %253 = vmatprep.subr.mxu0 0.0
    %254 = vmatpush2.msra.mxu0 0.0
    %255 = vmatprep.subr.mxu0 0.0
    %256 = vmatpush2.msra.mxu0 0.0
    %257 = vmatprep.subr.mxu0 0.0
    %258 = vmatpush2.msra.mxu0 0.0
    %259 = vmatprep.subr.mxu0 0.0
    %260 = vmatpush2.msra.mxu0 0.0
    %261 = vmatprep.mubr.f32.mxu0 0.0
    %262 = vmatmul.mubr.f32.gmra.mxu0 %v125
    %v263 = vpop.f32.mrf.mxu0
    %v264 = vadd.f32 0.0, %v263
    %v265 = vpop.f32.mrf.mxu0
    %266 = vdwg.mxu0
    %267 = vmatprep.subr.mxu0 0.0
    %268 = vmatpush1.msra.mxu0 0.0
    %269 = vmatprep.subr.mxu0 0.0
    %270 = vmatpush1.msra.mxu0 0.0
    %271 = vmatprep.subr.mxu0 0.0
    %272 = vmatpush1.msra.mxu0 0.0
    %273 = vmatprep.subr.mxu0 0.0
    %274 = vmatpush1.msra.mxu0 0.0
    %275 = vmatprep.subr.mxu0 0.0
    %276 = vmatpush1.msra.mxu0 0.0
    %277 = vmatprep.subr.mxu0 0.0
    %278 = vmatpush1.msra.mxu0 0.0
    %279 = vmatprep.subr.mxu0 0.0
    %280 = vmatpush1.msra.mxu0 0.0
    %281 = vmatprep.subr.mxu0 0.0
    %282 = vmatpush1.msra.mxu0 0.0
    %283 = vmatprep.subr.mxu0 0.0
    %284 = vmatpush1.msra.mxu0 0.0
    %285 = vmatprep.subr.mxu0 0.0
    %286 = vmatpush1.msra.mxu0 0.0
    %287 = vmatprep.subr.mxu0 0.0
    %288 = vmatpush1.msra.mxu0 0.0
    %289 = vmatprep.subr.mxu0 0.0
    %290 = vmatpush1.msra.mxu0 0.0
    %291 = vmatprep.subr.mxu0 0.0
    %292 = vmatpush1.msra.mxu0 %v38
    %293 = vmatprep.subr.mxu0 0.0
    %294 = vmatpush1.msra.mxu0 %v37
    %295 = vmatprep.subr.mxu0 0.0
    %296 = vmatpush1.msra.mxu0 %v36
    %297 = vmatprep.subr.mxu0 0.0
    %298 = vmatpush1.msra.mxu0 %v35
    %299 = vmatprep.subr.mxu0 0.0
    %300 = vmatpush2.msra.mxu0 0.0
    %301 = vmatprep.subr.mxu0 0.0
    %302 = vmatpush2.msra.mxu0 0.0
    %303 = vmatprep.subr.mxu0 0.0
    %304 = vmatpush2.msra.mxu0 0.0
    %305 = vmatprep.subr.mxu0 0.0
    %306 = vmatpush2.msra.mxu0 0.0
    %307 = vmatprep.subr.mxu0 0.0
    %308 = vmatpush2.msra.mxu0 0.0
    %309 = vmatprep.subr.mxu0 0.0
    %310 = vmatpush2.msra.mxu0 0.0
    %311 = vmatprep.subr.mxu0 0.0
    %312 = vmatpush2.msra.mxu0 0.0
    %313 = vmatprep.subr.mxu0 0.0
    %314 = vmatpush2.msra.mxu0 0.0
    %315 = vmatprep.subr.mxu0 0.0
    %316 = vmatpush2.msra.mxu0 0.0
    %317 = vmatprep.subr.mxu0 0.0
    %318 = vmatpush2.msra.mxu0 0.0
    %319 = vmatprep.subr.mxu0 0.0
    %320 = vmatpush2.msra.mxu0 0.0
    %321 = vmatprep.subr.mxu0 0.0
    %322 = vmatpush2.msra.mxu0 0.0
    %323 = vmatprep.subr.mxu0 0.0
    %324 = vmatpush2.msra.mxu0 0.0
    %325 = vmatprep.subr.mxu0 0.0
    %326 = vmatpush2.msra.mxu0 0.0
    %327 = vmatprep.subr.mxu0 0.0
    %328 = vmatpush2.msra.mxu0 0.0
    %329 = vmatprep.subr.mxu0 0.0
    %330 = vmatpush2.msra.mxu0 0.0
    %331 = vmatprep.mubr.f32.mxu0 0.0
    %332 = vmatmul.mubr.f32.gmra.mxu0 %v125
    %v333 = vpop.f32.mrf.mxu0
    %v334 = vadd.f32 0.0, %v333
    %v335 = vpop.f32.mrf.mxu0
    %336 = vdwg.mxu0
    %337 = vmatprep.subr.mxu0 0.0
    %338 = vmatpush1.msra.mxu0 0.0
    %339 = vmatprep.subr.mxu0 0.0
    %340 = vmatpush1.msra.mxu0 0.0
    %341 = vmatprep.subr.mxu0 0.0
    %342 = vmatpush1.msra.mxu0 0.0
    %343 = vmatprep.subr.mxu0 0.0
    %344 = vmatpush1.msra.mxu0 0.0
    %345 = vmatprep.subr.mxu0 0.0
    %346 = vmatpush1.msra.mxu0 0.0
    %347 = vmatprep.subr.mxu0 0.0
    %348 = vmatpush1.msra.mxu0 0.0
    %349 = vmatprep.subr.mxu0 0.0
    %350 = vmatpush1.msra.mxu0 0.0
    %351 = vmatprep.subr.mxu0 0.0
    %352 = vmatpush1.msra.mxu0 0.0
    %353 = vmatprep.subr.mxu0 0.0
    %354 = vmatpush1.msra.mxu0 0.0
    %355 = vmatprep.subr.mxu0 0.0
    %356 = vmatpush1.msra.mxu0 0.0
    %357 = vmatprep.subr.mxu0 0.0
    %358 = vmatpush1.msra.mxu0 0.0
    %359 = vmatprep.subr.mxu0 0.0
    %360 = vmatpush1.msra.mxu0 0.0
    %361 = vmatprep.subr.mxu0 0.0
    %362 = vmatpush1.msra.mxu0 %v42
    %363 = vmatprep.subr.mxu0 0.0
    %364 = vmatpush1.msra.mxu0 %v41
    %365 = vmatprep.subr.mxu0 0.0
    %366 = vmatpush1.msra.mxu0 %v40
    %367 = vmatprep.subr.mxu0 0.0
    %368 = vmatpush1.msra.mxu0 %v39
    %369 = vmatprep.subr.mxu0 0.0
    %370 = vmatpush2.msra.mxu0 0.0
    %371 = vmatprep.subr.mxu0 0.0
    %372 = vmatpush2.msra.mxu0 0.0
    %373 = vmatprep.subr.mxu0 0.0
    %374 = vmatpush2.msra.mxu0 0.0
    %375 = vmatprep.subr.mxu0 0.0
    %376 = vmatpush2.msra.mxu0 0.0
    %377 = vmatprep.subr.mxu0 0.0
    %378 = vmatpush2.msra.mxu0 0.0
    %379 = vmatprep.subr.mxu0 0.0
    %380 = vmatpush2.msra.mxu0 0.0
    %381 = vmatprep.subr.mxu0 0.0
    %382 = vmatpush2.msra.mxu0 0.0
    %383 = vmatprep.subr.mxu0 0.0
    %384 = vmatpush2.msra.mxu0 0.0
    %385 = vmatprep.subr.mxu0 0.0
    %386 = vmatpush2.msra.mxu0 0.0
    %387 = vmatprep.subr.mxu0 0.0
    %388 = vmatpush2.msra.mxu0 0.0
    %389 = vmatprep.subr.mxu0 0.0
    %390 = vmatpush2.msra.mxu0 0.0
    %391 = vmatprep.subr.mxu0 0.0
    %392 = vmatpush2.msra.mxu0 0.0
    %393 = vmatprep.subr.mxu0 0.0
    %394 = vmatpush2.msra.mxu0 0.0
    %395 = vmatprep.subr.mxu0 0.0
    %396 = vmatpush2.msra.mxu0 0.0
    %397 = vmatprep.subr.mxu0 0.0
    %398 = vmatpush2.msra.mxu0 0.0
    %399 = vmatprep.subr.mxu0 0.0
    %400 = vmatpush2.msra.mxu0 0.0
    %401 = vmatprep.mubr.f32.mxu0 0.0
    %402 = vmatmul.mubr.f32.gmra.mxu0 %v125
    %v403 = vpop.f32.mrf.mxu0
    %v404 = vadd.f32 0.0, %v403
    %v405 = vpop.f32.mrf.mxu0
    %406 = vdwg.mxu0
    %v408 = vsel %vm123, %v22, 0
    %410 = vmatprep.subr.mxu0 0.0
    %411 = vmatpush1.msra.mxu0 0.0
    %412 = vmatprep.subr.mxu0 0.0
    %413 = vmatpush1.msra.mxu0 0.0
    %414 = vmatprep.subr.mxu0 0.0
    %415 = vmatpush1.msra.mxu0 0.0
    %416 = vmatprep.subr.mxu0 0.0
    %417 = vmatpush1.msra.mxu0 0.0
    %418 = vmatprep.subr.mxu0 0.0
    %419 = vmatpush1.msra.mxu0 0.0
    %420 = vmatprep.subr.mxu0 0.0
    %421 = vmatpush1.msra.mxu0 0.0
    %422 = vmatprep.subr.mxu0 0.0
    %423 = vmatpush1.msra.mxu0 0.0
    %424 = vmatprep.subr.mxu0 0.0
    %425 = vmatpush1.msra.mxu0 0.0
    %426 = vmatprep.subr.mxu0 0.0
    %427 = vmatpush1.msra.mxu0 0.0
    %428 = vmatprep.subr.mxu0 0.0
    %429 = vmatpush1.msra.mxu0 0.0
    %430 = vmatprep.subr.mxu0 0.0
    %431 = vmatpush1.msra.mxu0 0.0
    %432 = vmatprep.subr.mxu0 0.0
    %433 = vmatpush1.msra.mxu0 0.0
    %434 = vmatprep.subr.mxu0 0.0
    %435 = vmatpush1.msra.mxu0 %v46
    %436 = vmatprep.subr.mxu0 0.0
    %437 = vmatpush1.msra.mxu0 %v45
    %438 = vmatprep.subr.mxu0 0.0
    %439 = vmatpush1.msra.mxu0 %v44
    %440 = vmatprep.subr.mxu0 0.0
    %441 = vmatpush1.msra.mxu0 %v43
    %442 = vmatprep.subr.mxu0 0.0
    %443 = vmatpush2.msra.mxu0 0.0
    %444 = vmatprep.subr.mxu0 0.0
    %445 = vmatpush2.msra.mxu0 0.0
    %446 = vmatprep.subr.mxu0 0.0
    %447 = vmatpush2.msra.mxu0 0.0
    %448 = vmatprep.subr.mxu0 0.0
    %449 = vmatpush2.msra.mxu0 0.0
    %450 = vmatprep.subr.mxu0 0.0
    %451 = vmatpush2.msra.mxu0 0.0
    %452 = vmatprep.subr.mxu0 0.0
    %453 = vmatpush2.msra.mxu0 0.0
    %454 = vmatprep.subr.mxu0 0.0
    %455 = vmatpush2.msra.mxu0 0.0
    %456 = vmatprep.subr.mxu0 0.0
    %457 = vmatpush2.msra.mxu0 0.0
    %458 = vmatprep.subr.mxu0 0.0
    %459 = vmatpush2.msra.mxu0 0.0
    %460 = vmatprep.subr.mxu0 0.0
    %461 = vmatpush2.msra.mxu0 0.0
    %462 = vmatprep.subr.mxu0 0.0
    %463 = vmatpush2.msra.mxu0 0.0
    %464 = vmatprep.subr.mxu0 0.0
    %465 = vmatpush2.msra.mxu0 0.0
    %466 = vmatprep.subr.mxu0 0.0
    %467 = vmatpush2.msra.mxu0 0.0
    %468 = vmatprep.subr.mxu0 0.0
    %469 = vmatpush2.msra.mxu0 0.0
    %470 = vmatprep.subr.mxu0 0.0
    %471 = vmatpush2.msra.mxu0 0.0
    %472 = vmatprep.subr.mxu0 0.0
    %473 = vmatpush2.msra.mxu0 0.0
    %474 = vmatprep.mubr.f32.mxu0 0.0
    %475 = vmatmul.mubr.f32.gmra.mxu0 %v408
    %v476 = vpop.f32.mrf.mxu0
    %v477 = vadd.f32 0.0, %v476
    %v478 = vpop.f32.mrf.mxu0
    %479 = vdwg.mxu0
    %480 = vmatprep.subr.mxu0 0.0
    %481 = vmatpush1.msra.mxu0 0.0
    %482 = vmatprep.subr.mxu0 0.0
    %483 = vmatpush1.msra.mxu0 0.0
    %484 = vmatprep.subr.mxu0 0.0
    %485 = vmatpush1.msra.mxu0 0.0
    %486 = vmatprep.subr.mxu0 0.0
    %487 = vmatpush1.msra.mxu0 0.0
    %488 = vmatprep.subr.mxu0 0.0
    %489 = vmatpush1.msra.mxu0 0.0
    %490 = vmatprep.subr.mxu0 0.0
    %491 = vmatpush1.msra.mxu0 0.0
    %492 = vmatprep.subr.mxu0 0.0
    %493 = vmatpush1.msra.mxu0 0.0
    %494 = vmatprep.subr.mxu0 0.0
    %495 = vmatpush1.msra.mxu0 0.0
    %496 = vmatprep.subr.mxu0 0.0
    %497 = vmatpush1.msra.mxu0 0.0
    %498 = vmatprep.subr.mxu0 0.0
    %499 = vmatpush1.msra.mxu0 0.0
    %500 = vmatprep.subr.mxu0 0.0
    %501 = vmatpush1.msra.mxu0 0.0
    %502 = vmatprep.subr.mxu0 0.0
    %503 = vmatpush1.msra.mxu0 0.0
    %504 = vmatprep.subr.mxu0 0.0
    %505 = vmatpush1.msra.mxu0 %v50
    %506 = vmatprep.subr.mxu0 0.0
    %507 = vmatpush1.msra.mxu0 %v49
    %508 = vmatprep.subr.mxu0 0.0
    %509 = vmatpush1.msra.mxu0 %v48
    %510 = vmatprep.subr.mxu0 0.0
    %511 = vmatpush1.msra.mxu0 %v47
    %512 = vmatprep.subr.mxu0 0.0
    %513 = vmatpush2.msra.mxu0 0.0
    %514 = vmatprep.subr.mxu0 0.0
    %515 = vmatpush2.msra.mxu0 0.0
    %516 = vmatprep.subr.mxu0 0.0
    %517 = vmatpush2.msra.mxu0 0.0
    %518 = vmatprep.subr.mxu0 0.0
    %519 = vmatpush2.msra.mxu0 0.0
    %520 = vmatprep.subr.mxu0 0.0
    %521 = vmatpush2.msra.mxu0 0.0
    %522 = vmatprep.subr.mxu0 0.0
    %523 = vmatpush2.msra.mxu0 0.0
    %524 = vmatprep.subr.mxu0 0.0
    %525 = vmatpush2.msra.mxu0 0.0
    %526 = vmatprep.subr.mxu0 0.0
    %527 = vmatpush2.msra.mxu0 0.0
    %528 = vmatprep.subr.mxu0 0.0
    %529 = vmatpush2.msra.mxu0 0.0
    %530 = vmatprep.subr.mxu0 0.0
    %531 = vmatpush2.msra.mxu0 0.0
    %532 = vmatprep.subr.mxu0 0.0
    %533 = vmatpush2.msra.mxu0 0.0
    %534 = vmatprep.subr.mxu0 0.0
    %535 = vmatpush2.msra.mxu0 0.0
    %536 = vmatprep.subr.mxu0 0.0
    %537 = vmatpush2.msra.mxu0 0.0
    %538 = vmatprep.subr.mxu0 0.0
    %539 = vmatpush2.msra.mxu0 0.0
    %540 = vmatprep.subr.mxu0 0.0
    %541 = vmatpush2.msra.mxu0 0.0
    %542 = vmatprep.subr.mxu0 0.0
    %543 = vmatpush2.msra.mxu0 0.0
    %544 = vmatprep.mubr.f32.mxu0 0.0
    %545 = vmatmul.mubr.f32.gmra.mxu0 %v408
    %v546 = vpop.f32.mrf.mxu0
    %v547 = vadd.f32 0.0, %v546
    %v548 = vpop.f32.mrf.mxu0
    %549 = vdwg.mxu0
    %550 = vmatprep.subr.mxu0 0.0
    %551 = vmatpush1.msra.mxu0 0.0
    %552 = vmatprep.subr.mxu0 0.0
    %553 = vmatpush1.msra.mxu0 0.0
    %554 = vmatprep.subr.mxu0 0.0
    %555 = vmatpush1.msra.mxu0 0.0
    %556 = vmatprep.subr.mxu0 0.0
    %557 = vmatpush1.msra.mxu0 0.0
    %558 = vmatprep.subr.mxu0 0.0
    %559 = vmatpush1.msra.mxu0 0.0
    %560 = vmatprep.subr.mxu0 0.0
    %561 = vmatpush1.msra.mxu0 0.0
    %562 = vmatprep.subr.mxu0 0.0
    %563 = vmatpush1.msra.mxu0 0.0
    %564 = vmatprep.subr.mxu0 0.0
    %565 = vmatpush1.msra.mxu0 0.0
    %566 = vmatprep.subr.mxu0 0.0
    %567 = vmatpush1.msra.mxu0 0.0
    %568 = vmatprep.subr.mxu0 0.0
    %569 = vmatpush1.msra.mxu0 0.0
    %570 = vmatprep.subr.mxu0 0.0
    %571 = vmatpush1.msra.mxu0 0.0
    %572 = vmatprep.subr.mxu0 0.0
    %573 = vmatpush1.msra.mxu0 0.0
    %574 = vmatprep.subr.mxu0 0.0
    %575 = vmatpush1.msra.mxu0 %v54
    %576 = vmatprep.subr.mxu0 0.0
    %577 = vmatpush1.msra.mxu0 %v53
    %578 = vmatprep.subr.mxu0 0.0
    %579 = vmatpush1.msra.mxu0 %v52
    %580 = vmatprep.subr.mxu0 0.0
    %581 = vmatpush1.msra.mxu0 %v51
    %582 = vmatprep.subr.mxu0 0.0
    %583 = vmatpush2.msra.mxu0 0.0
    %584 = vmatprep.subr.mxu0 0.0
    %585 = vmatpush2.msra.mxu0 0.0
    %586 = vmatprep.subr.mxu0 0.0
    %587 = vmatpush2.msra.mxu0 0.0
    %588 = vmatprep.subr.mxu0 0.0
    %589 = vmatpush2.msra.mxu0 0.0
    %590 = vmatprep.subr.mxu0 0.0
    %591 = vmatpush2.msra.mxu0 0.0
    %592 = vmatprep.subr.mxu0 0.0
    %593 = vmatpush2.msra.mxu0 0.0
    %594 = vmatprep.subr.mxu0 0.0
    %595 = vmatpush2.msra.mxu0 0.0
    %596 = vmatprep.subr.mxu0 0.0
    %597 = vmatpush2.msra.mxu0 0.0
    %598 = vmatprep.subr.mxu0 0.0
    %599 = vmatpush2.msra.mxu0 0.0
    %600 = vmatprep.subr.mxu0 0.0
    %601 = vmatpush2.msra.mxu0 0.0
    %602 = vmatprep.subr.mxu0 0.0
    %603 = vmatpush2.msra.mxu0 0.0
    %604 = vmatprep.subr.mxu0 0.0
    %605 = vmatpush2.msra.mxu0 0.0
    %606 = vmatprep.subr.mxu0 0.0
    %607 = vmatpush2.msra.mxu0 0.0
    %608 = vmatprep.subr.mxu0 0.0
    %609 = vmatpush2.msra.mxu0 0.0
    %610 = vmatprep.subr.mxu0 0.0
    %611 = vmatpush2.msra.mxu0 0.0
    %612 = vmatprep.subr.mxu0 0.0
    %613 = vmatpush2.msra.mxu0 0.0
    %614 = vmatprep.mubr.f32.mxu0 0.0
    %615 = vmatmul.mubr.f32.gmra.mxu0 %v408
    %v616 = vpop.f32.mrf.mxu0
    %v617 = vadd.f32 0.0, %v616
    %v618 = vpop.f32.mrf.mxu0
    %619 = vdwg.mxu0
    %620 = vmatprep.subr.mxu0 0.0
    %621 = vmatpush1.msra.mxu0 0.0
    %622 = vmatprep.subr.mxu0 0.0
    %623 = vmatpush1.msra.mxu0 0.0
    %624 = vmatprep.subr.mxu0 0.0
    %625 = vmatpush1.msra.mxu0 0.0
    %626 = vmatprep.subr.mxu0 0.0
    %627 = vmatpush1.msra.mxu0 0.0
    %628 = vmatprep.subr.mxu0 0.0
    %629 = vmatpush1.msra.mxu0 0.0
    %630 = vmatprep.subr.mxu0 0.0
    %631 = vmatpush1.msra.mxu0 0.0
    %632 = vmatprep.subr.mxu0 0.0
    %633 = vmatpush1.msra.mxu0 0.0
    %634 = vmatprep.subr.mxu0 0.0
    %635 = vmatpush1.msra.mxu0 0.0
    %636 = vmatprep.subr.mxu0 0.0
    %637 = vmatpush1.msra.mxu0 0.0
    %638 = vmatprep.subr.mxu0 0.0
    %639 = vmatpush1.msra.mxu0 0.0
    %640 = vmatprep.subr.mxu0 0.0
    %641 = vmatpush1.msra.mxu0 0.0
    %642 = vmatprep.subr.mxu0 0.0
    %643 = vmatpush1.msra.mxu0 0.0
    %644 = vmatprep.subr.mxu0 0.0
    %645 = vmatpush1.msra.mxu0 %v58
    %646 = vmatprep.subr.mxu0 0.0
    %647 = vmatpush1.msra.mxu0 %v57
    %648 = vmatprep.subr.mxu0 0.0
    %649 = vmatpush1.msra.mxu0 %v56
    %650 = vmatprep.subr.mxu0 0.0
    %651 = vmatpush1.msra.mxu0 %v55
    %652 = vmatprep.subr.mxu0 0.0
    %653 = vmatpush2.msra.mxu0 0.0
    %654 = vmatprep.subr.mxu0 0.0
    %655 = vmatpush2.msra.mxu0 0.0
    %656 = vmatprep.subr.mxu0 0.0
    %657 = vmatpush2.msra.mxu0 0.0
    %658 = vmatprep.subr.mxu0 0.0
    %659 = vmatpush2.msra.mxu0 0.0
    %660 = vmatprep.subr.mxu0 0.0
    %661 = vmatpush2.msra.mxu0 0.0
    %662 = vmatprep.subr.mxu0 0.0
    %663 = vmatpush2.msra.mxu0 0.0
    %664 = vmatprep.subr.mxu0 0.0
    %665 = vmatpush2.msra.mxu0 0.0
    %666 = vmatprep.subr.mxu0 0.0
    %667 = vmatpush2.msra.mxu0 0.0
    %668 = vmatprep.subr.mxu0 0.0
    %669 = vmatpush2.msra.mxu0 0.0
    %670 = vmatprep.subr.mxu0 0.0
    %671 = vmatpush2.msra.mxu0 0.0
    %672 = vmatprep.subr.mxu0 0.0
    %673 = vmatpush2.msra.mxu0 0.0
    %674 = vmatprep.subr.mxu0 0.0
    %675 = vmatpush2.msra.mxu0 0.0
    %676 = vmatprep.subr.mxu0 0.0
    %677 = vmatpush2.msra.mxu0 0.0
    %678 = vmatprep.subr.mxu0 0.0
    %679 = vmatpush2.msra.mxu0 0.0
    %680 = vmatprep.subr.mxu0 0.0
    %681 = vmatpush2.msra.mxu0 0.0
    %682 = vmatprep.subr.mxu0 0.0
    %683 = vmatpush2.msra.mxu0 0.0
    %684 = vmatprep.mubr.f32.mxu0 0.0
    %685 = vmatmul.mubr.f32.gmra.mxu0 %v408
    %v686 = vpop.f32.mrf.mxu0
    %v687 = vadd.f32 0.0, %v686
    %v688 = vpop.f32.mrf.mxu0
    %689 = vdwg.mxu0
    %v691 = vsel %vm123, %v23, 0
    %693 = vmatprep.subr.mxu0 0.0
    %694 = vmatpush1.msra.mxu0 0.0
    %695 = vmatprep.subr.mxu0 0.0
    %696 = vmatpush1.msra.mxu0 0.0
    %697 = vmatprep.subr.mxu0 0.0
    %698 = vmatpush1.msra.mxu0 0.0
    %699 = vmatprep.subr.mxu0 0.0
    %700 = vmatpush1.msra.mxu0 0.0
    %701 = vmatprep.subr.mxu0 0.0
    %702 = vmatpush1.msra.mxu0 0.0
    %703 = vmatprep.subr.mxu0 0.0
    %704 = vmatpush1.msra.mxu0 0.0
    %705 = vmatprep.subr.mxu0 0.0
    %706 = vmatpush1.msra.mxu0 0.0
    %707 = vmatprep.subr.mxu0 0.0
    %708 = vmatpush1.msra.mxu0 0.0
    %709 = vmatprep.subr.mxu0 0.0
    %710 = vmatpush1.msra.mxu0 0.0
    %711 = vmatprep.subr.mxu0 0.0
    %712 = vmatpush1.msra.mxu0 0.0
    %713 = vmatprep.subr.mxu0 0.0
    %714 = vmatpush1.msra.mxu0 0.0
    %715 = vmatprep.subr.mxu0 0.0
    %716 = vmatpush1.msra.mxu0 0.0
    %717 = vmatprep.subr.mxu0 0.0
    %718 = vmatpush1.msra.mxu0 %v62
    %719 = vmatprep.subr.mxu0 0.0
    %720 = vmatpush1.msra.mxu0 %v61
    %721 = vmatprep.subr.mxu0 0.0
    %722 = vmatpush1.msra.mxu0 %v60
    %723 = vmatprep.subr.mxu0 0.0
    %724 = vmatpush1.msra.mxu0 %v59
    %725 = vmatprep.subr.mxu0 0.0
    %726 = vmatpush2.msra.mxu0 0.0
    %727 = vmatprep.subr.mxu0 0.0
    %728 = vmatpush2.msra.mxu0 0.0
    %729 = vmatprep.subr.mxu0 0.0
    %730 = vmatpush2.msra.mxu0 0.0
    %731 = vmatprep.subr.mxu0 0.0
    %732 = vmatpush2.msra.mxu0 0.0
    %733 = vmatprep.subr.mxu0 0.0
    %734 = vmatpush2.msra.mxu0 0.0
    %735 = vmatprep.subr.mxu0 0.0
    %736 = vmatpush2.msra.mxu0 0.0
    %737 = vmatprep.subr.mxu0 0.0
    %738 = vmatpush2.msra.mxu0 0.0
    %739 = vmatprep.subr.mxu0 0.0
    %740 = vmatpush2.msra.mxu0 0.0
    %741 = vmatprep.subr.mxu0 0.0
    %742 = vmatpush2.msra.mxu0 0.0
    %743 = vmatprep.subr.mxu0 0.0
    %744 = vmatpush2.msra.mxu0 0.0
    %745 = vmatprep.subr.mxu0 0.0
    %746 = vmatpush2.msra.mxu0 0.0
    %747 = vmatprep.subr.mxu0 0.0
    %748 = vmatpush2.msra.mxu0 0.0
    %749 = vmatprep.subr.mxu0 0.0
    %750 = vmatpush2.msra.mxu0 0.0
    %751 = vmatprep.subr.mxu0 0.0
    %752 = vmatpush2.msra.mxu0 0.0
    %753 = vmatprep.subr.mxu0 0.0
    %754 = vmatpush2.msra.mxu0 0.0
    %755 = vmatprep.subr.mxu0 0.0
    %756 = vmatpush2.msra.mxu0 0.0
    %757 = vmatprep.mubr.f32.mxu0 0.0
    %758 = vmatmul.mubr.f32.gmra.mxu0 %v691
    %v759 = vpop.f32.mrf.mxu0
    %v760 = vadd.f32 0.0, %v759
    %v761 = vpop.f32.mrf.mxu0
    %762 = vdwg.mxu0
    %763 = vmatprep.subr.mxu0 0.0
    %764 = vmatpush1.msra.mxu0 0.0
    %765 = vmatprep.subr.mxu0 0.0
    %766 = vmatpush1.msra.mxu0 0.0
    %767 = vmatprep.subr.mxu0 0.0
    %768 = vmatpush1.msra.mxu0 0.0
    %769 = vmatprep.subr.mxu0 0.0
    %770 = vmatpush1.msra.mxu0 0.0
    %771 = vmatprep.subr.mxu0 0.0
    %772 = vmatpush1.msra.mxu0 0.0
    %773 = vmatprep.subr.mxu0 0.0
    %774 = vmatpush1.msra.mxu0 0.0
    %775 = vmatprep.subr.mxu0 0.0
    %776 = vmatpush1.msra.mxu0 0.0
    %777 = vmatprep.subr.mxu0 0.0
    %778 = vmatpush1.msra.mxu0 0.0
    %779 = vmatprep.subr.mxu0 0.0
    %780 = vmatpush1.msra.mxu0 0.0
    %781 = vmatprep.subr.mxu0 0.0
    %782 = vmatpush1.msra.mxu0 0.0
    %783 = vmatprep.subr.mxu0 0.0
    %784 = vmatpush1.msra.mxu0 0.0
    %785 = vmatprep.subr.mxu0 0.0
    %786 = vmatpush1.msra.mxu0 0.0
    %787 = vmatprep.subr.mxu0 0.0
    %788 = vmatpush1.msra.mxu0 %v66
    %789 = vmatprep.subr.mxu0 0.0
    %790 = vmatpush1.msra.mxu0 %v65
    %791 = vmatprep.subr.mxu0 0.0
    %792 = vmatpush1.msra.mxu0 %v64
    %793 = vmatprep.subr.mxu0 0.0
    %794 = vmatpush1.msra.mxu0 %v63
    %795 = vmatprep.subr.mxu0 0.0
    %796 = vmatpush2.msra.mxu0 0.0
    %797 = vmatprep.subr.mxu0 0.0
    %798 = vmatpush2.msra.mxu0 0.0
    %799 = vmatprep.subr.mxu0 0.0
    %800 = vmatpush2.msra.mxu0 0.0
    %801 = vmatprep.subr.mxu0 0.0
    %802 = vmatpush2.msra.mxu0 0.0
    %803 = vmatprep.subr.mxu0 0.0
    %804 = vmatpush2.msra.mxu0 0.0
    %805 = vmatprep.subr.mxu0 0.0
    %806 = vmatpush2.msra.mxu0 0.0
    %807 = vmatprep.subr.mxu0 0.0
    %808 = vmatpush2.msra.mxu0 0.0
    %809 = vmatprep.subr.mxu0 0.0
    %810 = vmatpush2.msra.mxu0 0.0
    %811 = vmatprep.subr.mxu0 0.0
    %812 = vmatpush2.msra.mxu0 0.0
    %813 = vmatprep.subr.mxu0 0.0
    %814 = vmatpush2.msra.mxu0 0.0
    %815 = vmatprep.subr.mxu0 0.0
    %816 = vmatpush2.msra.mxu0 0.0
    %817 = vmatprep.subr.mxu0 0.0
    %818 = vmatpush2.msra.mxu0 0.0
    %819 = vmatprep.subr.mxu0 0.0
    %820 = vmatpush2.msra.mxu0 0.0
    %821 = vmatprep.subr.mxu0 0.0
    %822 = vmatpush2.msra.mxu0 0.0
    %823 = vmatprep.subr.mxu0 0.0
    %824 = vmatpush2.msra.mxu0 0.0
    %825 = vmatprep.subr.mxu0 0.0
    %826 = vmatpush2.msra.mxu0 0.0
    %827 = vmatprep.mubr.f32.mxu0 0.0
    %828 = vmatmul.mubr.f32.gmra.mxu0 %v691
    %v829 = vpop.f32.mrf.mxu0
    %v830 = vadd.f32 0.0, %v829
    %v831 = vpop.f32.mrf.mxu0
    %832 = vdwg.mxu0
    %833 = vmatprep.subr.mxu0 0.0
    %834 = vmatpush1.msra.mxu0 0.0
    %835 = vmatprep.subr.mxu0 0.0
    %836 = vmatpush1.msra.mxu0 0.0
    %837 = vmatprep.subr.mxu0 0.0
    %838 = vmatpush1.msra.mxu0 0.0
    %839 = vmatprep.subr.mxu0 0.0
    %840 = vmatpush1.msra.mxu0 0.0
    %841 = vmatprep.subr.mxu0 0.0
    %842 = vmatpush1.msra.mxu0 0.0
    %843 = vmatprep.subr.mxu0 0.0
    %844 = vmatpush1.msra.mxu0 0.0
    %845 = vmatprep.subr.mxu0 0.0
    %846 = vmatpush1.msra.mxu0 0.0
    %847 = vmatprep.subr.mxu0 0.0
    %848 = vmatpush1.msra.mxu0 0.0
    %849 = vmatprep.subr.mxu0 0.0
    %850 = vmatpush1.msra.mxu0 0.0
    %851 = vmatprep.subr.mxu0 0.0
    %852 = vmatpush1.msra.mxu0 0.0
    %853 = vmatprep.subr.mxu0 0.0
    %854 = vmatpush1.msra.mxu0 0.0
    %855 = vmatprep.subr.mxu0 0.0
    %856 = vmatpush1.msra.mxu0 0.0
    %857 = vmatprep.subr.mxu0 0.0
    %858 = vmatpush1.msra.mxu0 %v70
    %859 = vmatprep.subr.mxu0 0.0
    %860 = vmatpush1.msra.mxu0 %v69
    %861 = vmatprep.subr.mxu0 0.0
    %862 = vmatpush1.msra.mxu0 %v68
    %863 = vmatprep.subr.mxu0 0.0
    %864 = vmatpush1.msra.mxu0 %v67
    %865 = vmatprep.subr.mxu0 0.0
    %866 = vmatpush2.msra.mxu0 0.0
    %867 = vmatprep.subr.mxu0 0.0
    %868 = vmatpush2.msra.mxu0 0.0
    %869 = vmatprep.subr.mxu0 0.0
    %870 = vmatpush2.msra.mxu0 0.0
    %871 = vmatprep.subr.mxu0 0.0
    %872 = vmatpush2.msra.mxu0 0.0
    %873 = vmatprep.subr.mxu0 0.0
    %874 = vmatpush2.msra.mxu0 0.0
    %875 = vmatprep.subr.mxu0 0.0
    %876 = vmatpush2.msra.mxu0 0.0
    %877 = vmatprep.subr.mxu0 0.0
    %878 = vmatpush2.msra.mxu0 0.0
    %879 = vmatprep.subr.mxu0 0.0
    %880 = vmatpush2.msra.mxu0 0.0
    %881 = vmatprep.subr.mxu0 0.0
    %882 = vmatpush2.msra.mxu0 0.0
    %883 = vmatprep.subr.mxu0 0.0
    %884 = vmatpush2.msra.mxu0 0.0
    %885 = vmatprep.subr.mxu0 0.0
    %886 = vmatpush2.msra.mxu0 0.0
    %887 = vmatprep.subr.mxu0 0.0
    %888 = vmatpush2.msra.mxu0 0.0
    %889 = vmatprep.subr.mxu0 0.0
    %890 = vmatpush2.msra.mxu0 0.0
    %891 = vmatprep.subr.mxu0 0.0
    %892 = vmatpush2.msra.mxu0 0.0
    %893 = vmatprep.subr.mxu0 0.0
    %894 = vmatpush2.msra.mxu0 0.0
    %895 = vmatprep.subr.mxu0 0.0
    %896 = vmatpush2.msra.mxu0 0.0
    %897 = vmatprep.mubr.f32.mxu0 0.0
    %898 = vmatmul.mubr.f32.gmra.mxu0 %v691
    %v899 = vpop.f32.mrf.mxu0
    %v900 = vadd.f32 0.0, %v899
    %v901 = vpop.f32.mrf.mxu0
    %902 = vdwg.mxu0
    %903 = vmatprep.subr.mxu0 0.0
    %904 = vmatpush1.msra.mxu0 0.0
    %905 = vmatprep.subr.mxu0 0.0
    %906 = vmatpush1.msra.mxu0 0.0
    %907 = vmatprep.subr.mxu0 0.0
    %908 = vmatpush1.msra.mxu0 0.0
    %909 = vmatprep.subr.mxu0 0.0
    %910 = vmatpush1.msra.mxu0 0.0
    %911 = vmatprep.subr.mxu0 0.0
    %912 = vmatpush1.msra.mxu0 0.0
    %913 = vmatprep.subr.mxu0 0.0
    %914 = vmatpush1.msra.mxu0 0.0
    %915 = vmatprep.subr.mxu0 0.0
    %916 = vmatpush1.msra.mxu0 0.0
    %917 = vmatprep.subr.mxu0 0.0
    %918 = vmatpush1.msra.mxu0 0.0
    %919 = vmatprep.subr.mxu0 0.0
    %920 = vmatpush1.msra.mxu0 0.0
    %921 = vmatprep.subr.mxu0 0.0
    %922 = vmatpush1.msra.mxu0 0.0
    %923 = vmatprep.subr.mxu0 0.0
    %924 = vmatpush1.msra.mxu0 0.0
    %925 = vmatprep.subr.mxu0 0.0
    %926 = vmatpush1.msra.mxu0 0.0
    %927 = vmatprep.subr.mxu0 0.0
    %928 = vmatpush1.msra.mxu0 %v74
    %929 = vmatprep.subr.mxu0 0.0
    %930 = vmatpush1.msra.mxu0 %v73
    %931 = vmatprep.subr.mxu0 0.0
    %932 = vmatpush1.msra.mxu0 %v72
    %933 = vmatprep.subr.mxu0 0.0
    %934 = vmatpush1.msra.mxu0 %v71
    %935 = vmatprep.subr.mxu0 0.0
    %936 = vmatpush2.msra.mxu0 0.0
    %937 = vmatprep.subr.mxu0 0.0
    %938 = vmatpush2.msra.mxu0 0.0
    %939 = vmatprep.subr.mxu0 0.0
    %940 = vmatpush2.msra.mxu0 0.0
    %941 = vmatprep.subr.mxu0 0.0
    %942 = vmatpush2.msra.mxu0 0.0
    %943 = vmatprep.subr.mxu0 0.0
    %944 = vmatpush2.msra.mxu0 0.0
    %945 = vmatprep.subr.mxu0 0.0
    %946 = vmatpush2.msra.mxu0 0.0
    %947 = vmatprep.subr.mxu0 0.0
    %948 = vmatpush2.msra.mxu0 0.0
    %949 = vmatprep.subr.mxu0 0.0
    %950 = vmatpush2.msra.mxu0 0.0
    %951 = vmatprep.subr.mxu0 0.0
    %952 = vmatpush2.msra.mxu0 0.0
    %953 = vmatprep.subr.mxu0 0.0
    %954 = vmatpush2.msra.mxu0 0.0
    %955 = vmatprep.subr.mxu0 0.0
    %956 = vmatpush2.msra.mxu0 0.0
    %957 = vmatprep.subr.mxu0 0.0
    %958 = vmatpush2.msra.mxu0 0.0
    %959 = vmatprep.subr.mxu0 0.0
    %960 = vmatpush2.msra.mxu0 0.0
    %961 = vmatprep.subr.mxu0 0.0
    %962 = vmatpush2.msra.mxu0 0.0
    %963 = vmatprep.subr.mxu0 0.0
    %964 = vmatpush2.msra.mxu0 0.0
    %965 = vmatprep.subr.mxu0 0.0
    %966 = vmatpush2.msra.mxu0 0.0
    %967 = vmatprep.mubr.f32.mxu0 0.0
    %968 = vmatmul.mubr.f32.gmra.mxu0 %v691
    %v969 = vpop.f32.mrf.mxu0
    %v970 = vadd.f32 0.0, %v969
    %v971 = vpop.f32.mrf.mxu0
    %972 = vdwg.mxu0
    %v974 = vsel %vm123, %v24, 0
    %976 = vmatprep.subr.mxu0 0.0
    %977 = vmatpush1.msra.mxu0 0.0
    %978 = vmatprep.subr.mxu0 0.0
    %979 = vmatpush1.msra.mxu0 0.0
    %980 = vmatprep.subr.mxu0 0.0
    %981 = vmatpush1.msra.mxu0 0.0
    %982 = vmatprep.subr.mxu0 0.0
    %983 = vmatpush1.msra.mxu0 0.0
    %984 = vmatprep.subr.mxu0 0.0
    %985 = vmatpush1.msra.mxu0 0.0
    %986 = vmatprep.subr.mxu0 0.0
    %987 = vmatpush1.msra.mxu0 0.0
    %988 = vmatprep.subr.mxu0 0.0
    %989 = vmatpush1.msra.mxu0 0.0
    %990 = vmatprep.subr.mxu0 0.0
    %991 = vmatpush1.msra.mxu0 0.0
    %992 = vmatprep.subr.mxu0 0.0
    %993 = vmatpush1.msra.mxu0 0.0
    %994 = vmatprep.subr.mxu0 0.0
    %995 = vmatpush1.msra.mxu0 0.0
    %996 = vmatprep.subr.mxu0 0.0
    %997 = vmatpush1.msra.mxu0 0.0
    %998 = vmatprep.subr.mxu0 0.0
    %999 = vmatpush1.msra.mxu0 0.0
    %1000 = vmatprep.subr.mxu0 0.0
    %1001 = vmatpush1.msra.mxu0 %v78
    %1002 = vmatprep.subr.mxu0 0.0
    %1003 = vmatpush1.msra.mxu0 %v77
    %1004 = vmatprep.subr.mxu0 0.0
    %1005 = vmatpush1.msra.mxu0 %v76
    %1006 = vmatprep.subr.mxu0 0.0
    %1007 = vmatpush1.msra.mxu0 %v75
    %1008 = vmatprep.subr.mxu0 0.0
    %1009 = vmatpush2.msra.mxu0 0.0
    %1010 = vmatprep.subr.mxu0 0.0
    %1011 = vmatpush2.msra.mxu0 0.0
    %1012 = vmatprep.subr.mxu0 0.0
    %1013 = vmatpush2.msra.mxu0 0.0
    %1014 = vmatprep.subr.mxu0 0.0
    %1015 = vmatpush2.msra.mxu0 0.0
    %1016 = vmatprep.subr.mxu0 0.0
    %1017 = vmatpush2.msra.mxu0 0.0
    %1018 = vmatprep.subr.mxu0 0.0
    %1019 = vmatpush2.msra.mxu0 0.0
    %1020 = vmatprep.subr.mxu0 0.0
    %1021 = vmatpush2.msra.mxu0 0.0
    %1022 = vmatprep.subr.mxu0 0.0
    %1023 = vmatpush2.msra.mxu0 0.0
    %1024 = vmatprep.subr.mxu0 0.0
    %1025 = vmatpush2.msra.mxu0 0.0
    %1026 = vmatprep.subr.mxu0 0.0
    %1027 = vmatpush2.msra.mxu0 0.0
    %1028 = vmatprep.subr.mxu0 0.0
    %1029 = vmatpush2.msra.mxu0 0.0
    %1030 = vmatprep.subr.mxu0 0.0
    %1031 = vmatpush2.msra.mxu0 0.0
    %1032 = vmatprep.subr.mxu0 0.0
    %1033 = vmatpush2.msra.mxu0 0.0
    %1034 = vmatprep.subr.mxu0 0.0
    %1035 = vmatpush2.msra.mxu0 0.0
    %1036 = vmatprep.subr.mxu0 0.0
    %1037 = vmatpush2.msra.mxu0 0.0
    %1038 = vmatprep.subr.mxu0 0.0
    %1039 = vmatpush2.msra.mxu0 0.0
    %1040 = vmatprep.mubr.f32.mxu0 0.0
    %1041 = vmatmul.mubr.f32.gmra.mxu0 %v974
    %v1042 = vpop.f32.mrf.mxu0
    %v1043 = vadd.f32 0.0, %v1042
    %v1044 = vpop.f32.mrf.mxu0
    %1045 = vdwg.mxu0
    %1046 = vmatprep.subr.mxu0 0.0
    %1047 = vmatpush1.msra.mxu0 0.0
    %1048 = vmatprep.subr.mxu0 0.0
    %1049 = vmatpush1.msra.mxu0 0.0
    %1050 = vmatprep.subr.mxu0 0.0
    %1051 = vmatpush1.msra.mxu0 0.0
    %1052 = vmatprep.subr.mxu0 0.0
    %1053 = vmatpush1.msra.mxu0 0.0
    %1054 = vmatprep.subr.mxu0 0.0
    %1055 = vmatpush1.msra.mxu0 0.0
    %1056 = vmatprep.subr.mxu0 0.0
    %1057 = vmatpush1.msra.mxu0 0.0
    %1058 = vmatprep.subr.mxu0 0.0
    %1059 = vmatpush1.msra.mxu0 0.0
    %1060 = vmatprep.subr.mxu0 0.0
    %1061 = vmatpush1.msra.mxu0 0.0
    %1062 = vmatprep.subr.mxu0 0.0
    %1063 = vmatpush1.msra.mxu0 0.0
    %1064 = vmatprep.subr.mxu0 0.0
    %1065 = vmatpush1.msra.mxu0 0.0
    %1066 = vmatprep.subr.mxu0 0.0
    %1067 = vmatpush1.msra.mxu0 0.0
    %1068 = vmatprep.subr.mxu0 0.0
    %1069 = vmatpush1.msra.mxu0 0.0
    %1070 = vmatprep.subr.mxu0 0.0
    %1071 = vmatpush1.msra.mxu0 %v82
    %1072 = vmatprep.subr.mxu0 0.0
    %1073 = vmatpush1.msra.mxu0 %v81
    %1074 = vmatprep.subr.mxu0 0.0
    %1075 = vmatpush1.msra.mxu0 %v80
    %1076 = vmatprep.subr.mxu0 0.0
    %1077 = vmatpush1.msra.mxu0 %v79
    %1078 = vmatprep.subr.mxu0 0.0
    %1079 = vmatpush2.msra.mxu0 0.0
    %1080 = vmatprep.subr.mxu0 0.0
    %1081 = vmatpush2.msra.mxu0 0.0
    %1082 = vmatprep.subr.mxu0 0.0
    %1083 = vmatpush2.msra.mxu0 0.0
    %1084 = vmatprep.subr.mxu0 0.0
    %1085 = vmatpush2.msra.mxu0 0.0
    %1086 = vmatprep.subr.mxu0 0.0
    %1087 = vmatpush2.msra.mxu0 0.0
    %1088 = vmatprep.subr.mxu0 0.0
    %1089 = vmatpush2.msra.mxu0 0.0
    %1090 = vmatprep.subr.mxu0 0.0
    %1091 = vmatpush2.msra.mxu0 0.0
    %1092 = vmatprep.subr.mxu0 0.0
    %1093 = vmatpush2.msra.mxu0 0.0
    %1094 = vmatprep.subr.mxu0 0.0
    %1095 = vmatpush2.msra.mxu0 0.0
    %1096 = vmatprep.subr.mxu0 0.0
    %1097 = vmatpush2.msra.mxu0 0.0
    %1098 = vmatprep.subr.mxu0 0.0
    %1099 = vmatpush2.msra.mxu0 0.0
    %1100 = vmatprep.subr.mxu0 0.0
    %1101 = vmatpush2.msra.mxu0 0.0
    %1102 = vmatprep.subr.mxu0 0.0
    %1103 = vmatpush2.msra.mxu0 0.0
    %1104 = vmatprep.subr.mxu0 0.0
    %1105 = vmatpush2.msra.mxu0 0.0
    %1106 = vmatprep.subr.mxu0 0.0
    %1107 = vmatpush2.msra.mxu0 0.0
    %1108 = vmatprep.subr.mxu0 0.0
    %1109 = vmatpush2.msra.mxu0 0.0
    %1110 = vmatprep.mubr.f32.mxu0 0.0
    %1111 = vmatmul.mubr.f32.gmra.mxu0 %v974
    %v1112 = vpop.f32.mrf.mxu0
    %v1113 = vadd.f32 0.0, %v1112
    %v1114 = vpop.f32.mrf.mxu0
    %1115 = vdwg.mxu0
    %1116 = vmatprep.subr.mxu0 0.0
    %1117 = vmatpush1.msra.mxu0 0.0
    %1118 = vmatprep.subr.mxu0 0.0
    %1119 = vmatpush1.msra.mxu0 0.0
    %1120 = vmatprep.subr.mxu0 0.0
    %1121 = vmatpush1.msra.mxu0 0.0
    %1122 = vmatprep.subr.mxu0 0.0
    %1123 = vmatpush1.msra.mxu0 0.0
    %1124 = vmatprep.subr.mxu0 0.0
    %1125 = vmatpush1.msra.mxu0 0.0
    %1126 = vmatprep.subr.mxu0 0.0
    %1127 = vmatpush1.msra.mxu0 0.0
    %1128 = vmatprep.subr.mxu0 0.0
    %1129 = vmatpush1.msra.mxu0 0.0
    %1130 = vmatprep.subr.mxu0 0.0
    %1131 = vmatpush1.msra.mxu0 0.0
    %1132 = vmatprep.subr.mxu0 0.0
    %1133 = vmatpush1.msra.mxu0 0.0
    %1134 = vmatprep.subr.mxu0 0.0
    %1135 = vmatpush1.msra.mxu0 0.0
    %1136 = vmatprep.subr.mxu0 0.0
    %1137 = vmatpush1.msra.mxu0 0.0
    %1138 = vmatprep.subr.mxu0 0.0
    %1139 = vmatpush1.msra.mxu0 0.0
    %1140 = vmatprep.subr.mxu0 0.0
    %1141 = vmatpush1.msra.mxu0 %v86
    %1142 = vmatprep.subr.mxu0 0.0
    %1143 = vmatpush1.msra.mxu0 %v85
    %1144 = vmatprep.subr.mxu0 0.0
    %1145 = vmatpush1.msra.mxu0 %v84
    %1146 = vmatprep.subr.mxu0 0.0
    %1147 = vmatpush1.msra.mxu0 %v83
    %1148 = vmatprep.subr.mxu0 0.0
    %1149 = vmatpush2.msra.mxu0 0.0
    %1150 = vmatprep.subr.mxu0 0.0
    %1151 = vmatpush2.msra.mxu0 0.0
    %1152 = vmatprep.subr.mxu0 0.0
    %1153 = vmatpush2.msra.mxu0 0.0
    %1154 = vmatprep.subr.mxu0 0.0
    %1155 = vmatpush2.msra.mxu0 0.0
    %1156 = vmatprep.subr.mxu0 0.0
    %1157 = vmatpush2.msra.mxu0 0.0
    %1158 = vmatprep.subr.mxu0 0.0
    %1159 = vmatpush2.msra.mxu0 0.0
    %1160 = vmatprep.subr.mxu0 0.0
    %1161 = vmatpush2.msra.mxu0 0.0
    %1162 = vmatprep.subr.mxu0 0.0
    %1163 = vmatpush2.msra.mxu0 0.0
    %1164 = vmatprep.subr.mxu0 0.0
    %1165 = vmatpush2.msra.mxu0 0.0
    %1166 = vmatprep.subr.mxu0 0.0
    %1167 = vmatpush2.msra.mxu0 0.0
    %1168 = vmatprep.subr.mxu0 0.0
    %1169 = vmatpush2.msra.mxu0 0.0
    %1170 = vmatprep.subr.mxu0 0.0
    %1171 = vmatpush2.msra.mxu0 0.0
    %1172 = vmatprep.subr.mxu0 0.0
    %1173 = vmatpush2.msra.mxu0 0.0
    %1174 = vmatprep.subr.mxu0 0.0
    %1175 = vmatpush2.msra.mxu0 0.0
    %1176 = vmatprep.subr.mxu0 0.0
    %1177 = vmatpush2.msra.mxu0 0.0
    %1178 = vmatprep.subr.mxu0 0.0
    %1179 = vmatpush2.msra.mxu0 0.0
    %1180 = vmatprep.mubr.f32.mxu0 0.0
    %1181 = vmatmul.mubr.f32.gmra.mxu0 %v974
    %v1182 = vpop.f32.mrf.mxu0
    %v1183 = vadd.f32 0.0, %v1182
    %v1184 = vpop.f32.mrf.mxu0
    %1185 = vdwg.mxu0
    %1186 = vmatprep.subr.mxu0 0.0
    %1187 = vmatpush1.msra.mxu0 0.0
    %1188 = vmatprep.subr.mxu0 0.0
    %1189 = vmatpush1.msra.mxu0 0.0
    %1190 = vmatprep.subr.mxu0 0.0
    %1191 = vmatpush1.msra.mxu0 0.0
    %1192 = vmatprep.subr.mxu0 0.0
    %1193 = vmatpush1.msra.mxu0 0.0
    %1194 = vmatprep.subr.mxu0 0.0
    %1195 = vmatpush1.msra.mxu0 0.0
    %1196 = vmatprep.subr.mxu0 0.0
    %1197 = vmatpush1.msra.mxu0 0.0
    %1198 = vmatprep.subr.mxu0 0.0
    %1199 = vmatpush1.msra.mxu0 0.0
    %1200 = vmatprep.subr.mxu0 0.0
    %1201 = vmatpush1.msra.mxu0 0.0
    %1202 = vmatprep.subr.mxu0 0.0
    %1203 = vmatpush1.msra.mxu0 0.0
    %1204 = vmatprep.subr.mxu0 0.0
    %1205 = vmatpush1.msra.mxu0 0.0
    %1206 = vmatprep.subr.mxu0 0.0
    %1207 = vmatpush1.msra.mxu0 0.0
    %1208 = vmatprep.subr.mxu0 0.0
    %1209 = vmatpush1.msra.mxu0 0.0
    %1210 = vmatprep.subr.mxu0 0.0
    %1211 = vmatpush1.msra.mxu0 %v90
    %1212 = vmatprep.subr.mxu0 0.0
    %1213 = vmatpush1.msra.mxu0 %v89
    %1214 = vmatprep.subr.mxu0 0.0
    %1215 = vmatpush1.msra.mxu0 %v88
    %1216 = vmatprep.subr.mxu0 0.0
    %1217 = vmatpush1.msra.mxu0 %v87
    %1218 = vmatprep.subr.mxu0 0.0
    %1219 = vmatpush2.msra.mxu0 0.0
    %1220 = vmatprep.subr.mxu0 0.0
    %1221 = vmatpush2.msra.mxu0 0.0
    %1222 = vmatprep.subr.mxu0 0.0
    %1223 = vmatpush2.msra.mxu0 0.0
    %1224 = vmatprep.subr.mxu0 0.0
    %1225 = vmatpush2.msra.mxu0 0.0
    %1226 = vmatprep.subr.mxu0 0.0
    %1227 = vmatpush2.msra.mxu0 0.0
    %1228 = vmatprep.subr.mxu0 0.0
    %1229 = vmatpush2.msra.mxu0 0.0
    %1230 = vmatprep.subr.mxu0 0.0
    %1231 = vmatpush2.msra.mxu0 0.0
    %1232 = vmatprep.subr.mxu0 0.0
    %1233 = vmatpush2.msra.mxu0 0.0
    %1234 = vmatprep.subr.mxu0 0.0
    %1235 = vmatpush2.msra.mxu0 0.0
    %1236 = vmatprep.subr.mxu0 0.0
    %1237 = vmatpush2.msra.mxu0 0.0
    %1238 = vmatprep.subr.mxu0 0.0
    %1239 = vmatpush2.msra.mxu0 0.0
    %1240 = vmatprep.subr.mxu0 0.0
    %1241 = vmatpush2.msra.mxu0 0.0
    %1242 = vmatprep.subr.mxu0 0.0
    %1243 = vmatpush2.msra.mxu0 0.0
    %1244 = vmatprep.subr.mxu0 0.0
    %1245 = vmatpush2.msra.mxu0 0.0
    %1246 = vmatprep.subr.mxu0 0.0
    %1247 = vmatpush2.msra.mxu0 0.0
    %1248 = vmatprep.subr.mxu0 0.0
    %1249 = vmatpush2.msra.mxu0 0.0
    %1250 = vmatprep.mubr.f32.mxu0 0.0
    %1251 = vmatmul.mubr.f32.gmra.mxu0 %v974
    %v1252 = vpop.f32.mrf.mxu0
    %v1253 = vadd.f32 0.0, %v1252
    %v1254 = vpop.f32.mrf.mxu0
    %1255 = vdwg.mxu0
    %v1257 = vsel %vm123, %v25, 0
    %1259 = vmatprep.subr.mxu0 0.0
    %1260 = vmatpush1.msra.mxu0 0.0
    %1261 = vmatprep.subr.mxu0 0.0
    %1262 = vmatpush1.msra.mxu0 0.0
    %1263 = vmatprep.subr.mxu0 0.0
    %1264 = vmatpush1.msra.mxu0 0.0
    %1265 = vmatprep.subr.mxu0 0.0
    %1266 = vmatpush1.msra.mxu0 0.0
    %1267 = vmatprep.subr.mxu0 0.0
    %1268 = vmatpush1.msra.mxu0 0.0
    %1269 = vmatprep.subr.mxu0 0.0
    %1270 = vmatpush1.msra.mxu0 0.0
    %1271 = vmatprep.subr.mxu0 0.0
    %1272 = vmatpush1.msra.mxu0 0.0
    %1273 = vmatprep.subr.mxu0 0.0
    %1274 = vmatpush1.msra.mxu0 0.0
    %1275 = vmatprep.subr.mxu0 0.0
    %1276 = vmatpush1.msra.mxu0 0.0
    %1277 = vmatprep.subr.mxu0 0.0
    %1278 = vmatpush1.msra.mxu0 0.0
    %1279 = vmatprep.subr.mxu0 0.0
    %1280 = vmatpush1.msra.mxu0 0.0
    %1281 = vmatprep.subr.mxu0 0.0
    %1282 = vmatpush1.msra.mxu0 0.0
    %1283 = vmatprep.subr.mxu0 0.0
    %1284 = vmatpush1.msra.mxu0 %v94
    %1285 = vmatprep.subr.mxu0 0.0
    %1286 = vmatpush1.msra.mxu0 %v93
    %1287 = vmatprep.subr.mxu0 0.0
    %1288 = vmatpush1.msra.mxu0 %v92
    %1289 = vmatprep.subr.mxu0 0.0
    %1290 = vmatpush1.msra.mxu0 %v91
    %1291 = vmatprep.subr.mxu0 0.0
    %1292 = vmatpush2.msra.mxu0 0.0
    %1293 = vmatprep.subr.mxu0 0.0
    %1294 = vmatpush2.msra.mxu0 0.0
    %1295 = vmatprep.subr.mxu0 0.0
    %1296 = vmatpush2.msra.mxu0 0.0
    %1297 = vmatprep.subr.mxu0 0.0
    %1298 = vmatpush2.msra.mxu0 0.0
    %1299 = vmatprep.subr.mxu0 0.0
    %1300 = vmatpush2.msra.mxu0 0.0
    %1301 = vmatprep.subr.mxu0 0.0
    %1302 = vmatpush2.msra.mxu0 0.0
    %1303 = vmatprep.subr.mxu0 0.0
    %1304 = vmatpush2.msra.mxu0 0.0
    %1305 = vmatprep.subr.mxu0 0.0
    %1306 = vmatpush2.msra.mxu0 0.0
    %1307 = vmatprep.subr.mxu0 0.0
    %1308 = vmatpush2.msra.mxu0 0.0
    %1309 = vmatprep.subr.mxu0 0.0
    %1310 = vmatpush2.msra.mxu0 0.0
    %1311 = vmatprep.subr.mxu0 0.0
    %1312 = vmatpush2.msra.mxu0 0.0
    %1313 = vmatprep.subr.mxu0 0.0
    %1314 = vmatpush2.msra.mxu0 0.0
    %1315 = vmatprep.subr.mxu0 0.0
    %1316 = vmatpush2.msra.mxu0 0.0
    %1317 = vmatprep.subr.mxu0 0.0
    %1318 = vmatpush2.msra.mxu0 0.0
    %1319 = vmatprep.subr.mxu0 0.0
    %1320 = vmatpush2.msra.mxu0 0.0
    %1321 = vmatprep.subr.mxu0 0.0
    %1322 = vmatpush2.msra.mxu0 0.0
    %1323 = vmatprep.mubr.f32.mxu0 0.0
    %1324 = vmatmul.mubr.f32.gmra.mxu0 %v1257
    %v1325 = vpop.f32.mrf.mxu0
    %v1326 = vadd.f32 0.0, %v1325
    %v1327 = vpop.f32.mrf.mxu0
    %1328 = vdwg.mxu0
    %1329 = vmatprep.subr.mxu0 0.0
    %1330 = vmatpush1.msra.mxu0 0.0
    %1331 = vmatprep.subr.mxu0 0.0
    %1332 = vmatpush1.msra.mxu0 0.0
    %1333 = vmatprep.subr.mxu0 0.0
    %1334 = vmatpush1.msra.mxu0 0.0
    %1335 = vmatprep.subr.mxu0 0.0
    %1336 = vmatpush1.msra.mxu0 0.0
    %1337 = vmatprep.subr.mxu0 0.0
    %1338 = vmatpush1.msra.mxu0 0.0
    %1339 = vmatprep.subr.mxu0 0.0
    %1340 = vmatpush1.msra.mxu0 0.0
    %1341 = vmatprep.subr.mxu0 0.0
    %1342 = vmatpush1.msra.mxu0 0.0
    %1343 = vmatprep.subr.mxu0 0.0
    %1344 = vmatpush1.msra.mxu0 0.0
    %1345 = vmatprep.subr.mxu0 0.0
    %1346 = vmatpush1.msra.mxu0 0.0
    %1347 = vmatprep.subr.mxu0 0.0
    %1348 = vmatpush1.msra.mxu0 0.0
    %1349 = vmatprep.subr.mxu0 0.0
    %1350 = vmatpush1.msra.mxu0 0.0
    %1351 = vmatprep.subr.mxu0 0.0
    %1352 = vmatpush1.msra.mxu0 0.0
    %1353 = vmatprep.subr.mxu0 0.0
    %1354 = vmatpush1.msra.mxu0 %v98
    %1355 = vmatprep.subr.mxu0 0.0
    %1356 = vmatpush1.msra.mxu0 %v97
    %1357 = vmatprep.subr.mxu0 0.0
    %1358 = vmatpush1.msra.mxu0 %v96
    %1359 = vmatprep.subr.mxu0 0.0
    %1360 = vmatpush1.msra.mxu0 %v95
    %1361 = vmatprep.subr.mxu0 0.0
    %1362 = vmatpush2.msra.mxu0 0.0
    %1363 = vmatprep.subr.mxu0 0.0
    %1364 = vmatpush2.msra.mxu0 0.0
    %1365 = vmatprep.subr.mxu0 0.0
    %1366 = vmatpush2.msra.mxu0 0.0
    %1367 = vmatprep.subr.mxu0 0.0
    %1368 = vmatpush2.msra.mxu0 0.0
    %1369 = vmatprep.subr.mxu0 0.0
    %1370 = vmatpush2.msra.mxu0 0.0
    %1371 = vmatprep.subr.mxu0 0.0
    %1372 = vmatpush2.msra.mxu0 0.0
    %1373 = vmatprep.subr.mxu0 0.0
    %1374 = vmatpush2.msra.mxu0 0.0
    %1375 = vmatprep.subr.mxu0 0.0
    %1376 = vmatpush2.msra.mxu0 0.0
    %1377 = vmatprep.subr.mxu0 0.0
    %1378 = vmatpush2.msra.mxu0 0.0
    %1379 = vmatprep.subr.mxu0 0.0
    %1380 = vmatpush2.msra.mxu0 0.0
    %1381 = vmatprep.subr.mxu0 0.0
    %1382 = vmatpush2.msra.mxu0 0.0
    %1383 = vmatprep.subr.mxu0 0.0
    %1384 = vmatpush2.msra.mxu0 0.0
    %1385 = vmatprep.subr.mxu0 0.0
    %1386 = vmatpush2.msra.mxu0 0.0
    %1387 = vmatprep.subr.mxu0 0.0
    %1388 = vmatpush2.msra.mxu0 0.0
    %1389 = vmatprep.subr.mxu0 0.0
    %1390 = vmatpush2.msra.mxu0 0.0
    %1391 = vmatprep.subr.mxu0 0.0
    %1392 = vmatpush2.msra.mxu0 0.0
    %1393 = vmatprep.mubr.f32.mxu0 0.0
    %1394 = vmatmul.mubr.f32.gmra.mxu0 %v1257
    %v1395 = vpop.f32.mrf.mxu0
    %v1396 = vadd.f32 0.0, %v1395
    %v1397 = vpop.f32.mrf.mxu0
    %1398 = vdwg.mxu0
    %1399 = vmatprep.subr.mxu0 0.0
    %1400 = vmatpush1.msra.mxu0 0.0
    %1401 = vmatprep.subr.mxu0 0.0
    %1402 = vmatpush1.msra.mxu0 0.0
    %1403 = vmatprep.subr.mxu0 0.0
    %1404 = vmatpush1.msra.mxu0 0.0
    %1405 = vmatprep.subr.mxu0 0.0
    %1406 = vmatpush1.msra.mxu0 0.0
    %1407 = vmatprep.subr.mxu0 0.0
    %1408 = vmatpush1.msra.mxu0 0.0
    %1409 = vmatprep.subr.mxu0 0.0
    %1410 = vmatpush1.msra.mxu0 0.0
    %1411 = vmatprep.subr.mxu0 0.0
    %1412 = vmatpush1.msra.mxu0 0.0
    %1413 = vmatprep.subr.mxu0 0.0
    %1414 = vmatpush1.msra.mxu0 0.0
    %1415 = vmatprep.subr.mxu0 0.0
    %1416 = vmatpush1.msra.mxu0 0.0
    %1417 = vmatprep.subr.mxu0 0.0
    %1418 = vmatpush1.msra.mxu0 0.0
    %1419 = vmatprep.subr.mxu0 0.0
    %1420 = vmatpush1.msra.mxu0 0.0
    %1421 = vmatprep.subr.mxu0 0.0
    %1422 = vmatpush1.msra.mxu0 0.0
    %1423 = vmatprep.subr.mxu0 0.0
    %1424 = vmatpush1.msra.mxu0 %v102
    %1425 = vmatprep.subr.mxu0 0.0
    %1426 = vmatpush1.msra.mxu0 %v101
    %1427 = vmatprep.subr.mxu0 0.0
    %1428 = vmatpush1.msra.mxu0 %v100
    %1429 = vmatprep.subr.mxu0 0.0
    %1430 = vmatpush1.msra.mxu0 %v99
    %1431 = vmatprep.subr.mxu0 0.0
    %1432 = vmatpush2.msra.mxu0 0.0
    %1433 = vmatprep.subr.mxu0 0.0
    %1434 = vmatpush2.msra.mxu0 0.0
    %1435 = vmatprep.subr.mxu0 0.0
    %1436 = vmatpush2.msra.mxu0 0.0
    %1437 = vmatprep.subr.mxu0 0.0
    %1438 = vmatpush2.msra.mxu0 0.0
    %1439 = vmatprep.subr.mxu0 0.0
    %1440 = vmatpush2.msra.mxu0 0.0
    %1441 = vmatprep.subr.mxu0 0.0
    %1442 = vmatpush2.msra.mxu0 0.0
    %1443 = vmatprep.subr.mxu0 0.0
    %1444 = vmatpush2.msra.mxu0 0.0
    %1445 = vmatprep.subr.mxu0 0.0
    %1446 = vmatpush2.msra.mxu0 0.0
    %1447 = vmatprep.subr.mxu0 0.0
    %1448 = vmatpush2.msra.mxu0 0.0
    %1449 = vmatprep.subr.mxu0 0.0
    %1450 = vmatpush2.msra.mxu0 0.0
    %1451 = vmatprep.subr.mxu0 0.0
    %1452 = vmatpush2.msra.mxu0 0.0
    %1453 = vmatprep.subr.mxu0 0.0
    %1454 = vmatpush2.msra.mxu0 0.0
    %1455 = vmatprep.subr.mxu0 0.0
    %1456 = vmatpush2.msra.mxu0 0.0
    %1457 = vmatprep.subr.mxu0 0.0
    %1458 = vmatpush2.msra.mxu0 0.0
    %1459 = vmatprep.subr.mxu0 0.0
    %1460 = vmatpush2.msra.mxu0 0.0
    %1461 = vmatprep.subr.mxu0 0.0
    %1462 = vmatpush2.msra.mxu0 0.0
    %1463 = vmatprep.mubr.f32.mxu0 0.0
    %1464 = vmatmul.mubr.f32.gmra.mxu0 %v1257
    %v1465 = vpop.f32.mrf.mxu0
    %v1466 = vadd.f32 0.0, %v1465
    %v1467 = vpop.f32.mrf.mxu0
    %1468 = vdwg.mxu0
    %1469 = vmatprep.subr.mxu0 0.0
    %1470 = vmatpush1.msra.mxu0 0.0
    %1471 = vmatprep.subr.mxu0 0.0
    %1472 = vmatpush1.msra.mxu0 0.0
    %1473 = vmatprep.subr.mxu0 0.0
    %1474 = vmatpush1.msra.mxu0 0.0
    %1475 = vmatprep.subr.mxu0 0.0
    %1476 = vmatpush1.msra.mxu0 0.0
    %1477 = vmatprep.subr.mxu0 0.0
    %1478 = vmatpush1.msra.mxu0 0.0
    %1479 = vmatprep.subr.mxu0 0.0
    %1480 = vmatpush1.msra.mxu0 0.0
    %1481 = vmatprep.subr.mxu0 0.0
    %1482 = vmatpush1.msra.mxu0 0.0
    %1483 = vmatprep.subr.mxu0 0.0
    %1484 = vmatpush1.msra.mxu0 0.0
    %1485 = vmatprep.subr.mxu0 0.0
    %1486 = vmatpush1.msra.mxu0 0.0
    %1487 = vmatprep.subr.mxu0 0.0
    %1488 = vmatpush1.msra.mxu0 0.0
    %1489 = vmatprep.subr.mxu0 0.0
    %1490 = vmatpush1.msra.mxu0 0.0
    %1491 = vmatprep.subr.mxu0 0.0
    %1492 = vmatpush1.msra.mxu0 0.0
    %1493 = vmatprep.subr.mxu0 0.0
    %1494 = vmatpush1.msra.mxu0 %v106
    %1495 = vmatprep.subr.mxu0 0.0
    %1496 = vmatpush1.msra.mxu0 %v105
    %1497 = vmatprep.subr.mxu0 0.0
    %1498 = vmatpush1.msra.mxu0 %v104
    %1499 = vmatprep.subr.mxu0 0.0
    %1500 = vmatpush1.msra.mxu0 %v103
    %1501 = vmatprep.subr.mxu0 0.0
    %1502 = vmatpush2.msra.mxu0 0.0
    %1503 = vmatprep.subr.mxu0 0.0
    %1504 = vmatpush2.msra.mxu0 0.0
    %1505 = vmatprep.subr.mxu0 0.0
    %1506 = vmatpush2.msra.mxu0 0.0
    %1507 = vmatprep.subr.mxu0 0.0
    %1508 = vmatpush2.msra.mxu0 0.0
    %1509 = vmatprep.subr.mxu0 0.0
    %1510 = vmatpush2.msra.mxu0 0.0
    %1511 = vmatprep.subr.mxu0 0.0
    %1512 = vmatpush2.msra.mxu0 0.0
    %1513 = vmatprep.subr.mxu0 0.0
    %1514 = vmatpush2.msra.mxu0 0.0
    %1515 = vmatprep.subr.mxu0 0.0
    %1516 = vmatpush2.msra.mxu0 0.0
    %1517 = vmatprep.subr.mxu0 0.0
    %1518 = vmatpush2.msra.mxu0 0.0
    %1519 = vmatprep.subr.mxu0 0.0
    %1520 = vmatpush2.msra.mxu0 0.0
    %1521 = vmatprep.subr.mxu0 0.0
    %1522 = vmatpush2.msra.mxu0 0.0
    %1523 = vmatprep.subr.mxu0 0.0
    %1524 = vmatpush2.msra.mxu0 0.0
    %1525 = vmatprep.subr.mxu0 0.0
    %1526 = vmatpush2.msra.mxu0 0.0
    %1527 = vmatprep.subr.mxu0 0.0
    %1528 = vmatpush2.msra.mxu0 0.0
    %1529 = vmatprep.subr.mxu0 0.0
    %1530 = vmatpush2.msra.mxu0 0.0
    %1531 = vmatprep.subr.mxu0 0.0
    %1532 = vmatpush2.msra.mxu0 0.0
    %1533 = vmatprep.mubr.f32.mxu0 0.0
    %1534 = vmatmul.mubr.f32.gmra.mxu0 %v1257
    %v1535 = vpop.f32.mrf.mxu0
    %v1536 = vadd.f32 0.0, %v1535
    %v1537 = vpop.f32.mrf.mxu0
    %1538 = vdwg.mxu0
    %v1540 = vsel %vm123, %v26, 0
    %1542 = vmatprep.subr.mxu0 0.0
    %1543 = vmatpush1.msra.mxu0 0.0
    %1544 = vmatprep.subr.mxu0 0.0
    %1545 = vmatpush1.msra.mxu0 0.0
    %1546 = vmatprep.subr.mxu0 0.0
    %1547 = vmatpush1.msra.mxu0 0.0
    %1548 = vmatprep.subr.mxu0 0.0
    %1549 = vmatpush1.msra.mxu0 0.0
    %1550 = vmatprep.subr.mxu0 0.0
    %1551 = vmatpush1.msra.mxu0 0.0
    %1552 = vmatprep.subr.mxu0 0.0
    %1553 = vmatpush1.msra.mxu0 0.0
    %1554 = vmatprep.subr.mxu0 0.0
    %1555 = vmatpush1.msra.mxu0 0.0
    %1556 = vmatprep.subr.mxu0 0.0
    %1557 = vmatpush1.msra.mxu0 0.0
    %1558 = vmatprep.subr.mxu0 0.0
    %1559 = vmatpush1.msra.mxu0 0.0
    %1560 = vmatprep.subr.mxu0 0.0
    %1561 = vmatpush1.msra.mxu0 0.0
    %1562 = vmatprep.subr.mxu0 0.0
    %1563 = vmatpush1.msra.mxu0 0.0
    %1564 = vmatprep.subr.mxu0 0.0
    %1565 = vmatpush1.msra.mxu0 0.0
    %1566 = vmatprep.subr.mxu0 0.0
    %1567 = vmatpush1.msra.mxu0 %v110
    %1568 = vmatprep.subr.mxu0 0.0
    %1569 = vmatpush1.msra.mxu0 %v109
    %1570 = vmatprep.subr.mxu0 0.0
    %1571 = vmatpush1.msra.mxu0 %v108
    %1572 = vmatprep.subr.mxu0 0.0
    %1573 = vmatpush1.msra.mxu0 %v107
    %1574 = vmatprep.subr.mxu0 0.0
    %1575 = vmatpush2.msra.mxu0 0.0
    %1576 = vmatprep.subr.mxu0 0.0
    %1577 = vmatpush2.msra.mxu0 0.0
    %1578 = vmatprep.subr.mxu0 0.0
    %1579 = vmatpush2.msra.mxu0 0.0
    %1580 = vmatprep.subr.mxu0 0.0
    %1581 = vmatpush2.msra.mxu0 0.0
    %1582 = vmatprep.subr.mxu0 0.0
    %1583 = vmatpush2.msra.mxu0 0.0
    %1584 = vmatprep.subr.mxu0 0.0
    %1585 = vmatpush2.msra.mxu0 0.0
    %1586 = vmatprep.subr.mxu0 0.0
    %1587 = vmatpush2.msra.mxu0 0.0
    %1588 = vmatprep.subr.mxu0 0.0
    %1589 = vmatpush2.msra.mxu0 0.0
    %1590 = vmatprep.subr.mxu0 0.0
    %1591 = vmatpush2.msra.mxu0 0.0
    %1592 = vmatprep.subr.mxu0 0.0
    %1593 = vmatpush2.msra.mxu0 0.0
    %1594 = vmatprep.subr.mxu0 0.0
    %1595 = vmatpush2.msra.mxu0 0.0
    %1596 = vmatprep.subr.mxu0 0.0
    %1597 = vmatpush2.msra.mxu0 0.0
    %1598 = vmatprep.subr.mxu0 0.0
    %1599 = vmatpush2.msra.mxu0 0.0
    %1600 = vmatprep.subr.mxu0 0.0
    %1601 = vmatpush2.msra.mxu0 0.0
    %1602 = vmatprep.subr.mxu0 0.0
    %1603 = vmatpush2.msra.mxu0 0.0
    %1604 = vmatprep.subr.mxu0 0.0
    %1605 = vmatpush2.msra.mxu0 0.0
    %1606 = vmatprep.mubr.f32.mxu0 0.0
    %1607 = vmatmul.mubr.f32.gmra.mxu0 %v1540
    %v1608 = vpop.f32.mrf.mxu0
    %v1609 = vadd.f32 0.0, %v1608
    %v1610 = vpop.f32.mrf.mxu0
    %1611 = vdwg.mxu0
    %1612 = vmatprep.subr.mxu0 0.0
    %1613 = vmatpush1.msra.mxu0 0.0
    %1614 = vmatprep.subr.mxu0 0.0
    %1615 = vmatpush1.msra.mxu0 0.0
    %1616 = vmatprep.subr.mxu0 0.0
    %1617 = vmatpush1.msra.mxu0 0.0
    %1618 = vmatprep.subr.mxu0 0.0
    %1619 = vmatpush1.msra.mxu0 0.0
    %1620 = vmatprep.subr.mxu0 0.0
    %1621 = vmatpush1.msra.mxu0 0.0
    %1622 = vmatprep.subr.mxu0 0.0
    %1623 = vmatpush1.msra.mxu0 0.0
    %1624 = vmatprep.subr.mxu0 0.0
    %1625 = vmatpush1.msra.mxu0 0.0
    %1626 = vmatprep.subr.mxu0 0.0
    %1627 = vmatpush1.msra.mxu0 0.0
    %1628 = vmatprep.subr.mxu0 0.0
    %1629 = vmatpush1.msra.mxu0 0.0
    %1630 = vmatprep.subr.mxu0 0.0
    %1631 = vmatpush1.msra.mxu0 0.0
    %1632 = vmatprep.subr.mxu0 0.0
    %1633 = vmatpush1.msra.mxu0 0.0
    %1634 = vmatprep.subr.mxu0 0.0
    %1635 = vmatpush1.msra.mxu0 0.0
    %1636 = vmatprep.subr.mxu0 0.0
    %1637 = vmatpush1.msra.mxu0 %v114
    %1638 = vmatprep.subr.mxu0 0.0
    %1639 = vmatpush1.msra.mxu0 %v113
    %1640 = vmatprep.subr.mxu0 0.0
    %1641 = vmatpush1.msra.mxu0 %v112
    %1642 = vmatprep.subr.mxu0 0.0
    %1643 = vmatpush1.msra.mxu0 %v111
    %1644 = vmatprep.subr.mxu0 0.0
    %1645 = vmatpush2.msra.mxu0 0.0
    %1646 = vmatprep.subr.mxu0 0.0
    %1647 = vmatpush2.msra.mxu0 0.0
    %1648 = vmatprep.subr.mxu0 0.0
    %1649 = vmatpush2.msra.mxu0 0.0
    %1650 = vmatprep.subr.mxu0 0.0
    %1651 = vmatpush2.msra.mxu0 0.0
    %1652 = vmatprep.subr.mxu0 0.0
    %1653 = vmatpush2.msra.mxu0 0.0
    %1654 = vmatprep.subr.mxu0 0.0
    %1655 = vmatpush2.msra.mxu0 0.0
    %1656 = vmatprep.subr.mxu0 0.0
    %1657 = vmatpush2.msra.mxu0 0.0
    %1658 = vmatprep.subr.mxu0 0.0
    %1659 = vmatpush2.msra.mxu0 0.0
    %1660 = vmatprep.subr.mxu0 0.0
    %1661 = vmatpush2.msra.mxu0 0.0
    %1662 = vmatprep.subr.mxu0 0.0
    %1663 = vmatpush2.msra.mxu0 0.0
    %1664 = vmatprep.subr.mxu0 0.0
    %1665 = vmatpush2.msra.mxu0 0.0
    %1666 = vmatprep.subr.mxu0 0.0
    %1667 = vmatpush2.msra.mxu0 0.0
    %1668 = vmatprep.subr.mxu0 0.0
    %1669 = vmatpush2.msra.mxu0 0.0
    %1670 = vmatprep.subr.mxu0 0.0
    %1671 = vmatpush2.msra.mxu0 0.0
    %1672 = vmatprep.subr.mxu0 0.0
    %1673 = vmatpush2.msra.mxu0 0.0
    %1674 = vmatprep.subr.mxu0 0.0
    %1675 = vmatpush2.msra.mxu0 0.0
    %1676 = vmatprep.mubr.f32.mxu0 0.0
    %1677 = vmatmul.mubr.f32.gmra.mxu0 %v1540
    %v1678 = vpop.f32.mrf.mxu0
    %v1679 = vadd.f32 0.0, %v1678
    %v1680 = vpop.f32.mrf.mxu0
    %1681 = vdwg.mxu0
    %1682 = vmatprep.subr.mxu0 0.0
    %1683 = vmatpush1.msra.mxu0 0.0
    %1684 = vmatprep.subr.mxu0 0.0
    %1685 = vmatpush1.msra.mxu0 0.0
    %1686 = vmatprep.subr.mxu0 0.0
    %1687 = vmatpush1.msra.mxu0 0.0
    %1688 = vmatprep.subr.mxu0 0.0
    %1689 = vmatpush1.msra.mxu0 0.0
    %1690 = vmatprep.subr.mxu0 0.0
    %1691 = vmatpush1.msra.mxu0 0.0
    %1692 = vmatprep.subr.mxu0 0.0
    %1693 = vmatpush1.msra.mxu0 0.0
    %1694 = vmatprep.subr.mxu0 0.0
    %1695 = vmatpush1.msra.mxu0 0.0
    %1696 = vmatprep.subr.mxu0 0.0
    %1697 = vmatpush1.msra.mxu0 0.0
    %1698 = vmatprep.subr.mxu0 0.0
    %1699 = vmatpush1.msra.mxu0 0.0
    %1700 = vmatprep.subr.mxu0 0.0
    %1701 = vmatpush1.msra.mxu0 0.0
    %1702 = vmatprep.subr.mxu0 0.0
    %1703 = vmatpush1.msra.mxu0 0.0
    %1704 = vmatprep.subr.mxu0 0.0
    %1705 = vmatpush1.msra.mxu0 0.0
    %1706 = vmatprep.subr.mxu0 0.0
    %1707 = vmatpush1.msra.mxu0 %v118
    %1708 = vmatprep.subr.mxu0 0.0
    %1709 = vmatpush1.msra.mxu0 %v117
    %1710 = vmatprep.subr.mxu0 0.0
    %1711 = vmatpush1.msra.mxu0 %v116
    %1712 = vmatprep.subr.mxu0 0.0
    %1713 = vmatpush1.msra.mxu0 %v115
    %1714 = vmatprep.subr.mxu0 0.0
    %1715 = vmatpush2.msra.mxu0 0.0
    %1716 = vmatprep.subr.mxu0 0.0
    %1717 = vmatpush2.msra.mxu0 0.0
    %1718 = vmatprep.subr.mxu0 0.0
    %1719 = vmatpush2.msra.mxu0 0.0
    %1720 = vmatprep.subr.mxu0 0.0
    %1721 = vmatpush2.msra.mxu0 0.0
    %1722 = vmatprep.subr.mxu0 0.0
    %1723 = vmatpush2.msra.mxu0 0.0
    %1724 = vmatprep.subr.mxu0 0.0
    %1725 = vmatpush2.msra.mxu0 0.0
    %1726 = vmatprep.subr.mxu0 0.0
    %1727 = vmatpush2.msra.mxu0 0.0
    %1728 = vmatprep.subr.mxu0 0.0
    %1729 = vmatpush2.msra.mxu0 0.0
    %1730 = vmatprep.subr.mxu0 0.0
    %1731 = vmatpush2.msra.mxu0 0.0
    %1732 = vmatprep.subr.mxu0 0.0
    %1733 = vmatpush2.msra.mxu0 0.0
    %1734 = vmatprep.subr.mxu0 0.0
    %1735 = vmatpush2.msra.mxu0 0.0
    %1736 = vmatprep.subr.mxu0 0.0
    %1737 = vmatpush2.msra.mxu0 0.0
    %1738 = vmatprep.subr.mxu0 0.0
    %1739 = vmatpush2.msra.mxu0 0.0
    %1740 = vmatprep.subr.mxu0 0.0
    %1741 = vmatpush2.msra.mxu0 0.0
    %1742 = vmatprep.subr.mxu0 0.0
    %1743 = vmatpush2.msra.mxu0 0.0
    %1744 = vmatprep.subr.mxu0 0.0
    %1745 = vmatpush2.msra.mxu0 0.0
    %1746 = vmatprep.mubr.f32.mxu0 0.0
    %1747 = vmatmul.mubr.f32.gmra.mxu0 %v1540
    %v1748 = vpop.f32.mrf.mxu0
    %v1749 = vadd.f32 0.0, %v1748
    %v1750 = vpop.f32.mrf.mxu0
    %1751 = vdwg.mxu0
    %1752 = vmatprep.subr.mxu0 0.0
    %1753 = vmatpush1.msra.mxu0 0.0
    %1754 = vmatprep.subr.mxu0 0.0
    %1755 = vmatpush1.msra.mxu0 0.0
    %1756 = vmatprep.subr.mxu0 0.0
    %1757 = vmatpush1.msra.mxu0 0.0
    %1758 = vmatprep.subr.mxu0 0.0
    %1759 = vmatpush1.msra.mxu0 0.0
    %1760 = vmatprep.subr.mxu0 0.0
    %1761 = vmatpush1.msra.mxu0 0.0
    %1762 = vmatprep.subr.mxu0 0.0
    %1763 = vmatpush1.msra.mxu0 0.0
    %1764 = vmatprep.subr.mxu0 0.0
    %1765 = vmatpush1.msra.mxu0 0.0
    %1766 = vmatprep.subr.mxu0 0.0
    %1767 = vmatpush1.msra.mxu0 0.0
    %1768 = vmatprep.subr.mxu0 0.0
    %1769 = vmatpush1.msra.mxu0 0.0
    %1770 = vmatprep.subr.mxu0 0.0
    %1771 = vmatpush1.msra.mxu0 0.0
    %1772 = vmatprep.subr.mxu0 0.0
    %1773 = vmatpush1.msra.mxu0 0.0
    %1774 = vmatprep.subr.mxu0 0.0
    %1775 = vmatpush1.msra.mxu0 0.0
    %1776 = vmatprep.subr.mxu0 0.0
    %1777 = vmatpush1.msra.mxu0 %v122
    %1778 = vmatprep.subr.mxu0 0.0
    %1779 = vmatpush1.msra.mxu0 %v121
    %1780 = vmatprep.subr.mxu0 0.0
    %1781 = vmatpush1.msra.mxu0 %v120
    %1782 = vmatprep.subr.mxu0 0.0
    %1783 = vmatpush1.msra.mxu0 %v119
    %1784 = vmatprep.subr.mxu0 0.0
    %1785 = vmatpush2.msra.mxu0 0.0
    %1786 = vmatprep.subr.mxu0 0.0
    %1787 = vmatpush2.msra.mxu0 0.0
    %1788 = vmatprep.subr.mxu0 0.0
    %1789 = vmatpush2.msra.mxu0 0.0
    %1790 = vmatprep.subr.mxu0 0.0
    %1791 = vmatpush2.msra.mxu0 0.0
    %1792 = vmatprep.subr.mxu0 0.0
    %1793 = vmatpush2.msra.mxu0 0.0
    %1794 = vmatprep.subr.mxu0 0.0
    %1795 = vmatpush2.msra.mxu0 0.0
    %1796 = vmatprep.subr.mxu0 0.0
    %1797 = vmatpush2.msra.mxu0 0.0
    %1798 = vmatprep.subr.mxu0 0.0
    %1799 = vmatpush2.msra.mxu0 0.0
    %1800 = vmatprep.subr.mxu0 0.0
    %1801 = vmatpush2.msra.mxu0 0.0
    %1802 = vmatprep.subr.mxu0 0.0
    %1803 = vmatpush2.msra.mxu0 0.0
    %1804 = vmatprep.subr.mxu0 0.0
    %1805 = vmatpush2.msra.mxu0 0.0
    %1806 = vmatprep.subr.mxu0 0.0
    %1807 = vmatpush2.msra.mxu0 0.0
    %1808 = vmatprep.subr.mxu0 0.0
    %1809 = vmatpush2.msra.mxu0 0.0
    %1810 = vmatprep.subr.mxu0 0.0
    %1811 = vmatpush2.msra.mxu0 0.0
    %1812 = vmatprep.subr.mxu0 0.0
    %1813 = vmatpush2.msra.mxu0 0.0
    %1814 = vmatprep.subr.mxu0 0.0
    %1815 = vmatpush2.msra.mxu0 0.0
    %1816 = vmatprep.mubr.f32.mxu0 0.0
    %1817 = vmatmul.mubr.f32.gmra.mxu0 %v1540
    %v1818 = vpop.f32.mrf.mxu0
    %v1819 = vadd.f32 0.0, %v1818
    %v1820 = vpop.f32.mrf.mxu0
    %1821 = vdwg.mxu0
    %vm1822 = vcmask 64512
    %v1824 = vsel %vm1822, %v194, 0
    %v1827 = vsel %vm1822, %v760, 0
    %1829 = vmatprep.subr.mxu0 0.0
    %1830 = vmatpush1.xpose.msra.mxu0 0.0
    %1831 = vmatprep.subr.mxu0 0.0
    %1832 = vmatpush1.xpose.msra.mxu0 0.0
    %1833 = vmatprep.subr.mxu0 0.0
    %1834 = vmatpush1.xpose.msra.mxu0 0.0
    %1835 = vmatprep.subr.mxu0 0.0
    %1836 = vmatpush1.xpose.msra.mxu0 0.0
    %1837 = vmatprep.subr.mxu0 0.0
    %1838 = vmatpush1.xpose.msra.mxu0 0.0
    %1839 = vmatprep.subr.mxu0 0.0
    %1840 = vmatpush1.xpose.msra.mxu0 0.0
    %1841 = vmatprep.subr.mxu0 0.0
    %1842 = vmatpush1.xpose.msra.mxu0 0.0
    %1843 = vmatprep.subr.mxu0 0.0
    %1844 = vmatpush1.xpose.msra.mxu0 0.0
    %1845 = vmatprep.subr.mxu0 0.0
    %1846 = vmatpush1.xpose.msra.mxu0 0.0
    %1847 = vmatprep.subr.mxu0 0.0
    %1848 = vmatpush1.xpose.msra.mxu0 0.0
    %1849 = vmatprep.subr.mxu0 0.0
    %1850 = vmatpush1.xpose.msra.mxu0 0.0
    %1851 = vmatprep.subr.mxu0 0.0
    %1852 = vmatpush1.xpose.msra.mxu0 0.0
    %1853 = vmatprep.subr.mxu0 0.0
    %1854 = vmatpush1.xpose.msra.mxu0 0.0
    %1855 = vmatprep.subr.mxu0 0.0
    %1856 = vmatpush1.xpose.msra.mxu0 0.0
    %1857 = vmatprep.subr.mxu0 0.0
    %1858 = vmatpush1.xpose.msra.mxu0 0.0
    %1859 = vmatprep.subr.mxu0 0.0
    %1860 = vmatpush1.xpose.msra.mxu0 %v1827
    %1861 = vmatprep.subr.mxu0 0.0
    %1862 = vmatpush2.xpose.msra.mxu0 0.0
    %1863 = vmatprep.subr.mxu0 0.0
    %1864 = vmatpush2.xpose.msra.mxu0 0.0
    %1865 = vmatprep.subr.mxu0 0.0
    %1866 = vmatpush2.xpose.msra.mxu0 0.0
    %1867 = vmatprep.subr.mxu0 0.0
    %1868 = vmatpush2.xpose.msra.mxu0 0.0
    %1869 = vmatprep.subr.mxu0 0.0
    %1870 = vmatpush2.xpose.msra.mxu0 0.0
    %1871 = vmatprep.subr.mxu0 0.0
    %1872 = vmatpush2.xpose.msra.mxu0 0.0
    %1873 = vmatprep.subr.mxu0 0.0
    %1874 = vmatpush2.xpose.msra.mxu0 0.0
    %1875 = vmatprep.subr.mxu0 0.0
    %1876 = vmatpush2.xpose.msra.mxu0 0.0
    %1877 = vmatprep.subr.mxu0 0.0
    %1878 = vmatpush2.xpose.msra.mxu0 0.0
    %1879 = vmatprep.subr.mxu0 0.0
    %1880 = vmatpush2.xpose.msra.mxu0 0.0
    %1881 = vmatprep.subr.mxu0 0.0
    %1882 = vmatpush2.xpose.msra.mxu0 0.0
    %1883 = vmatprep.subr.mxu0 0.0
    %1884 = vmatpush2.xpose.msra.mxu0 0.0
    %1885 = vmatprep.subr.mxu0 0.0
    %1886 = vmatpush2.xpose.msra.mxu0 0.0
    %1887 = vmatprep.subr.mxu0 0.0
    %1888 = vmatpush2.xpose.msra.mxu0 0.0
    %1889 = vmatprep.subr.mxu0 0.0
    %1890 = vmatpush2.xpose.msra.mxu0 0.0
    %1891 = vmatprep.subr.mxu0 0.0
    %1892 = vmatpush2.xpose.msra.mxu0 0.0
    %1893 = vmatprep.mubr.f32.mxu0 0.0
    %1894 = vmatmul.mubr.f32.gmra.mxu0 %v1824
    %v1895 = vpop.f32.mrf.mxu0
    %v1896 = vadd.f32 0.0, %v1895
    %v1897 = vpop.f32.mrf.mxu0
    %1898 = vdwg.mxu0
    %v1900 = vsel %vm1822, %v264, 0
    %v1903 = vsel %vm1822, %v830, 0
    %1905 = vmatprep.subr.mxu0 0.0
    %1906 = vmatpush1.xpose.msra.mxu0 0.0
    %1907 = vmatprep.subr.mxu0 0.0
    %1908 = vmatpush1.xpose.msra.mxu0 0.0
    %1909 = vmatprep.subr.mxu0 0.0
    %1910 = vmatpush1.xpose.msra.mxu0 0.0
    %1911 = vmatprep.subr.mxu0 0.0
    %1912 = vmatpush1.xpose.msra.mxu0 0.0
    %1913 = vmatprep.subr.mxu0 0.0
    %1914 = vmatpush1.xpose.msra.mxu0 0.0
    %1915 = vmatprep.subr.mxu0 0.0
    %1916 = vmatpush1.xpose.msra.mxu0 0.0
    %1917 = vmatprep.subr.mxu0 0.0
    %1918 = vmatpush1.xpose.msra.mxu0 0.0
    %1919 = vmatprep.subr.mxu0 0.0
    %1920 = vmatpush1.xpose.msra.mxu0 0.0
    %1921 = vmatprep.subr.mxu0 0.0
    %1922 = vmatpush1.xpose.msra.mxu0 0.0
    %1923 = vmatprep.subr.mxu0 0.0
    %1924 = vmatpush1.xpose.msra.mxu0 0.0
    %1925 = vmatprep.subr.mxu0 0.0
    %1926 = vmatpush1.xpose.msra.mxu0 0.0
    %1927 = vmatprep.subr.mxu0 0.0
    %1928 = vmatpush1.xpose.msra.mxu0 0.0
    %1929 = vmatprep.subr.mxu0 0.0
    %1930 = vmatpush1.xpose.msra.mxu0 0.0
    %1931 = vmatprep.subr.mxu0 0.0
    %1932 = vmatpush1.xpose.msra.mxu0 0.0
    %1933 = vmatprep.subr.mxu0 0.0
    %1934 = vmatpush1.xpose.msra.mxu0 0.0
    %1935 = vmatprep.subr.mxu0 0.0
    %1936 = vmatpush1.xpose.msra.mxu0 %v1903
    %1937 = vmatprep.subr.mxu0 0.0
    %1938 = vmatpush2.xpose.msra.mxu0 0.0
    %1939 = vmatprep.subr.mxu0 0.0
    %1940 = vmatpush2.xpose.msra.mxu0 0.0
    %1941 = vmatprep.subr.mxu0 0.0
    %1942 = vmatpush2.xpose.msra.mxu0 0.0
    %1943 = vmatprep.subr.mxu0 0.0
    %1944 = vmatpush2.xpose.msra.mxu0 0.0
    %1945 = vmatprep.subr.mxu0 0.0
    %1946 = vmatpush2.xpose.msra.mxu0 0.0
    %1947 = vmatprep.subr.mxu0 0.0
    %1948 = vmatpush2.xpose.msra.mxu0 0.0
    %1949 = vmatprep.subr.mxu0 0.0
    %1950 = vmatpush2.xpose.msra.mxu0 0.0
    %1951 = vmatprep.subr.mxu0 0.0
    %1952 = vmatpush2.xpose.msra.mxu0 0.0
    %1953 = vmatprep.subr.mxu0 0.0
    %1954 = vmatpush2.xpose.msra.mxu0 0.0
    %1955 = vmatprep.subr.mxu0 0.0
    %1956 = vmatpush2.xpose.msra.mxu0 0.0
    %1957 = vmatprep.subr.mxu0 0.0
    %1958 = vmatpush2.xpose.msra.mxu0 0.0
    %1959 = vmatprep.subr.mxu0 0.0
    %1960 = vmatpush2.xpose.msra.mxu0 0.0
    %1961 = vmatprep.subr.mxu0 0.0
    %1962 = vmatpush2.xpose.msra.mxu0 0.0
    %1963 = vmatprep.subr.mxu0 0.0
    %1964 = vmatpush2.xpose.msra.mxu0 0.0
    %1965 = vmatprep.subr.mxu0 0.0
    %1966 = vmatpush2.xpose.msra.mxu0 0.0
    %1967 = vmatprep.subr.mxu0 0.0
    %1968 = vmatpush2.xpose.msra.mxu0 0.0
    %1969 = vmatprep.mubr.f32.mxu0 0.0
    %1970 = vmatmul.mubr.f32.gmra.mxu0 %v1900
    %v1971 = vpop.f32.mrf.mxu0
    %v1972 = vadd.f32 0.0, %v1971
    %v1973 = vpop.f32.mrf.mxu0
    %1974 = vdwg.mxu0
    %v1976 = vsel %vm1822, %v334, 0
    %v1979 = vsel %vm1822, %v900, 0
    %1981 = vmatprep.subr.mxu0 0.0
    %1982 = vmatpush1.xpose.msra.mxu0 0.0
    %1983 = vmatprep.subr.mxu0 0.0
    %1984 = vmatpush1.xpose.msra.mxu0 0.0
    %1985 = vmatprep.subr.mxu0 0.0
    %1986 = vmatpush1.xpose.msra.mxu0 0.0
    %1987 = vmatprep.subr.mxu0 0.0
    %1988 = vmatpush1.xpose.msra.mxu0 0.0
    %1989 = vmatprep.subr.mxu0 0.0
    %1990 = vmatpush1.xpose.msra.mxu0 0.0
    %1991 = vmatprep.subr.mxu0 0.0
    %1992 = vmatpush1.xpose.msra.mxu0 0.0
    %1993 = vmatprep.subr.mxu0 0.0
    %1994 = vmatpush1.xpose.msra.mxu0 0.0
    %1995 = vmatprep.subr.mxu0 0.0
    %1996 = vmatpush1.xpose.msra.mxu0 0.0
    %1997 = vmatprep.subr.mxu0 0.0
    %1998 = vmatpush1.xpose.msra.mxu0 0.0
    %1999 = vmatprep.subr.mxu0 0.0
    %2000 = vmatpush1.xpose.msra.mxu0 0.0
    %2001 = vmatprep.subr.mxu0 0.0
    %2002 = vmatpush1.xpose.msra.mxu0 0.0
    %2003 = vmatprep.subr.mxu0 0.0
    %2004 = vmatpush1.xpose.msra.mxu0 0.0
    %2005 = vmatprep.subr.mxu0 0.0
    %2006 = vmatpush1.xpose.msra.mxu0 0.0
    %2007 = vmatprep.subr.mxu0 0.0
    %2008 = vmatpush1.xpose.msra.mxu0 0.0
    %2009 = vmatprep.subr.mxu0 0.0
    %2010 = vmatpush1.xpose.msra.mxu0 0.0
    %2011 = vmatprep.subr.mxu0 0.0
    %2012 = vmatpush1.xpose.msra.mxu0 %v1979
    %2013 = vmatprep.subr.mxu0 0.0
    %2014 = vmatpush2.xpose.msra.mxu0 0.0
    %2015 = vmatprep.subr.mxu0 0.0
    %2016 = vmatpush2.xpose.msra.mxu0 0.0
    %2017 = vmatprep.subr.mxu0 0.0
    %2018 = vmatpush2.xpose.msra.mxu0 0.0
    %2019 = vmatprep.subr.mxu0 0.0
    %2020 = vmatpush2.xpose.msra.mxu0 0.0
    %2021 = vmatprep.subr.mxu0 0.0
    %2022 = vmatpush2.xpose.msra.mxu0 0.0
    %2023 = vmatprep.subr.mxu0 0.0
    %2024 = vmatpush2.xpose.msra.mxu0 0.0
    %2025 = vmatprep.subr.mxu0 0.0
    %2026 = vmatpush2.xpose.msra.mxu0 0.0
    %2027 = vmatprep.subr.mxu0 0.0
    %2028 = vmatpush2.xpose.msra.mxu0 0.0
    %2029 = vmatprep.subr.mxu0 0.0
    %2030 = vmatpush2.xpose.msra.mxu0 0.0
    %2031 = vmatprep.subr.mxu0 0.0
    %2032 = vmatpush2.xpose.msra.mxu0 0.0
    %2033 = vmatprep.subr.mxu0 0.0
    %2034 = vmatpush2.xpose.msra.mxu0 0.0
    %2035 = vmatprep.subr.mxu0 0.0
    %2036 = vmatpush2.xpose.msra.mxu0 0.0
    %2037 = vmatprep.subr.mxu0 0.0
    %2038 = vmatpush2.xpose.msra.mxu0 0.0
    %2039 = vmatprep.subr.mxu0 0.0
    %2040 = vmatpush2.xpose.msra.mxu0 0.0
    %2041 = vmatprep.subr.mxu0 0.0
    %2042 = vmatpush2.xpose.msra.mxu0 0.0
    %2043 = vmatprep.subr.mxu0 0.0
    %2044 = vmatpush2.xpose.msra.mxu0 0.0
    %2045 = vmatprep.mubr.f32.mxu0 0.0
    %2046 = vmatmul.mubr.f32.gmra.mxu0 %v1976
    %v2047 = vpop.f32.mrf.mxu0
    %v2048 = vadd.f32 0.0, %v2047
    %v2049 = vpop.f32.mrf.mxu0
    %2050 = vdwg.mxu0
    %v2052 = vsel %vm1822, %v404, 0
    %v2055 = vsel %vm1822, %v970, 0
    %2057 = vmatprep.subr.mxu0 0.0
    %2058 = vmatpush1.xpose.msra.mxu0 0.0
    %2059 = vmatprep.subr.mxu0 0.0
    %2060 = vmatpush1.xpose.msra.mxu0 0.0
    %2061 = vmatprep.subr.mxu0 0.0
    %2062 = vmatpush1.xpose.msra.mxu0 0.0
    %2063 = vmatprep.subr.mxu0 0.0
    %2064 = vmatpush1.xpose.msra.mxu0 0.0
    %2065 = vmatprep.subr.mxu0 0.0
    %2066 = vmatpush1.xpose.msra.mxu0 0.0
    %2067 = vmatprep.subr.mxu0 0.0
    %2068 = vmatpush1.xpose.msra.mxu0 0.0
    %2069 = vmatprep.subr.mxu0 0.0
    %2070 = vmatpush1.xpose.msra.mxu0 0.0
    %2071 = vmatprep.subr.mxu0 0.0
    %2072 = vmatpush1.xpose.msra.mxu0 0.0
    %2073 = vmatprep.subr.mxu0 0.0
    %2074 = vmatpush1.xpose.msra.mxu0 0.0
    %2075 = vmatprep.subr.mxu0 0.0
    %2076 = vmatpush1.xpose.msra.mxu0 0.0
    %2077 = vmatprep.subr.mxu0 0.0
    %2078 = vmatpush1.xpose.msra.mxu0 0.0
    %2079 = vmatprep.subr.mxu0 0.0
    %2080 = vmatpush1.xpose.msra.mxu0 0.0
    %2081 = vmatprep.subr.mxu0 0.0
    %2082 = vmatpush1.xpose.msra.mxu0 0.0
    %2083 = vmatprep.subr.mxu0 0.0
    %2084 = vmatpush1.xpose.msra.mxu0 0.0
    %2085 = vmatprep.subr.mxu0 0.0
    %2086 = vmatpush1.xpose.msra.mxu0 0.0
    %2087 = vmatprep.subr.mxu0 0.0
    %2088 = vmatpush1.xpose.msra.mxu0 %v2055
    %2089 = vmatprep.subr.mxu0 0.0
    %2090 = vmatpush2.xpose.msra.mxu0 0.0
    %2091 = vmatprep.subr.mxu0 0.0
    %2092 = vmatpush2.xpose.msra.mxu0 0.0
    %2093 = vmatprep.subr.mxu0 0.0
    %2094 = vmatpush2.xpose.msra.mxu0 0.0
    %2095 = vmatprep.subr.mxu0 0.0
    %2096 = vmatpush2.xpose.msra.mxu0 0.0
    %2097 = vmatprep.subr.mxu0 0.0
    %2098 = vmatpush2.xpose.msra.mxu0 0.0
    %2099 = vmatprep.subr.mxu0 0.0
    %2100 = vmatpush2.xpose.msra.mxu0 0.0
    %2101 = vmatprep.subr.mxu0 0.0
    %2102 = vmatpush2.xpose.msra.mxu0 0.0
    %2103 = vmatprep.subr.mxu0 0.0
    %2104 = vmatpush2.xpose.msra.mxu0 0.0
    %2105 = vmatprep.subr.mxu0 0.0
    %2106 = vmatpush2.xpose.msra.mxu0 0.0
    %2107 = vmatprep.subr.mxu0 0.0
    %2108 = vmatpush2.xpose.msra.mxu0 0.0
    %2109 = vmatprep.subr.mxu0 0.0
    %2110 = vmatpush2.xpose.msra.mxu0 0.0
    %2111 = vmatprep.subr.mxu0 0.0
    %2112 = vmatpush2.xpose.msra.mxu0 0.0
    %2113 = vmatprep.subr.mxu0 0.0
    %2114 = vmatpush2.xpose.msra.mxu0 0.0
    %2115 = vmatprep.subr.mxu0 0.0
    %2116 = vmatpush2.xpose.msra.mxu0 0.0
    %2117 = vmatprep.subr.mxu0 0.0
    %2118 = vmatpush2.xpose.msra.mxu0 0.0
    %2119 = vmatprep.subr.mxu0 0.0
    %2120 = vmatpush2.xpose.msra.mxu0 0.0
    %2121 = vmatprep.mubr.f32.mxu0 0.0
    %2122 = vmatmul.mubr.f32.gmra.mxu0 %v2052
    %v2123 = vpop.f32.mrf.mxu0
    %v2124 = vadd.f32 0.0, %v2123
    %v2125 = vpop.f32.mrf.mxu0
    %2126 = vdwg.mxu0
    %v2128 = vsel %vm1822, %v477, 0
    %v2131 = vsel %vm1822, %v1043, 0
    %2133 = vmatprep.subr.mxu0 0.0
    %2134 = vmatpush1.xpose.msra.mxu0 0.0
    %2135 = vmatprep.subr.mxu0 0.0
    %2136 = vmatpush1.xpose.msra.mxu0 0.0
    %2137 = vmatprep.subr.mxu0 0.0
    %2138 = vmatpush1.xpose.msra.mxu0 0.0
    %2139 = vmatprep.subr.mxu0 0.0
    %2140 = vmatpush1.xpose.msra.mxu0 0.0
    %2141 = vmatprep.subr.mxu0 0.0
    %2142 = vmatpush1.xpose.msra.mxu0 0.0
    %2143 = vmatprep.subr.mxu0 0.0
    %2144 = vmatpush1.xpose.msra.mxu0 0.0
    %2145 = vmatprep.subr.mxu0 0.0
    %2146 = vmatpush1.xpose.msra.mxu0 0.0
    %2147 = vmatprep.subr.mxu0 0.0
    %2148 = vmatpush1.xpose.msra.mxu0 0.0
    %2149 = vmatprep.subr.mxu0 0.0
    %2150 = vmatpush1.xpose.msra.mxu0 0.0
    %2151 = vmatprep.subr.mxu0 0.0
    %2152 = vmatpush1.xpose.msra.mxu0 0.0
    %2153 = vmatprep.subr.mxu0 0.0
    %2154 = vmatpush1.xpose.msra.mxu0 0.0
    %2155 = vmatprep.subr.mxu0 0.0
    %2156 = vmatpush1.xpose.msra.mxu0 0.0
    %2157 = vmatprep.subr.mxu0 0.0
    %2158 = vmatpush1.xpose.msra.mxu0 0.0
    %2159 = vmatprep.subr.mxu0 0.0
    %2160 = vmatpush1.xpose.msra.mxu0 0.0
    %2161 = vmatprep.subr.mxu0 0.0
    %2162 = vmatpush1.xpose.msra.mxu0 0.0
    %2163 = vmatprep.subr.mxu0 0.0
    %2164 = vmatpush1.xpose.msra.mxu0 %v2131
    %2165 = vmatprep.subr.mxu0 0.0
    %2166 = vmatpush2.xpose.msra.mxu0 0.0
    %2167 = vmatprep.subr.mxu0 0.0
    %2168 = vmatpush2.xpose.msra.mxu0 0.0
    %2169 = vmatprep.subr.mxu0 0.0
    %2170 = vmatpush2.xpose.msra.mxu0 0.0
    %2171 = vmatprep.subr.mxu0 0.0
    %2172 = vmatpush2.xpose.msra.mxu0 0.0
    %2173 = vmatprep.subr.mxu0 0.0
    %2174 = vmatpush2.xpose.msra.mxu0 0.0
    %2175 = vmatprep.subr.mxu0 0.0
    %2176 = vmatpush2.xpose.msra.mxu0 0.0
    %2177 = vmatprep.subr.mxu0 0.0
    %2178 = vmatpush2.xpose.msra.mxu0 0.0
    %2179 = vmatprep.subr.mxu0 0.0
    %2180 = vmatpush2.xpose.msra.mxu0 0.0
    %2181 = vmatprep.subr.mxu0 0.0
    %2182 = vmatpush2.xpose.msra.mxu0 0.0
    %2183 = vmatprep.subr.mxu0 0.0
    %2184 = vmatpush2.xpose.msra.mxu0 0.0
    %2185 = vmatprep.subr.mxu0 0.0
    %2186 = vmatpush2.xpose.msra.mxu0 0.0
    %2187 = vmatprep.subr.mxu0 0.0
    %2188 = vmatpush2.xpose.msra.mxu0 0.0
    %2189 = vmatprep.subr.mxu0 0.0
    %2190 = vmatpush2.xpose.msra.mxu0 0.0
    %2191 = vmatprep.subr.mxu0 0.0
    %2192 = vmatpush2.xpose.msra.mxu0 0.0
    %2193 = vmatprep.subr.mxu0 0.0
    %2194 = vmatpush2.xpose.msra.mxu0 0.0
    %2195 = vmatprep.subr.mxu0 0.0
    %2196 = vmatpush2.xpose.msra.mxu0 0.0
    %2197 = vmatprep.mubr.f32.mxu0 0.0
    %2198 = vmatmul.mubr.f32.gmra.mxu0 %v2128
    %v2199 = vpop.f32.mrf.mxu0
    %v2200 = vadd.f32 0.0, %v2199
    %v2201 = vpop.f32.mrf.mxu0
    %2202 = vdwg.mxu0
    %v2204 = vsel %vm1822, %v547, 0
    %v2207 = vsel %vm1822, %v1113, 0
    %2209 = vmatprep.subr.mxu0 0.0
    %2210 = vmatpush1.xpose.msra.mxu0 0.0
    %2211 = vmatprep.subr.mxu0 0.0
    %2212 = vmatpush1.xpose.msra.mxu0 0.0
    %2213 = vmatprep.subr.mxu0 0.0
    %2214 = vmatpush1.xpose.msra.mxu0 0.0
    %2215 = vmatprep.subr.mxu0 0.0
    %2216 = vmatpush1.xpose.msra.mxu0 0.0
    %2217 = vmatprep.subr.mxu0 0.0
    %2218 = vmatpush1.xpose.msra.mxu0 0.0
    %2219 = vmatprep.subr.mxu0 0.0
    %2220 = vmatpush1.xpose.msra.mxu0 0.0
    %2221 = vmatprep.subr.mxu0 0.0
    %2222 = vmatpush1.xpose.msra.mxu0 0.0
    %2223 = vmatprep.subr.mxu0 0.0
    %2224 = vmatpush1.xpose.msra.mxu0 0.0
    %2225 = vmatprep.subr.mxu0 0.0
    %2226 = vmatpush1.xpose.msra.mxu0 0.0
    %2227 = vmatprep.subr.mxu0 0.0
    %2228 = vmatpush1.xpose.msra.mxu0 0.0
    %2229 = vmatprep.subr.mxu0 0.0
    %2230 = vmatpush1.xpose.msra.mxu0 0.0
    %2231 = vmatprep.subr.mxu0 0.0
    %2232 = vmatpush1.xpose.msra.mxu0 0.0
    %2233 = vmatprep.subr.mxu0 0.0
    %2234 = vmatpush1.xpose.msra.mxu0 0.0
    %2235 = vmatprep.subr.mxu0 0.0
    %2236 = vmatpush1.xpose.msra.mxu0 0.0
    %2237 = vmatprep.subr.mxu0 0.0
    %2238 = vmatpush1.xpose.msra.mxu0 0.0
    %2239 = vmatprep.subr.mxu0 0.0
    %2240 = vmatpush1.xpose.msra.mxu0 %v2207
    %2241 = vmatprep.subr.mxu0 0.0
    %2242 = vmatpush2.xpose.msra.mxu0 0.0
    %2243 = vmatprep.subr.mxu0 0.0
    %2244 = vmatpush2.xpose.msra.mxu0 0.0
    %2245 = vmatprep.subr.mxu0 0.0
    %2246 = vmatpush2.xpose.msra.mxu0 0.0
    %2247 = vmatprep.subr.mxu0 0.0
    %2248 = vmatpush2.xpose.msra.mxu0 0.0
    %2249 = vmatprep.subr.mxu0 0.0
    %2250 = vmatpush2.xpose.msra.mxu0 0.0
    %2251 = vmatprep.subr.mxu0 0.0
    %2252 = vmatpush2.xpose.msra.mxu0 0.0
    %2253 = vmatprep.subr.mxu0 0.0
    %2254 = vmatpush2.xpose.msra.mxu0 0.0
    %2255 = vmatprep.subr.mxu0 0.0
    %2256 = vmatpush2.xpose.msra.mxu0 0.0
    %2257 = vmatprep.subr.mxu0 0.0
    %2258 = vmatpush2.xpose.msra.mxu0 0.0
    %2259 = vmatprep.subr.mxu0 0.0
    %2260 = vmatpush2.xpose.msra.mxu0 0.0
    %2261 = vmatprep.subr.mxu0 0.0
    %2262 = vmatpush2.xpose.msra.mxu0 0.0
    %2263 = vmatprep.subr.mxu0 0.0
    %2264 = vmatpush2.xpose.msra.mxu0 0.0
    %2265 = vmatprep.subr.mxu0 0.0
    %2266 = vmatpush2.xpose.msra.mxu0 0.0
    %2267 = vmatprep.subr.mxu0 0.0
    %2268 = vmatpush2.xpose.msra.mxu0 0.0
    %2269 = vmatprep.subr.mxu0 0.0
    %2270 = vmatpush2.xpose.msra.mxu0 0.0
    %2271 = vmatprep.subr.mxu0 0.0
    %2272 = vmatpush2.xpose.msra.mxu0 0.0
    %2273 = vmatprep.mubr.f32.mxu0 0.0
    %2274 = vmatmul.mubr.f32.gmra.mxu0 %v2204
    %v2275 = vpop.f32.mrf.mxu0
    %v2276 = vadd.f32 0.0, %v2275
    %v2277 = vpop.f32.mrf.mxu0
    %2278 = vdwg.mxu0
    %v2280 = vsel %vm1822, %v617, 0
    %v2283 = vsel %vm1822, %v1183, 0
    %2285 = vmatprep.subr.mxu0 0.0
    %2286 = vmatpush1.xpose.msra.mxu0 0.0
    %2287 = vmatprep.subr.mxu0 0.0
    %2288 = vmatpush1.xpose.msra.mxu0 0.0
    %2289 = vmatprep.subr.mxu0 0.0
    %2290 = vmatpush1.xpose.msra.mxu0 0.0
    %2291 = vmatprep.subr.mxu0 0.0
    %2292 = vmatpush1.xpose.msra.mxu0 0.0
    %2293 = vmatprep.subr.mxu0 0.0
    %2294 = vmatpush1.xpose.msra.mxu0 0.0
    %2295 = vmatprep.subr.mxu0 0.0
    %2296 = vmatpush1.xpose.msra.mxu0 0.0
    %2297 = vmatprep.subr.mxu0 0.0
    %2298 = vmatpush1.xpose.msra.mxu0 0.0
    %2299 = vmatprep.subr.mxu0 0.0
    %2300 = vmatpush1.xpose.msra.mxu0 0.0
    %2301 = vmatprep.subr.mxu0 0.0
    %2302 = vmatpush1.xpose.msra.mxu0 0.0
    %2303 = vmatprep.subr.mxu0 0.0
    %2304 = vmatpush1.xpose.msra.mxu0 0.0
    %2305 = vmatprep.subr.mxu0 0.0
    %2306 = vmatpush1.xpose.msra.mxu0 0.0
    %2307 = vmatprep.subr.mxu0 0.0
    %2308 = vmatpush1.xpose.msra.mxu0 0.0
    %2309 = vmatprep.subr.mxu0 0.0
    %2310 = vmatpush1.xpose.msra.mxu0 0.0
    %2311 = vmatprep.subr.mxu0 0.0
    %2312 = vmatpush1.xpose.msra.mxu0 0.0
    %2313 = vmatprep.subr.mxu0 0.0
    %2314 = vmatpush1.xpose.msra.mxu0 0.0
    %2315 = vmatprep.subr.mxu0 0.0
    %2316 = vmatpush1.xpose.msra.mxu0 %v2283
    %2317 = vmatprep.subr.mxu0 0.0
    %2318 = vmatpush2.xpose.msra.mxu0 0.0
    %2319 = vmatprep.subr.mxu0 0.0
    %2320 = vmatpush2.xpose.msra.mxu0 0.0
    %2321 = vmatprep.subr.mxu0 0.0
    %2322 = vmatpush2.xpose.msra.mxu0 0.0
    %2323 = vmatprep.subr.mxu0 0.0
    %2324 = vmatpush2.xpose.msra.mxu0 0.0
    %2325 = vmatprep.subr.mxu0 0.0
    %2326 = vmatpush2.xpose.msra.mxu0 0.0
    %2327 = vmatprep.subr.mxu0 0.0
    %2328 = vmatpush2.xpose.msra.mxu0 0.0
    %2329 = vmatprep.subr.mxu0 0.0
    %2330 = vmatpush2.xpose.msra.mxu0 0.0
    %2331 = vmatprep.subr.mxu0 0.0
    %2332 = vmatpush2.xpose.msra.mxu0 0.0
    %2333 = vmatprep.subr.mxu0 0.0
    %2334 = vmatpush2.xpose.msra.mxu0 0.0
    %2335 = vmatprep.subr.mxu0 0.0
    %2336 = vmatpush2.xpose.msra.mxu0 0.0
    %2337 = vmatprep.subr.mxu0 0.0
    %2338 = vmatpush2.xpose.msra.mxu0 0.0
    %2339 = vmatprep.subr.mxu0 0.0
    %2340 = vmatpush2.xpose.msra.mxu0 0.0
    %2341 = vmatprep.subr.mxu0 0.0
    %2342 = vmatpush2.xpose.msra.mxu0 0.0
    %2343 = vmatprep.subr.mxu0 0.0
    %2344 = vmatpush2.xpose.msra.mxu0 0.0
    %2345 = vmatprep.subr.mxu0 0.0
    %2346 = vmatpush2.xpose.msra.mxu0 0.0
    %2347 = vmatprep.subr.mxu0 0.0
    %2348 = vmatpush2.xpose.msra.mxu0 0.0
    %2349 = vmatprep.mubr.f32.mxu0 0.0
    %2350 = vmatmul.mubr.f32.gmra.mxu0 %v2280
    %v2351 = vpop.f32.mrf.mxu0
    %v2352 = vadd.f32 0.0, %v2351
    %v2353 = vpop.f32.mrf.mxu0
    %2354 = vdwg.mxu0
    %v2356 = vsel %vm1822, %v687, 0
    %v2359 = vsel %vm1822, %v1253, 0
    %2361 = vmatprep.subr.mxu0 0.0
    %2362 = vmatpush1.xpose.msra.mxu0 0.0
    %2363 = vmatprep.subr.mxu0 0.0
    %2364 = vmatpush1.xpose.msra.mxu0 0.0
    %2365 = vmatprep.subr.mxu0 0.0
    %2366 = vmatpush1.xpose.msra.mxu0 0.0
    %2367 = vmatprep.subr.mxu0 0.0
    %2368 = vmatpush1.xpose.msra.mxu0 0.0
    %2369 = vmatprep.subr.mxu0 0.0
    %2370 = vmatpush1.xpose.msra.mxu0 0.0
    %2371 = vmatprep.subr.mxu0 0.0
    %2372 = vmatpush1.xpose.msra.mxu0 0.0
    %2373 = vmatprep.subr.mxu0 0.0
    %2374 = vmatpush1.xpose.msra.mxu0 0.0
    %2375 = vmatprep.subr.mxu0 0.0
    %2376 = vmatpush1.xpose.msra.mxu0 0.0
    %2377 = vmatprep.subr.mxu0 0.0
    %2378 = vmatpush1.xpose.msra.mxu0 0.0
    %2379 = vmatprep.subr.mxu0 0.0
    %2380 = vmatpush1.xpose.msra.mxu0 0.0
    %2381 = vmatprep.subr.mxu0 0.0
    %2382 = vmatpush1.xpose.msra.mxu0 0.0
    %2383 = vmatprep.subr.mxu0 0.0
    %2384 = vmatpush1.xpose.msra.mxu0 0.0
    %2385 = vmatprep.subr.mxu0 0.0
    %2386 = vmatpush1.xpose.msra.mxu0 0.0
    %2387 = vmatprep.subr.mxu0 0.0
    %2388 = vmatpush1.xpose.msra.mxu0 0.0
    %2389 = vmatprep.subr.mxu0 0.0
    %2390 = vmatpush1.xpose.msra.mxu0 0.0
    %2391 = vmatprep.subr.mxu0 0.0
    %2392 = vmatpush1.xpose.msra.mxu0 %v2359
    %2393 = vmatprep.subr.mxu0 0.0
    %2394 = vmatpush2.xpose.msra.mxu0 0.0
    %2395 = vmatprep.subr.mxu0 0.0
    %2396 = vmatpush2.xpose.msra.mxu0 0.0
    %2397 = vmatprep.subr.mxu0 0.0
    %2398 = vmatpush2.xpose.msra.mxu0 0.0
    %2399 = vmatprep.subr.mxu0 0.0
    %2400 = vmatpush2.xpose.msra.mxu0 0.0
    %2401 = vmatprep.subr.mxu0 0.0
    %2402 = vmatpush2.xpose.msra.mxu0 0.0
    %2403 = vmatprep.subr.mxu0 0.0
    %2404 = vmatpush2.xpose.msra.mxu0 0.0
    %2405 = vmatprep.subr.mxu0 0.0
    %2406 = vmatpush2.xpose.msra.mxu0 0.0
    %2407 = vmatprep.subr.mxu0 0.0
    %2408 = vmatpush2.xpose.msra.mxu0 0.0
    %2409 = vmatprep.subr.mxu0 0.0
    %2410 = vmatpush2.xpose.msra.mxu0 0.0
    %2411 = vmatprep.subr.mxu0 0.0
    %2412 = vmatpush2.xpose.msra.mxu0 0.0
    %2413 = vmatprep.subr.mxu0 0.0
    %2414 = vmatpush2.xpose.msra.mxu0 0.0
    %2415 = vmatprep.subr.mxu0 0.0
    %2416 = vmatpush2.xpose.msra.mxu0 0.0
    %2417 = vmatprep.subr.mxu0 0.0
    %2418 = vmatpush2.xpose.msra.mxu0 0.0
    %2419 = vmatprep.subr.mxu0 0.0
    %2420 = vmatpush2.xpose.msra.mxu0 0.0
    %2421 = vmatprep.subr.mxu0 0.0
    %2422 = vmatpush2.xpose.msra.mxu0 0.0
    %2423 = vmatprep.subr.mxu0 0.0
    %2424 = vmatpush2.xpose.msra.mxu0 0.0
    %2425 = vmatprep.mubr.f32.mxu0 0.0
    %2426 = vmatmul.mubr.f32.gmra.mxu0 %v2356
    %v2427 = vpop.f32.mrf.mxu0
    %v2428 = vadd.f32 0.0, %v2427
    %v2429 = vpop.f32.mrf.mxu0
    %2430 = vdwg.mxu0
    %v2431 = vmul.f32 %v1896, 0.35355338
    %v2432 = vmul.f32 %v1972, 0.35355338
    %v2433 = vmul.f32 %v2048, 0.35355338
    %v2434 = vmul.f32 %v2124, 0.35355338
    %v2435 = vmul.f32 %v2200, 0.35355338
    %v2436 = vmul.f32 %v2276, 0.35355338
    %v2437 = vmul.f32 %v2352, 0.35355338
    %v2438 = vmul.f32 %v2428, 0.35355338
    %v2439 = vld [vmem:[%s1] sm:$0xff]
    %v2440 = vld [vmem:[%s1 + $0x8] sm:$0xff]
    %vm2441 = vcmp.gt.s32.totalorder %v2439, 0
    %vm2442 = vcmp.gt.s32.totalorder %v2440, 0
    %v2443 = vsel %vm2441, -1e+09, %v2431
    %v2444 = vsel %vm2441, -1e+09, %v2432
    %v2445 = vsel %vm2441, -1e+09, %v2433
    %v2446 = vsel %vm2441, -1e+09, %v2434
    %v2447 = vsel %vm2442, -1e+09, %v2435
    %v2448 = vsel %vm2442, -1e+09, %v2436
    %v2449 = vsel %vm2442, -1e+09, %v2437
    %v2450 = vsel %vm2442, -1e+09, %v2438
    %v2451 = vsel %vm1822, %v2443, -inf
    %2452 = vmax.xlane.f32.xlu0 %v2451
    %v2453 = vpop.xlane.xlu0 %2452
    %v2454 = vsel %vm1822, %v2444, -inf
    %2455 = vmax.xlane.f32.xlu0 %v2454
    %v2456 = vpop.xlane.xlu0 %2455
    %v2457 = vsel %vm1822, %v2445, -inf
    %2458 = vmax.xlane.f32.xlu0 %v2457
    %v2459 = vpop.xlane.xlu0 %2458
    %v2460 = vsel %vm1822, %v2446, -inf
    %2461 = vmax.xlane.f32.xlu0 %v2460
    %v2462 = vpop.xlane.xlu0 %2461
    %v2463 = vsel %vm1822, %v2447, -inf
    %2464 = vmax.xlane.f32.xlu0 %v2463
    %v2465 = vpop.xlane.xlu0 %2464
    %v2466 = vsel %vm1822, %v2448, -inf
    %2467 = vmax.xlane.f32.xlu0 %v2466
    %v2468 = vpop.xlane.xlu0 %2467
    %v2469 = vsel %vm1822, %v2449, -inf
    %2470 = vmax.xlane.f32.xlu0 %v2469
    %v2471 = vpop.xlane.xlu0 %2470
    %v2472 = vsel %vm1822, %v2450, -inf
    %2473 = vmax.xlane.f32.xlu0 %v2472
    %v2474 = vpop.xlane.xlu0 %2473
    %v2475 = vsub.f32 %v2443, %v2453
    %v2476 = vsub.f32 %v2444, %v2456
    %v2477 = vsub.f32 %v2445, %v2459
    %v2478 = vsub.f32 %v2446, %v2462
    %v2479 = vsub.f32 %v2447, %v2465
    %v2480 = vsub.f32 %v2448, %v2468
    %v2481 = vsub.f32 %v2449, %v2471
    %v2482 = vsub.f32 %v2450, %v2474
    %v2483 = vmul.f32 %v2475, 1.442695
    %v2484 = vpow.pop %v2483
    %v2485 = vmul.f32 %v2476, 1.442695
    %v2486 = vpow.pop %v2485
    %v2487 = vmul.f32 %v2477, 1.442695
    %v2488 = vpow.pop %v2487
    %v2489 = vmul.f32 %v2478, 1.442695
    %v2490 = vpow.pop %v2489
    %v2491 = vmul.f32 %v2479, 1.442695
    %v2492 = vpow.pop %v2491
    %v2493 = vmul.f32 %v2480, 1.442695
    %v2494 = vpow.pop %v2493
    %v2495 = vmul.f32 %v2481, 1.442695
    %v2496 = vpow.pop %v2495
    %v2497 = vmul.f32 %v2482, 1.442695
    %v2498 = vpow.pop %v2497
    %v2499 = vsel %vm1822, %v2484, 0.0
    %2500 = vadd.xlane.f32.xlu0 %v2499
    %v2501 = vpop.xlane.xlu0 %2500
    %v2502 = vsel %vm1822, %v2486, 0.0
    %2503 = vadd.xlane.f32.xlu0 %v2502
    %v2504 = vpop.xlane.xlu0 %2503
    %v2505 = vsel %vm1822, %v2488, 0.0
    %2506 = vadd.xlane.f32.xlu0 %v2505
    %v2507 = vpop.xlane.xlu0 %2506
    %v2508 = vsel %vm1822, %v2490, 0.0
    %2509 = vadd.xlane.f32.xlu0 %v2508
    %v2510 = vpop.xlane.xlu0 %2509
    %v2511 = vsel %vm1822, %v2492, 0.0
    %2512 = vadd.xlane.f32.xlu0 %v2511
    %v2513 = vpop.xlane.xlu0 %2512
    %v2514 = vsel %vm1822, %v2494, 0.0
    %2515 = vadd.xlane.f32.xlu0 %v2514
    %v2516 = vpop.xlane.xlu0 %2515
    %v2517 = vsel %vm1822, %v2496, 0.0
    %2518 = vadd.xlane.f32.xlu0 %v2517
    %v2519 = vpop.xlane.xlu0 %2518
    %v2520 = vsel %vm1822, %v2498, 0.0
    %2521 = vadd.xlane.f32.xlu0 %v2520
    %v2522 = vpop.xlane.xlu0 %2521
    %v2523 = vrcp.pop %v2501
    %v2524 = vrcp.pop %v2504
    %v2525 = vrcp.pop %v2507
    %v2526 = vrcp.pop %v2510
    %v2527 = vrcp.pop %v2513
    %v2528 = vrcp.pop %v2516
    %v2529 = vrcp.pop %v2519
    %v2530 = vrcp.pop %v2522
    %v2531 = vmul.f32 %v2501, %v2523
    %v2532 = vmul.f32 %v2504, %v2524
    %v2533 = vmul.f32 %v2507, %v2525
    %v2534 = vmul.f32 %v2510, %v2526
    %v2535 = vmul.f32 %v2513, %v2527
    %v2536 = vmul.f32 %v2516, %v2528
    %v2537 = vmul.f32 %v2519, %v2529
    %v2538 = vmul.f32 %v2522, %v2530
    %v2539 = vsub.f32 2.0, %v2531
    %v2540 = vsub.f32 2.0, %v2532
    %v2541 = vsub.f32 2.0, %v2533
    %v2542 = vsub.f32 2.0, %v2534
    %v2543 = vsub.f32 2.0, %v2535
    %v2544 = vsub.f32 2.0, %v2536
    %v2545 = vsub.f32 2.0, %v2537
    %v2546 = vsub.f32 2.0, %v2538
    %v2547 = vmul.f32 %v2523, %v2539
    %v2548 = vmul.f32 %v2524, %v2540
    %v2549 = vmul.f32 %v2525, %v2541
    %v2550 = vmul.f32 %v2526, %v2542
    %v2551 = vmul.f32 %v2527, %v2543
    %v2552 = vmul.f32 %v2528, %v2544
    %v2553 = vmul.f32 %v2529, %v2545
    %v2554 = vmul.f32 %v2530, %v2546
    %v2555 = vmul.f32 %v2484, %v2547
    %v2556 = vmul.f32 %v2486, %v2548
    %v2557 = vmul.f32 %v2488, %v2549
    %v2558 = vmul.f32 %v2490, %v2550
    %v2559 = vmul.f32 %v2492, %v2551
    %v2560 = vmul.f32 %v2494, %v2552
    %v2561 = vmul.f32 %v2496, %v2553
    %v2562 = vmul.f32 %v2498, %v2554
    %2563 = vst.msk [vmem:[#allocation4] sm:$0xff] %vm1822, %v2555
    %2564 = vst.msk [vmem:[#allocation4 + $0x8] sm:$0xff] %vm1822, %v2556
    %2565 = vst.msk [vmem:[#allocation4 + $0x10] sm:$0xff] %vm1822, %v2557
    %2566 = vst.msk [vmem:[#allocation4 + $0x18] sm:$0xff] %vm1822, %v2558
    %2567 = vst.msk [vmem:[#allocation4 + $0x20] sm:$0xff] %vm1822, %v2559
    %2568 = vst.msk [vmem:[#allocation4 + $0x28] sm:$0xff] %vm1822, %v2560
    %2569 = vst.msk [vmem:[#allocation4 + $0x30] sm:$0xff] %vm1822, %v2561
    %2570 = vst.msk [vmem:[#allocation4 + $0x38] sm:$0xff] %vm1822, %v2562
    %v2572 = vsel %vm1822, %v2555, 0
    %2574 = vmatprep.subr.mxu0 0.0
    %2575 = vmatpush1.msra.mxu0 0.0
    %2576 = vmatprep.subr.mxu0 0.0
    %2577 = vmatpush1.msra.mxu0 0.0
    %2578 = vmatprep.subr.mxu0 0.0
    %2579 = vmatpush1.msra.mxu0 0.0
    %2580 = vmatprep.subr.mxu0 0.0
    %2581 = vmatpush1.msra.mxu0 0.0
    %2582 = vmatprep.subr.mxu0 0.0
    %2583 = vmatpush1.msra.mxu0 0.0
    %2584 = vmatprep.subr.mxu0 0.0
    %2585 = vmatpush1.msra.mxu0 0.0
    %2586 = vmatprep.subr.mxu0 0.0
    %2587 = vmatpush1.msra.mxu0 0.0
    %2588 = vmatprep.subr.mxu0 0.0
    %2589 = vmatpush1.msra.mxu0 0.0
    %2590 = vmatprep.subr.mxu0 0.0
    %2591 = vmatpush1.msra.mxu0 0.0
    %2592 = vmatprep.subr.mxu0 0.0
    %2593 = vmatpush1.msra.mxu0 0.0
    %2594 = vmatprep.subr.mxu0 0.0
    %2595 = vmatpush1.msra.mxu0 0.0
    %2596 = vmatprep.subr.mxu0 0.0
    %2597 = vmatpush1.msra.mxu0 0.0
    %2598 = vmatprep.subr.mxu0 0.0
    %2599 = vmatpush1.msra.mxu0 0.0
    %2600 = vmatprep.subr.mxu0 0.0
    %2601 = vmatpush1.msra.mxu0 0.0
    %2602 = vmatprep.subr.mxu0 0.0
    %2603 = vmatpush1.msra.mxu0 0.0
    %2604 = vmatprep.subr.mxu0 0.0
    %2605 = vmatpush1.msra.mxu0 %v1326
    %2606 = vmatprep.subr.mxu0 0.0
    %2607 = vmatpush2.msra.mxu0 0.0
    %2608 = vmatprep.subr.mxu0 0.0
    %2609 = vmatpush2.msra.mxu0 0.0
    %2610 = vmatprep.subr.mxu0 0.0
    %2611 = vmatpush2.msra.mxu0 0.0
    %2612 = vmatprep.subr.mxu0 0.0
    %2613 = vmatpush2.msra.mxu0 0.0
    %2614 = vmatprep.subr.mxu0 0.0
    %2615 = vmatpush2.msra.mxu0 0.0
    %2616 = vmatprep.subr.mxu0 0.0
    %2617 = vmatpush2.msra.mxu0 0.0
    %2618 = vmatprep.subr.mxu0 0.0
    %2619 = vmatpush2.msra.mxu0 0.0
    %2620 = vmatprep.subr.mxu0 0.0
    %2621 = vmatpush2.msra.mxu0 0.0
    %2622 = vmatprep.subr.mxu0 0.0
    %2623 = vmatpush2.msra.mxu0 0.0
    %2624 = vmatprep.subr.mxu0 0.0
    %2625 = vmatpush2.msra.mxu0 0.0
    %2626 = vmatprep.subr.mxu0 0.0
    %2627 = vmatpush2.msra.mxu0 0.0
    %2628 = vmatprep.subr.mxu0 0.0
    %2629 = vmatpush2.msra.mxu0 0.0
    %2630 = vmatprep.subr.mxu0 0.0
    %2631 = vmatpush2.msra.mxu0 0.0
    %2632 = vmatprep.subr.mxu0 0.0
    %2633 = vmatpush2.msra.mxu0 0.0
    %2634 = vmatprep.subr.mxu0 0.0
    %2635 = vmatpush2.msra.mxu0 0.0
    %2636 = vmatprep.subr.mxu0 0.0
    %2637 = vmatpush2.msra.mxu0 0.0
    %2638 = vmatprep.mubr.f32.mxu0 0.0
    %2639 = vmatmul.mubr.f32.gmra.mxu0 %v2572
    %v2640 = vpop.f32.mrf.mxu0
    %v2641 = vadd.f32 0.0, %v2640
    %v2642 = vpop.f32.mrf.mxu0
    %2643 = vdwg.mxu0
    %v2645 = vsel %vm1822, %v2556, 0
    %2647 = vmatprep.subr.mxu0 0.0
    %2648 = vmatpush1.msra.mxu0 0.0
    %2649 = vmatprep.subr.mxu0 0.0
    %2650 = vmatpush1.msra.mxu0 0.0
    %2651 = vmatprep.subr.mxu0 0.0
    %2652 = vmatpush1.msra.mxu0 0.0
    %2653 = vmatprep.subr.mxu0 0.0
    %2654 = vmatpush1.msra.mxu0 0.0
    %2655 = vmatprep.subr.mxu0 0.0
    %2656 = vmatpush1.msra.mxu0 0.0
    %2657 = vmatprep.subr.mxu0 0.0
    %2658 = vmatpush1.msra.mxu0 0.0
    %2659 = vmatprep.subr.mxu0 0.0
    %2660 = vmatpush1.msra.mxu0 0.0
    %2661 = vmatprep.subr.mxu0 0.0
    %2662 = vmatpush1.msra.mxu0 0.0
    %2663 = vmatprep.subr.mxu0 0.0
    %2664 = vmatpush1.msra.mxu0 0.0
    %2665 = vmatprep.subr.mxu0 0.0
    %2666 = vmatpush1.msra.mxu0 0.0
    %2667 = vmatprep.subr.mxu0 0.0
    %2668 = vmatpush1.msra.mxu0 0.0
    %2669 = vmatprep.subr.mxu0 0.0
    %2670 = vmatpush1.msra.mxu0 0.0
    %2671 = vmatprep.subr.mxu0 0.0
    %2672 = vmatpush1.msra.mxu0 0.0
    %2673 = vmatprep.subr.mxu0 0.0
    %2674 = vmatpush1.msra.mxu0 0.0
    %2675 = vmatprep.subr.mxu0 0.0
    %2676 = vmatpush1.msra.mxu0 0.0
    %2677 = vmatprep.subr.mxu0 0.0
    %2678 = vmatpush1.msra.mxu0 %v1396
    %2679 = vmatprep.subr.mxu0 0.0
    %2680 = vmatpush2.msra.mxu0 0.0
    %2681 = vmatprep.subr.mxu0 0.0
    %2682 = vmatpush2.msra.mxu0 0.0
    %2683 = vmatprep.subr.mxu0 0.0
    %2684 = vmatpush2.msra.mxu0 0.0
    %2685 = vmatprep.subr.mxu0 0.0
    %2686 = vmatpush2.msra.mxu0 0.0
    %2687 = vmatprep.subr.mxu0 0.0
    %2688 = vmatpush2.msra.mxu0 0.0
    %2689 = vmatprep.subr.mxu0 0.0
    %2690 = vmatpush2.msra.mxu0 0.0
    %2691 = vmatprep.subr.mxu0 0.0
    %2692 = vmatpush2.msra.mxu0 0.0
    %2693 = vmatprep.subr.mxu0 0.0
    %2694 = vmatpush2.msra.mxu0 0.0
    %2695 = vmatprep.subr.mxu0 0.0
    %2696 = vmatpush2.msra.mxu0 0.0
    %2697 = vmatprep.subr.mxu0 0.0
    %2698 = vmatpush2.msra.mxu0 0.0
    %2699 = vmatprep.subr.mxu0 0.0
    %2700 = vmatpush2.msra.mxu0 0.0
    %2701 = vmatprep.subr.mxu0 0.0
    %2702 = vmatpush2.msra.mxu0 0.0
    %2703 = vmatprep.subr.mxu0 0.0
    %2704 = vmatpush2.msra.mxu0 0.0
    %2705 = vmatprep.subr.mxu0 0.0
    %2706 = vmatpush2.msra.mxu0 0.0
    %2707 = vmatprep.subr.mxu0 0.0
    %2708 = vmatpush2.msra.mxu0 0.0
    %2709 = vmatprep.subr.mxu0 0.0
    %2710 = vmatpush2.msra.mxu0 0.0
    %2711 = vmatprep.mubr.f32.mxu0 0.0
    %2712 = vmatmul.mubr.f32.gmra.mxu0 %v2645
    %v2713 = vpop.f32.mrf.mxu0
    %v2714 = vadd.f32 0.0, %v2713
    %v2715 = vpop.f32.mrf.mxu0
    %2716 = vdwg.mxu0
    %v2718 = vsel %vm1822, %v2557, 0
    %2720 = vmatprep.subr.mxu0 0.0
    %2721 = vmatpush1.msra.mxu0 0.0
    %2722 = vmatprep.subr.mxu0 0.0
    %2723 = vmatpush1.msra.mxu0 0.0
    %2724 = vmatprep.subr.mxu0 0.0
    %2725 = vmatpush1.msra.mxu0 0.0
    %2726 = vmatprep.subr.mxu0 0.0
    %2727 = vmatpush1.msra.mxu0 0.0
    %2728 = vmatprep.subr.mxu0 0.0
    %2729 = vmatpush1.msra.mxu0 0.0
    %2730 = vmatprep.subr.mxu0 0.0
    %2731 = vmatpush1.msra.mxu0 0.0
    %2732 = vmatprep.subr.mxu0 0.0
    %2733 = vmatpush1.msra.mxu0 0.0
    %2734 = vmatprep.subr.mxu0 0.0
    %2735 = vmatpush1.msra.mxu0 0.0
    %2736 = vmatprep.subr.mxu0 0.0
    %2737 = vmatpush1.msra.mxu0 0.0
    %2738 = vmatprep.subr.mxu0 0.0
    %2739 = vmatpush1.msra.mxu0 0.0
    %2740 = vmatprep.subr.mxu0 0.0
    %2741 = vmatpush1.msra.mxu0 0.0
    %2742 = vmatprep.subr.mxu0 0.0
    %2743 = vmatpush1.msra.mxu0 0.0
    %2744 = vmatprep.subr.mxu0 0.0
    %2745 = vmatpush1.msra.mxu0 0.0
    %2746 = vmatprep.subr.mxu0 0.0
    %2747 = vmatpush1.msra.mxu0 0.0
    %2748 = vmatprep.subr.mxu0 0.0
    %2749 = vmatpush1.msra.mxu0 0.0
    %2750 = vmatprep.subr.mxu0 0.0
    %2751 = vmatpush1.msra.mxu0 %v1466
    %2752 = vmatprep.subr.mxu0 0.0
    %2753 = vmatpush2.msra.mxu0 0.0
    %2754 = vmatprep.subr.mxu0 0.0
    %2755 = vmatpush2.msra.mxu0 0.0
    %2756 = vmatprep.subr.mxu0 0.0
    %2757 = vmatpush2.msra.mxu0 0.0
    %2758 = vmatprep.subr.mxu0 0.0
    %2759 = vmatpush2.msra.mxu0 0.0
    %2760 = vmatprep.subr.mxu0 0.0
    %2761 = vmatpush2.msra.mxu0 0.0
    %2762 = vmatprep.subr.mxu0 0.0
    %2763 = vmatpush2.msra.mxu0 0.0
    %2764 = vmatprep.subr.mxu0 0.0
    %2765 = vmatpush2.msra.mxu0 0.0
    %2766 = vmatprep.subr.mxu0 0.0
    %2767 = vmatpush2.msra.mxu0 0.0
    %2768 = vmatprep.subr.mxu0 0.0
    %2769 = vmatpush2.msra.mxu0 0.0
    %2770 = vmatprep.subr.mxu0 0.0
    %2771 = vmatpush2.msra.mxu0 0.0
    %2772 = vmatprep.subr.mxu0 0.0
    %2773 = vmatpush2.msra.mxu0 0.0
    %2774 = vmatprep.subr.mxu0 0.0
    %2775 = vmatpush2.msra.mxu0 0.0
    %2776 = vmatprep.subr.mxu0 0.0
    %2777 = vmatpush2.msra.mxu0 0.0
    %2778 = vmatprep.subr.mxu0 0.0
    %2779 = vmatpush2.msra.mxu0 0.0
    %2780 = vmatprep.subr.mxu0 0.0
    %2781 = vmatpush2.msra.mxu0 0.0
    %2782 = vmatprep.subr.mxu0 0.0
    %2783 = vmatpush2.msra.mxu0 0.0
    %2784 = vmatprep.mubr.f32.mxu0 0.0
    %2785 = vmatmul.mubr.f32.gmra.mxu0 %v2718
    %v2786 = vpop.f32.mrf.mxu0
    %v2787 = vadd.f32 0.0, %v2786
    %v2788 = vpop.f32.mrf.mxu0
    %2789 = vdwg.mxu0
    %v2791 = vsel %vm1822, %v2558, 0
    %2793 = vmatprep.subr.mxu0 0.0
    %2794 = vmatpush1.msra.mxu0 0.0
    %2795 = vmatprep.subr.mxu0 0.0
    %2796 = vmatpush1.msra.mxu0 0.0
    %2797 = vmatprep.subr.mxu0 0.0
    %2798 = vmatpush1.msra.mxu0 0.0
    %2799 = vmatprep.subr.mxu0 0.0
    %2800 = vmatpush1.msra.mxu0 0.0
    %2801 = vmatprep.subr.mxu0 0.0
    %2802 = vmatpush1.msra.mxu0 0.0
    %2803 = vmatprep.subr.mxu0 0.0
    %2804 = vmatpush1.msra.mxu0 0.0
    %2805 = vmatprep.subr.mxu0 0.0
    %2806 = vmatpush1.msra.mxu0 0.0
    %2807 = vmatprep.subr.mxu0 0.0
    %2808 = vmatpush1.msra.mxu0 0.0
    %2809 = vmatprep.subr.mxu0 0.0
    %2810 = vmatpush1.msra.mxu0 0.0
    %2811 = vmatprep.subr.mxu0 0.0
    %2812 = vmatpush1.msra.mxu0 0.0
    %2813 = vmatprep.subr.mxu0 0.0
    %2814 = vmatpush1.msra.mxu0 0.0
    %2815 = vmatprep.subr.mxu0 0.0
    %2816 = vmatpush1.msra.mxu0 0.0
    %2817 = vmatprep.subr.mxu0 0.0
    %2818 = vmatpush1.msra.mxu0 0.0
    %2819 = vmatprep.subr.mxu0 0.0
    %2820 = vmatpush1.msra.mxu0 0.0
    %2821 = vmatprep.subr.mxu0 0.0
    %2822 = vmatpush1.msra.mxu0 0.0
    %2823 = vmatprep.subr.mxu0 0.0
    %2824 = vmatpush1.msra.mxu0 %v1536
    %2825 = vmatprep.subr.mxu0 0.0
    %2826 = vmatpush2.msra.mxu0 0.0
    %2827 = vmatprep.subr.mxu0 0.0
    %2828 = vmatpush2.msra.mxu0 0.0
    %2829 = vmatprep.subr.mxu0 0.0
    %2830 = vmatpush2.msra.mxu0 0.0
    %2831 = vmatprep.subr.mxu0 0.0
    %2832 = vmatpush2.msra.mxu0 0.0
    %2833 = vmatprep.subr.mxu0 0.0
    %2834 = vmatpush2.msra.mxu0 0.0
    %2835 = vmatprep.subr.mxu0 0.0
    %2836 = vmatpush2.msra.mxu0 0.0
    %2837 = vmatprep.subr.mxu0 0.0
    %2838 = vmatpush2.msra.mxu0 0.0
    %2839 = vmatprep.subr.mxu0 0.0
    %2840 = vmatpush2.msra.mxu0 0.0
    %2841 = vmatprep.subr.mxu0 0.0
    %2842 = vmatpush2.msra.mxu0 0.0
    %2843 = vmatprep.subr.mxu0 0.0
    %2844 = vmatpush2.msra.mxu0 0.0
    %2845 = vmatprep.subr.mxu0 0.0
    %2846 = vmatpush2.msra.mxu0 0.0
    %2847 = vmatprep.subr.mxu0 0.0
    %2848 = vmatpush2.msra.mxu0 0.0
    %2849 = vmatprep.subr.mxu0 0.0
    %2850 = vmatpush2.msra.mxu0 0.0
    %2851 = vmatprep.subr.mxu0 0.0
    %2852 = vmatpush2.msra.mxu0 0.0
    %2853 = vmatprep.subr.mxu0 0.0
    %2854 = vmatpush2.msra.mxu0 0.0
    %2855 = vmatprep.subr.mxu0 0.0
    %2856 = vmatpush2.msra.mxu0 0.0
    %2857 = vmatprep.mubr.f32.mxu0 0.0
    %2858 = vmatmul.mubr.f32.gmra.mxu0 %v2791
    %v2859 = vpop.f32.mrf.mxu0
    %v2860 = vadd.f32 0.0, %v2859
    %v2861 = vpop.f32.mrf.mxu0
    %2862 = vdwg.mxu0
    %v2864 = vsel %vm1822, %v2559, 0
    %2866 = vmatprep.subr.mxu0 0.0
    %2867 = vmatpush1.msra.mxu0 0.0
    %2868 = vmatprep.subr.mxu0 0.0
    %2869 = vmatpush1.msra.mxu0 0.0
    %2870 = vmatprep.subr.mxu0 0.0
    %2871 = vmatpush1.msra.mxu0 0.0
    %2872 = vmatprep.subr.mxu0 0.0
    %2873 = vmatpush1.msra.mxu0 0.0
    %2874 = vmatprep.subr.mxu0 0.0
    %2875 = vmatpush1.msra.mxu0 0.0
    %2876 = vmatprep.subr.mxu0 0.0
    %2877 = vmatpush1.msra.mxu0 0.0
    %2878 = vmatprep.subr.mxu0 0.0
    %2879 = vmatpush1.msra.mxu0 0.0
    %2880 = vmatprep.subr.mxu0 0.0
    %2881 = vmatpush1.msra.mxu0 0.0
    %2882 = vmatprep.subr.mxu0 0.0
    %2883 = vmatpush1.msra.mxu0 0.0
    %2884 = vmatprep.subr.mxu0 0.0
    %2885 = vmatpush1.msra.mxu0 0.0
    %2886 = vmatprep.subr.mxu0 0.0
    %2887 = vmatpush1.msra.mxu0 0.0
    %2888 = vmatprep.subr.mxu0 0.0
    %2889 = vmatpush1.msra.mxu0 0.0
    %2890 = vmatprep.subr.mxu0 0.0
    %2891 = vmatpush1.msra.mxu0 0.0
    %2892 = vmatprep.subr.mxu0 0.0
    %2893 = vmatpush1.msra.mxu0 0.0
    %2894 = vmatprep.subr.mxu0 0.0
    %2895 = vmatpush1.msra.mxu0 0.0
    %2896 = vmatprep.subr.mxu0 0.0
    %2897 = vmatpush1.msra.mxu0 %v1609
    %2898 = vmatprep.subr.mxu0 0.0
    %2899 = vmatpush2.msra.mxu0 0.0
    %2900 = vmatprep.subr.mxu0 0.0
    %2901 = vmatpush2.msra.mxu0 0.0
    %2902 = vmatprep.subr.mxu0 0.0
    %2903 = vmatpush2.msra.mxu0 0.0
    %2904 = vmatprep.subr.mxu0 0.0
    %2905 = vmatpush2.msra.mxu0 0.0
    %2906 = vmatprep.subr.mxu0 0.0
    %2907 = vmatpush2.msra.mxu0 0.0
    %2908 = vmatprep.subr.mxu0 0.0
    %2909 = vmatpush2.msra.mxu0 0.0
    %2910 = vmatprep.subr.mxu0 0.0
    %2911 = vmatpush2.msra.mxu0 0.0
    %2912 = vmatprep.subr.mxu0 0.0
    %2913 = vmatpush2.msra.mxu0 0.0
    %2914 = vmatprep.subr.mxu0 0.0
    %2915 = vmatpush2.msra.mxu0 0.0
    %2916 = vmatprep.subr.mxu0 0.0
    %2917 = vmatpush2.msra.mxu0 0.0
    %2918 = vmatprep.subr.mxu0 0.0
    %2919 = vmatpush2.msra.mxu0 0.0
    %2920 = vmatprep.subr.mxu0 0.0
    %2921 = vmatpush2.msra.mxu0 0.0
    %2922 = vmatprep.subr.mxu0 0.0
    %2923 = vmatpush2.msra.mxu0 0.0
    %2924 = vmatprep.subr.mxu0 0.0
    %2925 = vmatpush2.msra.mxu0 0.0
    %2926 = vmatprep.subr.mxu0 0.0
    %2927 = vmatpush2.msra.mxu0 0.0
    %2928 = vmatprep.subr.mxu0 0.0
    %2929 = vmatpush2.msra.mxu0 0.0
    %2930 = vmatprep.mubr.f32.mxu0 0.0
    %2931 = vmatmul.mubr.f32.gmra.mxu0 %v2864
    %v2932 = vpop.f32.mrf.mxu0
    %v2933 = vadd.f32 0.0, %v2932
    %v2934 = vpop.f32.mrf.mxu0
    %2935 = vdwg.mxu0
    %v2937 = vsel %vm1822, %v2560, 0
    %2939 = vmatprep.subr.mxu0 0.0
    %2940 = vmatpush1.msra.mxu0 0.0
    %2941 = vmatprep.subr.mxu0 0.0
    %2942 = vmatpush1.msra.mxu0 0.0
    %2943 = vmatprep.subr.mxu0 0.0
    %2944 = vmatpush1.msra.mxu0 0.0
    %2945 = vmatprep.subr.mxu0 0.0
    %2946 = vmatpush1.msra.mxu0 0.0
    %2947 = vmatprep.subr.mxu0 0.0
    %2948 = vmatpush1.msra.mxu0 0.0
    %2949 = vmatprep.subr.mxu0 0.0
    %2950 = vmatpush1.msra.mxu0 0.0
    %2951 = vmatprep.subr.mxu0 0.0
    %2952 = vmatpush1.msra.mxu0 0.0
    %2953 = vmatprep.subr.mxu0 0.0
    %2954 = vmatpush1.msra.mxu0 0.0
    %2955 = vmatprep.subr.mxu0 0.0
    %2956 = vmatpush1.msra.mxu0 0.0
    %2957 = vmatprep.subr.mxu0 0.0
    %2958 = vmatpush1.msra.mxu0 0.0
    %2959 = vmatprep.subr.mxu0 0.0
    %2960 = vmatpush1.msra.mxu0 0.0
    %2961 = vmatprep.subr.mxu0 0.0
    %2962 = vmatpush1.msra.mxu0 0.0
    %2963 = vmatprep.subr.mxu0 0.0
    %2964 = vmatpush1.msra.mxu0 0.0
    %2965 = vmatprep.subr.mxu0 0.0
    %2966 = vmatpush1.msra.mxu0 0.0
    %2967 = vmatprep.subr.mxu0 0.0
    %2968 = vmatpush1.msra.mxu0 0.0
    %2969 = vmatprep.subr.mxu0 0.0
    %2970 = vmatpush1.msra.mxu0 %v1679
    %2971 = vmatprep.subr.mxu0 0.0
    %2972 = vmatpush2.msra.mxu0 0.0
    %2973 = vmatprep.subr.mxu0 0.0
    %2974 = vmatpush2.msra.mxu0 0.0
    %2975 = vmatprep.subr.mxu0 0.0
    %2976 = vmatpush2.msra.mxu0 0.0
    %2977 = vmatprep.subr.mxu0 0.0
    %2978 = vmatpush2.msra.mxu0 0.0
    %2979 = vmatprep.subr.mxu0 0.0
    %2980 = vmatpush2.msra.mxu0 0.0
    %2981 = vmatprep.subr.mxu0 0.0
    %2982 = vmatpush2.msra.mxu0 0.0
    %2983 = vmatprep.subr.mxu0 0.0
    %2984 = vmatpush2.msra.mxu0 0.0
    %2985 = vmatprep.subr.mxu0 0.0
    %2986 = vmatpush2.msra.mxu0 0.0
    %2987 = vmatprep.subr.mxu0 0.0
    %2988 = vmatpush2.msra.mxu0 0.0
    %2989 = vmatprep.subr.mxu0 0.0
    %2990 = vmatpush2.msra.mxu0 0.0
    %2991 = vmatprep.subr.mxu0 0.0
    %2992 = vmatpush2.msra.mxu0 0.0
    %2993 = vmatprep.subr.mxu0 0.0
    %2994 = vmatpush2.msra.mxu0 0.0
    %2995 = vmatprep.subr.mxu0 0.0
    %2996 = vmatpush2.msra.mxu0 0.0
    %2997 = vmatprep.subr.mxu0 0.0
    %2998 = vmatpush2.msra.mxu0 0.0
    %2999 = vmatprep.subr.mxu0 0.0
    %3000 = vmatpush2.msra.mxu0 0.0
    %3001 = vmatprep.subr.mxu0 0.0
    %3002 = vmatpush2.msra.mxu0 0.0
    %3003 = vmatprep.mubr.f32.mxu0 0.0
    %3004 = vmatmul.mubr.f32.gmra.mxu0 %v2937
    %v3005 = vpop.f32.mrf.mxu0
    %v3006 = vadd.f32 0.0, %v3005
    %v3007 = vpop.f32.mrf.mxu0
    %3008 = vdwg.mxu0
    %v3010 = vsel %vm1822, %v2561, 0
    %3012 = vmatprep.subr.mxu0 0.0
    %3013 = vmatpush1.msra.mxu0 0.0
    %3014 = vmatprep.subr.mxu0 0.0
    %3015 = vmatpush1.msra.mxu0 0.0
    %3016 = vmatprep.subr.mxu0 0.0
    %3017 = vmatpush1.msra.mxu0 0.0
    %3018 = vmatprep.subr.mxu0 0.0
    %3019 = vmatpush1.msra.mxu0 0.0
    %3020 = vmatprep.subr.mxu0 0.0
    %3021 = vmatpush1.msra.mxu0 0.0
    %3022 = vmatprep.subr.mxu0 0.0
    %3023 = vmatpush1.msra.mxu0 0.0
    %3024 = vmatprep.subr.mxu0 0.0
    %3025 = vmatpush1.msra.mxu0 0.0
    %3026 = vmatprep.subr.mxu0 0.0
    %3027 = vmatpush1.msra.mxu0 0.0
    %3028 = vmatprep.subr.mxu0 0.0
    %3029 = vmatpush1.msra.mxu0 0.0
    %3030 = vmatprep.subr.mxu0 0.0
    %3031 = vmatpush1.msra.mxu0 0.0
    %3032 = vmatprep.subr.mxu0 0.0
    %3033 = vmatpush1.msra.mxu0 0.0
    %3034 = vmatprep.subr.mxu0 0.0
    %3035 = vmatpush1.msra.mxu0 0.0
    %3036 = vmatprep.subr.mxu0 0.0
    %3037 = vmatpush1.msra.mxu0 0.0
    %3038 = vmatprep.subr.mxu0 0.0
    %3039 = vmatpush1.msra.mxu0 0.0
    %3040 = vmatprep.subr.mxu0 0.0
    %3041 = vmatpush1.msra.mxu0 0.0
    %3042 = vmatprep.subr.mxu0 0.0
    %3043 = vmatpush1.msra.mxu0 %v1749
    %3044 = vmatprep.subr.mxu0 0.0
    %3045 = vmatpush2.msra.mxu0 0.0
    %3046 = vmatprep.subr.mxu0 0.0
    %3047 = vmatpush2.msra.mxu0 0.0
    %3048 = vmatprep.subr.mxu0 0.0
    %3049 = vmatpush2.msra.mxu0 0.0
    %3050 = vmatprep.subr.mxu0 0.0
    %3051 = vmatpush2.msra.mxu0 0.0
    %3052 = vmatprep.subr.mxu0 0.0
    %3053 = vmatpush2.msra.mxu0 0.0
    %3054 = vmatprep.subr.mxu0 0.0
    %3055 = vmatpush2.msra.mxu0 0.0
    %3056 = vmatprep.subr.mxu0 0.0
    %3057 = vmatpush2.msra.mxu0 0.0
    %3058 = vmatprep.subr.mxu0 0.0
    %3059 = vmatpush2.msra.mxu0 0.0
    %3060 = vmatprep.subr.mxu0 0.0
    %3061 = vmatpush2.msra.mxu0 0.0
    %3062 = vmatprep.subr.mxu0 0.0
    %3063 = vmatpush2.msra.mxu0 0.0
    %3064 = vmatprep.subr.mxu0 0.0
    %3065 = vmatpush2.msra.mxu0 0.0
    %3066 = vmatprep.subr.mxu0 0.0
    %3067 = vmatpush2.msra.mxu0 0.0
    %3068 = vmatprep.subr.mxu0 0.0
    %3069 = vmatpush2.msra.mxu0 0.0
    %3070 = vmatprep.subr.mxu0 0.0
    %3071 = vmatpush2.msra.mxu0 0.0
    %3072 = vmatprep.subr.mxu0 0.0
    %3073 = vmatpush2.msra.mxu0 0.0
    %3074 = vmatprep.subr.mxu0 0.0
    %3075 = vmatpush2.msra.mxu0 0.0
    %3076 = vmatprep.mubr.f32.mxu0 0.0
    %3077 = vmatmul.mubr.f32.gmra.mxu0 %v3010
    %v3078 = vpop.f32.mrf.mxu0
    %v3079 = vadd.f32 0.0, %v3078
    %v3080 = vpop.f32.mrf.mxu0
    %3081 = vdwg.mxu0
    %v3083 = vsel %vm1822, %v2562, 0
    %3085 = vmatprep.subr.mxu0 0.0
    %3086 = vmatpush1.msra.mxu0 0.0
    %3087 = vmatprep.subr.mxu0 0.0
    %3088 = vmatpush1.msra.mxu0 0.0
    %3089 = vmatprep.subr.mxu0 0.0
    %3090 = vmatpush1.msra.mxu0 0.0
    %3091 = vmatprep.subr.mxu0 0.0
    %3092 = vmatpush1.msra.mxu0 0.0
    %3093 = vmatprep.subr.mxu0 0.0
    %3094 = vmatpush1.msra.mxu0 0.0
    %3095 = vmatprep.subr.mxu0 0.0
    %3096 = vmatpush1.msra.mxu0 0.0
    %3097 = vmatprep.subr.mxu0 0.0
    %3098 = vmatpush1.msra.mxu0 0.0
    %3099 = vmatprep.subr.mxu0 0.0
    %3100 = vmatpush1.msra.mxu0 0.0
    %3101 = vmatprep.subr.mxu0 0.0
    %3102 = vmatpush1.msra.mxu0 0.0
    %3103 = vmatprep.subr.mxu0 0.0
    %3104 = vmatpush1.msra.mxu0 0.0
    %3105 = vmatprep.subr.mxu0 0.0
    %3106 = vmatpush1.msra.mxu0 0.0
    %3107 = vmatprep.subr.mxu0 0.0
    %3108 = vmatpush1.msra.mxu0 0.0
    %3109 = vmatprep.subr.mxu0 0.0
    %3110 = vmatpush1.msra.mxu0 0.0
    %3111 = vmatprep.subr.mxu0 0.0
    %3112 = vmatpush1.msra.mxu0 0.0
    %3113 = vmatprep.subr.mxu0 0.0
    %3114 = vmatpush1.msra.mxu0 0.0
    %3115 = vmatprep.subr.mxu0 0.0
    %3116 = vmatpush1.msra.mxu0 %v1819
    %3117 = vmatprep.subr.mxu0 0.0
    %3118 = vmatpush2.msra.mxu0 0.0
    %3119 = vmatprep.subr.mxu0 0.0
    %3120 = vmatpush2.msra.mxu0 0.0
    %3121 = vmatprep.subr.mxu0 0.0
    %3122 = vmatpush2.msra.mxu0 0.0
    %3123 = vmatprep.subr.mxu0 0.0
    %3124 = vmatpush2.msra.mxu0 0.0
    %3125 = vmatprep.subr.mxu0 0.0
    %3126 = vmatpush2.msra.mxu0 0.0
    %3127 = vmatprep.subr.mxu0 0.0
    %3128 = vmatpush2.msra.mxu0 0.0
    %3129 = vmatprep.subr.mxu0 0.0
    %3130 = vmatpush2.msra.mxu0 0.0
    %3131 = vmatprep.subr.mxu0 0.0
    %3132 = vmatpush2.msra.mxu0 0.0
    %3133 = vmatprep.subr.mxu0 0.0
    %3134 = vmatpush2.msra.mxu0 0.0
    %3135 = vmatprep.subr.mxu0 0.0
    %3136 = vmatpush2.msra.mxu0 0.0
    %3137 = vmatprep.subr.mxu0 0.0
    %3138 = vmatpush2.msra.mxu0 0.0
    %3139 = vmatprep.subr.mxu0 0.0
    %3140 = vmatpush2.msra.mxu0 0.0
    %3141 = vmatprep.subr.mxu0 0.0
    %3142 = vmatpush2.msra.mxu0 0.0
    %3143 = vmatprep.subr.mxu0 0.0
    %3144 = vmatpush2.msra.mxu0 0.0
    %3145 = vmatprep.subr.mxu0 0.0
    %3146 = vmatpush2.msra.mxu0 0.0
    %3147 = vmatprep.subr.mxu0 0.0
    %3148 = vmatpush2.msra.mxu0 0.0
    %3149 = vmatprep.mubr.f32.mxu0 0.0
    %3150 = vmatmul.mubr.f32.gmra.mxu0 %v3083
    %v3151 = vpop.f32.mrf.mxu0
    %v3152 = vadd.f32 0.0, %v3151
    %v3153 = vpop.f32.mrf.mxu0
    %3154 = vdwg.mxu0
    %v3155 = vld [vmem:[%s3] sm:$0xff]
    %v3156 = vld [vmem:[%s3 + $0x8] sm:$0xff]
    %v3157 = vld [vmem:[%s3 + $0x10] sm:$0xff]
    %v3158 = vld [vmem:[%s3 + $0x18] sm:$0xff]
    %v3159 = vld [vmem:[%s3 + $0x20] sm:$0xff]
    %v3160 = vld [vmem:[%s3 + $0x28] sm:$0xff]
    %v3161 = vld [vmem:[%s3 + $0x30] sm:$0xff]
    %v3162 = vld [vmem:[%s3 + $0x38] sm:$0xff]
    %v3164 = vsel %vm1822, %v2641, 0
    %3166 = vmatprep.subr.mxu0 0.0
    %3167 = vmatpush1.msra.mxu0 0.0
    %3168 = vmatprep.subr.mxu0 0.0
    %3169 = vmatpush1.msra.mxu0 0.0
    %3170 = vmatprep.subr.mxu0 0.0
    %3171 = vmatpush1.msra.mxu0 0.0
    %3172 = vmatprep.subr.mxu0 0.0
    %3173 = vmatpush1.msra.mxu0 0.0
    %3174 = vmatprep.subr.mxu0 0.0
    %3175 = vmatpush1.msra.mxu0 0.0
    %3176 = vmatprep.subr.mxu0 0.0
    %3177 = vmatpush1.msra.mxu0 0.0
    %3178 = vmatprep.subr.mxu0 0.0
    %3179 = vmatpush1.msra.mxu0 0.0
    %3180 = vmatprep.subr.mxu0 0.0
    %3181 = vmatpush1.msra.mxu0 0.0
    %3182 = vmatprep.subr.mxu0 0.0
    %3183 = vmatpush1.msra.mxu0 0.0
    %3184 = vmatprep.subr.mxu0 0.0
    %3185 = vmatpush1.msra.mxu0 0.0
    %3186 = vmatprep.subr.mxu0 0.0
    %3187 = vmatpush1.msra.mxu0 0.0
    %3188 = vmatprep.subr.mxu0 0.0
    %3189 = vmatpush1.msra.mxu0 0.0
    %3190 = vmatprep.subr.mxu0 0.0
    %3191 = vmatpush1.msra.mxu0 0.0
    %3192 = vmatprep.subr.mxu0 0.0
    %3193 = vmatpush1.msra.mxu0 0.0
    %3194 = vmatprep.subr.mxu0 0.0
    %3195 = vmatpush1.msra.mxu0 0.0
    %3196 = vmatprep.subr.mxu0 0.0
    %3197 = vmatpush1.msra.mxu0 %v3155
    %3198 = vmatprep.subr.mxu0 0.0
    %3199 = vmatpush2.msra.mxu0 0.0
    %3200 = vmatprep.subr.mxu0 0.0
    %3201 = vmatpush2.msra.mxu0 0.0
    %3202 = vmatprep.subr.mxu0 0.0
    %3203 = vmatpush2.msra.mxu0 0.0
    %3204 = vmatprep.subr.mxu0 0.0
    %3205 = vmatpush2.msra.mxu0 0.0
    %3206 = vmatprep.subr.mxu0 0.0
    %3207 = vmatpush2.msra.mxu0 0.0
    %3208 = vmatprep.subr.mxu0 0.0
    %3209 = vmatpush2.msra.mxu0 0.0
    %3210 = vmatprep.subr.mxu0 0.0
    %3211 = vmatpush2.msra.mxu0 0.0
    %3212 = vmatprep.subr.mxu0 0.0
    %3213 = vmatpush2.msra.mxu0 0.0
    %3214 = vmatprep.subr.mxu0 0.0
    %3215 = vmatpush2.msra.mxu0 0.0
    %3216 = vmatprep.subr.mxu0 0.0
    %3217 = vmatpush2.msra.mxu0 0.0
    %3218 = vmatprep.subr.mxu0 0.0
    %3219 = vmatpush2.msra.mxu0 0.0
    %3220 = vmatprep.subr.mxu0 0.0
    %3221 = vmatpush2.msra.mxu0 0.0
    %3222 = vmatprep.subr.mxu0 0.0
    %3223 = vmatpush2.msra.mxu0 0.0
    %3224 = vmatprep.subr.mxu0 0.0
    %3225 = vmatpush2.msra.mxu0 0.0
    %3226 = vmatprep.subr.mxu0 0.0
    %3227 = vmatpush2.msra.mxu0 0.0
    %3228 = vmatprep.subr.mxu0 0.0
    %3229 = vmatpush2.msra.mxu0 0.0
    %3230 = vmatprep.mubr.f32.mxu0 0.0
    %3231 = vmatmul.mubr.f32.gmra.mxu0 %v3164
    %v3232 = vpop.f32.mrf.mxu0
    %v3233 = vadd.f32 0.0, %v3232
    %v3234 = vpop.f32.mrf.mxu0
    %3235 = vdwg.mxu0
    %v3237 = vsel %vm1822, %v2714, 0
    %3239 = vmatprep.subr.mxu0 0.0
    %3240 = vmatpush1.msra.mxu0 0.0
    %3241 = vmatprep.subr.mxu0 0.0
    %3242 = vmatpush1.msra.mxu0 0.0
    %3243 = vmatprep.subr.mxu0 0.0
    %3244 = vmatpush1.msra.mxu0 0.0
    %3245 = vmatprep.subr.mxu0 0.0
    %3246 = vmatpush1.msra.mxu0 0.0
    %3247 = vmatprep.subr.mxu0 0.0
    %3248 = vmatpush1.msra.mxu0 0.0
    %3249 = vmatprep.subr.mxu0 0.0
    %3250 = vmatpush1.msra.mxu0 0.0
    %3251 = vmatprep.subr.mxu0 0.0
    %3252 = vmatpush1.msra.mxu0 0.0
    %3253 = vmatprep.subr.mxu0 0.0
    %3254 = vmatpush1.msra.mxu0 0.0
    %3255 = vmatprep.subr.mxu0 0.0
    %3256 = vmatpush1.msra.mxu0 0.0
    %3257 = vmatprep.subr.mxu0 0.0
    %3258 = vmatpush1.msra.mxu0 0.0
    %3259 = vmatprep.subr.mxu0 0.0
    %3260 = vmatpush1.msra.mxu0 0.0
    %3261 = vmatprep.subr.mxu0 0.0
    %3262 = vmatpush1.msra.mxu0 0.0
    %3263 = vmatprep.subr.mxu0 0.0
    %3264 = vmatpush1.msra.mxu0 0.0
    %3265 = vmatprep.subr.mxu0 0.0
    %3266 = vmatpush1.msra.mxu0 0.0
    %3267 = vmatprep.subr.mxu0 0.0
    %3268 = vmatpush1.msra.mxu0 0.0
    %3269 = vmatprep.subr.mxu0 0.0
    %3270 = vmatpush1.msra.mxu0 %v3156
    %3271 = vmatprep.subr.mxu0 0.0
    %3272 = vmatpush2.msra.mxu0 0.0
    %3273 = vmatprep.subr.mxu0 0.0
    %3274 = vmatpush2.msra.mxu0 0.0
    %3275 = vmatprep.subr.mxu0 0.0
    %3276 = vmatpush2.msra.mxu0 0.0
    %3277 = vmatprep.subr.mxu0 0.0
    %3278 = vmatpush2.msra.mxu0 0.0
    %3279 = vmatprep.subr.mxu0 0.0
    %3280 = vmatpush2.msra.mxu0 0.0
    %3281 = vmatprep.subr.mxu0 0.0
    %3282 = vmatpush2.msra.mxu0 0.0
    %3283 = vmatprep.subr.mxu0 0.0
    %3284 = vmatpush2.msra.mxu0 0.0
    %3285 = vmatprep.subr.mxu0 0.0
    %3286 = vmatpush2.msra.mxu0 0.0
    %3287 = vmatprep.subr.mxu0 0.0
    %3288 = vmatpush2.msra.mxu0 0.0
    %3289 = vmatprep.subr.mxu0 0.0
    %3290 = vmatpush2.msra.mxu0 0.0
    %3291 = vmatprep.subr.mxu0 0.0
    %3292 = vmatpush2.msra.mxu0 0.0
    %3293 = vmatprep.subr.mxu0 0.0
    %3294 = vmatpush2.msra.mxu0 0.0
    %3295 = vmatprep.subr.mxu0 0.0
    %3296 = vmatpush2.msra.mxu0 0.0
    %3297 = vmatprep.subr.mxu0 0.0
    %3298 = vmatpush2.msra.mxu0 0.0
    %3299 = vmatprep.subr.mxu0 0.0
    %3300 = vmatpush2.msra.mxu0 0.0
    %3301 = vmatprep.subr.mxu0 0.0
    %3302 = vmatpush2.msra.mxu0 0.0
    %3303 = vmatprep.mubr.f32.mxu0 0.0
    %3304 = vmatmul.mubr.f32.gmra.mxu0 %v3237
    %v3305 = vpop.f32.mrf.mxu0
    %v3306 = vadd.f32 0.0, %v3305
    %v3307 = vpop.f32.mrf.mxu0
    %3308 = vdwg.mxu0
    %v3310 = vsel %vm1822, %v2787, 0
    %3312 = vmatprep.subr.mxu0 0.0
    %3313 = vmatpush1.msra.mxu0 0.0
    %3314 = vmatprep.subr.mxu0 0.0
    %3315 = vmatpush1.msra.mxu0 0.0
    %3316 = vmatprep.subr.mxu0 0.0
    %3317 = vmatpush1.msra.mxu0 0.0
    %3318 = vmatprep.subr.mxu0 0.0
    %3319 = vmatpush1.msra.mxu0 0.0
    %3320 = vmatprep.subr.mxu0 0.0
    %3321 = vmatpush1.msra.mxu0 0.0
    %3322 = vmatprep.subr.mxu0 0.0
    %3323 = vmatpush1.msra.mxu0 0.0
    %3324 = vmatprep.subr.mxu0 0.0
    %3325 = vmatpush1.msra.mxu0 0.0
    %3326 = vmatprep.subr.mxu0 0.0
    %3327 = vmatpush1.msra.mxu0 0.0
    %3328 = vmatprep.subr.mxu0 0.0
    %3329 = vmatpush1.msra.mxu0 0.0
    %3330 = vmatprep.subr.mxu0 0.0
    %3331 = vmatpush1.msra.mxu0 0.0
    %3332 = vmatprep.subr.mxu0 0.0
    %3333 = vmatpush1.msra.mxu0 0.0
    %3334 = vmatprep.subr.mxu0 0.0
    %3335 = vmatpush1.msra.mxu0 0.0
    %3336 = vmatprep.subr.mxu0 0.0
    %3337 = vmatpush1.msra.mxu0 0.0
    %3338 = vmatprep.subr.mxu0 0.0
    %3339 = vmatpush1.msra.mxu0 0.0
    %3340 = vmatprep.subr.mxu0 0.0
    %3341 = vmatpush1.msra.mxu0 0.0
    %3342 = vmatprep.subr.mxu0 0.0
    %3343 = vmatpush1.msra.mxu0 %v3157
    %3344 = vmatprep.subr.mxu0 0.0
    %3345 = vmatpush2.msra.mxu0 0.0
    %3346 = vmatprep.subr.mxu0 0.0
    %3347 = vmatpush2.msra.mxu0 0.0
    %3348 = vmatprep.subr.mxu0 0.0
    %3349 = vmatpush2.msra.mxu0 0.0
    %3350 = vmatprep.subr.mxu0 0.0
    %3351 = vmatpush2.msra.mxu0 0.0
    %3352 = vmatprep.subr.mxu0 0.0
    %3353 = vmatpush2.msra.mxu0 0.0
    %3354 = vmatprep.subr.mxu0 0.0
    %3355 = vmatpush2.msra.mxu0 0.0
    %3356 = vmatprep.subr.mxu0 0.0
    %3357 = vmatpush2.msra.mxu0 0.0
    %3358 = vmatprep.subr.mxu0 0.0
    %3359 = vmatpush2.msra.mxu0 0.0
    %3360 = vmatprep.subr.mxu0 0.0
    %3361 = vmatpush2.msra.mxu0 0.0
    %3362 = vmatprep.subr.mxu0 0.0
    %3363 = vmatpush2.msra.mxu0 0.0
    %3364 = vmatprep.subr.mxu0 0.0
    %3365 = vmatpush2.msra.mxu0 0.0
    %3366 = vmatprep.subr.mxu0 0.0
    %3367 = vmatpush2.msra.mxu0 0.0
    %3368 = vmatprep.subr.mxu0 0.0
    %3369 = vmatpush2.msra.mxu0 0.0
    %3370 = vmatprep.subr.mxu0 0.0
    %3371 = vmatpush2.msra.mxu0 0.0
    %3372 = vmatprep.subr.mxu0 0.0
    %3373 = vmatpush2.msra.mxu0 0.0
    %3374 = vmatprep.subr.mxu0 0.0
    %3375 = vmatpush2.msra.mxu0 0.0
    %3376 = vmatprep.mubr.f32.mxu0 0.0
    %3377 = vmatmul.mubr.f32.gmra.mxu0 %v3310
    %v3378 = vpop.f32.mrf.mxu0
    %v3379 = vadd.f32 0.0, %v3378
    %v3380 = vpop.f32.mrf.mxu0
    %3381 = vdwg.mxu0
    %v3383 = vsel %vm1822, %v2860, 0
    %3385 = vmatprep.subr.mxu0 0.0
    %3386 = vmatpush1.msra.mxu0 0.0
    %3387 = vmatprep.subr.mxu0 0.0
    %3388 = vmatpush1.msra.mxu0 0.0
    %3389 = vmatprep.subr.mxu0 0.0
    %3390 = vmatpush1.msra.mxu0 0.0
    %3391 = vmatprep.subr.mxu0 0.0
    %3392 = vmatpush1.msra.mxu0 0.0
    %3393 = vmatprep.subr.mxu0 0.0
    %3394 = vmatpush1.msra.mxu0 0.0
    %3395 = vmatprep.subr.mxu0 0.0
    %3396 = vmatpush1.msra.mxu0 0.0
    %3397 = vmatprep.subr.mxu0 0.0
    %3398 = vmatpush1.msra.mxu0 0.0
    %3399 = vmatprep.subr.mxu0 0.0
    %3400 = vmatpush1.msra.mxu0 0.0
    %3401 = vmatprep.subr.mxu0 0.0
    %3402 = vmatpush1.msra.mxu0 0.0
    %3403 = vmatprep.subr.mxu0 0.0
    %3404 = vmatpush1.msra.mxu0 0.0
    %3405 = vmatprep.subr.mxu0 0.0
    %3406 = vmatpush1.msra.mxu0 0.0
    %3407 = vmatprep.subr.mxu0 0.0
    %3408 = vmatpush1.msra.mxu0 0.0
    %3409 = vmatprep.subr.mxu0 0.0
    %3410 = vmatpush1.msra.mxu0 0.0
    %3411 = vmatprep.subr.mxu0 0.0
    %3412 = vmatpush1.msra.mxu0 0.0
    %3413 = vmatprep.subr.mxu0 0.0
    %3414 = vmatpush1.msra.mxu0 0.0
    %3415 = vmatprep.subr.mxu0 0.0
    %3416 = vmatpush1.msra.mxu0 %v3158
    %3417 = vmatprep.subr.mxu0 0.0
    %3418 = vmatpush2.msra.mxu0 0.0
    %3419 = vmatprep.subr.mxu0 0.0
    %3420 = vmatpush2.msra.mxu0 0.0
    %3421 = vmatprep.subr.mxu0 0.0
    %3422 = vmatpush2.msra.mxu0 0.0
    %3423 = vmatprep.subr.mxu0 0.0
    %3424 = vmatpush2.msra.mxu0 0.0
    %3425 = vmatprep.subr.mxu0 0.0
    %3426 = vmatpush2.msra.mxu0 0.0
    %3427 = vmatprep.subr.mxu0 0.0
    %3428 = vmatpush2.msra.mxu0 0.0
    %3429 = vmatprep.subr.mxu0 0.0
    %3430 = vmatpush2.msra.mxu0 0.0
    %3431 = vmatprep.subr.mxu0 0.0
    %3432 = vmatpush2.msra.mxu0 0.0
    %3433 = vmatprep.subr.mxu0 0.0
    %3434 = vmatpush2.msra.mxu0 0.0
    %3435 = vmatprep.subr.mxu0 0.0
    %3436 = vmatpush2.msra.mxu0 0.0
    %3437 = vmatprep.subr.mxu0 0.0
    %3438 = vmatpush2.msra.mxu0 0.0
    %3439 = vmatprep.subr.mxu0 0.0
    %3440 = vmatpush2.msra.mxu0 0.0
    %3441 = vmatprep.subr.mxu0 0.0
    %3442 = vmatpush2.msra.mxu0 0.0
    %3443 = vmatprep.subr.mxu0 0.0
    %3444 = vmatpush2.msra.mxu0 0.0
    %3445 = vmatprep.subr.mxu0 0.0
    %3446 = vmatpush2.msra.mxu0 0.0
    %3447 = vmatprep.subr.mxu0 0.0
    %3448 = vmatpush2.msra.mxu0 0.0
    %3449 = vmatprep.mubr.f32.mxu0 0.0
    %3450 = vmatmul.mubr.f32.gmra.mxu0 %v3383
    %v3451 = vpop.f32.mrf.mxu0
    %v3452 = vadd.f32 0.0, %v3451
    %v3453 = vpop.f32.mrf.mxu0
    %3454 = vdwg.mxu0
    %v3456 = vsel %vm1822, %v2933, 0
    %3458 = vmatprep.subr.mxu0 0.0
    %3459 = vmatpush1.msra.mxu0 0.0
    %3460 = vmatprep.subr.mxu0 0.0
    %3461 = vmatpush1.msra.mxu0 0.0
    %3462 = vmatprep.subr.mxu0 0.0
    %3463 = vmatpush1.msra.mxu0 0.0
    %3464 = vmatprep.subr.mxu0 0.0
    %3465 = vmatpush1.msra.mxu0 0.0
    %3466 = vmatprep.subr.mxu0 0.0
    %3467 = vmatpush1.msra.mxu0 0.0
    %3468 = vmatprep.subr.mxu0 0.0
    %3469 = vmatpush1.msra.mxu0 0.0
    %3470 = vmatprep.subr.mxu0 0.0
    %3471 = vmatpush1.msra.mxu0 0.0
    %3472 = vmatprep.subr.mxu0 0.0
    %3473 = vmatpush1.msra.mxu0 0.0
    %3474 = vmatprep.subr.mxu0 0.0
    %3475 = vmatpush1.msra.mxu0 0.0
    %3476 = vmatprep.subr.mxu0 0.0
    %3477 = vmatpush1.msra.mxu0 0.0
    %3478 = vmatprep.subr.mxu0 0.0
    %3479 = vmatpush1.msra.mxu0 0.0
    %3480 = vmatprep.subr.mxu0 0.0
    %3481 = vmatpush1.msra.mxu0 0.0
    %3482 = vmatprep.subr.mxu0 0.0
    %3483 = vmatpush1.msra.mxu0 0.0
    %3484 = vmatprep.subr.mxu0 0.0
    %3485 = vmatpush1.msra.mxu0 0.0
    %3486 = vmatprep.subr.mxu0 0.0
    %3487 = vmatpush1.msra.mxu0 0.0
    %3488 = vmatprep.subr.mxu0 0.0
    %3489 = vmatpush1.msra.mxu0 %v3159
    %3490 = vmatprep.subr.mxu0 0.0
    %3491 = vmatpush2.msra.mxu0 0.0
    %3492 = vmatprep.subr.mxu0 0.0
    %3493 = vmatpush2.msra.mxu0 0.0
    %3494 = vmatprep.subr.mxu0 0.0
    %3495 = vmatpush2.msra.mxu0 0.0
    %3496 = vmatprep.subr.mxu0 0.0
    %3497 = vmatpush2.msra.mxu0 0.0
    %3498 = vmatprep.subr.mxu0 0.0
    %3499 = vmatpush2.msra.mxu0 0.0
    %3500 = vmatprep.subr.mxu0 0.0
    %3501 = vmatpush2.msra.mxu0 0.0
    %3502 = vmatprep.subr.mxu0 0.0
    %3503 = vmatpush2.msra.mxu0 0.0
    %3504 = vmatprep.subr.mxu0 0.0
    %3505 = vmatpush2.msra.mxu0 0.0
    %3506 = vmatprep.subr.mxu0 0.0
    %3507 = vmatpush2.msra.mxu0 0.0
    %3508 = vmatprep.subr.mxu0 0.0
    %3509 = vmatpush2.msra.mxu0 0.0
    %3510 = vmatprep.subr.mxu0 0.0
    %3511 = vmatpush2.msra.mxu0 0.0
    %3512 = vmatprep.subr.mxu0 0.0
    %3513 = vmatpush2.msra.mxu0 0.0
    %3514 = vmatprep.subr.mxu0 0.0
    %3515 = vmatpush2.msra.mxu0 0.0
    %3516 = vmatprep.subr.mxu0 0.0
    %3517 = vmatpush2.msra.mxu0 0.0
    %3518 = vmatprep.subr.mxu0 0.0
    %3519 = vmatpush2.msra.mxu0 0.0
    %3520 = vmatprep.subr.mxu0 0.0
    %3521 = vmatpush2.msra.mxu0 0.0
    %3522 = vmatprep.mubr.f32.mxu0 0.0
    %3523 = vmatmul.mubr.f32.gmra.mxu0 %v3456
    %v3524 = vpop.f32.mrf.mxu0
    %v3525 = vadd.f32 0.0, %v3524
    %v3526 = vpop.f32.mrf.mxu0
    %3527 = vdwg.mxu0
    %v3529 = vsel %vm1822, %v3006, 0
    %3531 = vmatprep.subr.mxu0 0.0
    %3532 = vmatpush1.msra.mxu0 0.0
    %3533 = vmatprep.subr.mxu0 0.0
    %3534 = vmatpush1.msra.mxu0 0.0
    %3535 = vmatprep.subr.mxu0 0.0
    %3536 = vmatpush1.msra.mxu0 0.0
    %3537 = vmatprep.subr.mxu0 0.0
    %3538 = vmatpush1.msra.mxu0 0.0
    %3539 = vmatprep.subr.mxu0 0.0
    %3540 = vmatpush1.msra.mxu0 0.0
    %3541 = vmatprep.subr.mxu0 0.0
    %3542 = vmatpush1.msra.mxu0 0.0
    %3543 = vmatprep.subr.mxu0 0.0
    %3544 = vmatpush1.msra.mxu0 0.0
    %3545 = vmatprep.subr.mxu0 0.0
    %3546 = vmatpush1.msra.mxu0 0.0
    %3547 = vmatprep.subr.mxu0 0.0
    %3548 = vmatpush1.msra.mxu0 0.0
    %3549 = vmatprep.subr.mxu0 0.0
    %3550 = vmatpush1.msra.mxu0 0.0
    %3551 = vmatprep.subr.mxu0 0.0
    %3552 = vmatpush1.msra.mxu0 0.0
    %3553 = vmatprep.subr.mxu0 0.0
    %3554 = vmatpush1.msra.mxu0 0.0
    %3555 = vmatprep.subr.mxu0 0.0
    %3556 = vmatpush1.msra.mxu0 0.0
    %3557 = vmatprep.subr.mxu0 0.0
    %3558 = vmatpush1.msra.mxu0 0.0
    %3559 = vmatprep.subr.mxu0 0.0
    %3560 = vmatpush1.msra.mxu0 0.0
    %3561 = vmatprep.subr.mxu0 0.0
    %3562 = vmatpush1.msra.mxu0 %v3160
    %3563 = vmatprep.subr.mxu0 0.0
    %3564 = vmatpush2.msra.mxu0 0.0
    %3565 = vmatprep.subr.mxu0 0.0
    %3566 = vmatpush2.msra.mxu0 0.0
    %3567 = vmatprep.subr.mxu0 0.0
    %3568 = vmatpush2.msra.mxu0 0.0
    %3569 = vmatprep.subr.mxu0 0.0
    %3570 = vmatpush2.msra.mxu0 0.0
    %3571 = vmatprep.subr.mxu0 0.0
    %3572 = vmatpush2.msra.mxu0 0.0
    %3573 = vmatprep.subr.mxu0 0.0
    %3574 = vmatpush2.msra.mxu0 0.0
    %3575 = vmatprep.subr.mxu0 0.0
    %3576 = vmatpush2.msra.mxu0 0.0
    %3577 = vmatprep.subr.mxu0 0.0
    %3578 = vmatpush2.msra.mxu0 0.0
    %3579 = vmatprep.subr.mxu0 0.0
    %3580 = vmatpush2.msra.mxu0 0.0
    %3581 = vmatprep.subr.mxu0 0.0
    %3582 = vmatpush2.msra.mxu0 0.0
    %3583 = vmatprep.subr.mxu0 0.0
    %3584 = vmatpush2.msra.mxu0 0.0
    %3585 = vmatprep.subr.mxu0 0.0
    %3586 = vmatpush2.msra.mxu0 0.0
    %3587 = vmatprep.subr.mxu0 0.0
    %3588 = vmatpush2.msra.mxu0 0.0
    %3589 = vmatprep.subr.mxu0 0.0
    %3590 = vmatpush2.msra.mxu0 0.0
    %3591 = vmatprep.subr.mxu0 0.0
    %3592 = vmatpush2.msra.mxu0 0.0
    %3593 = vmatprep.subr.mxu0 0.0
    %3594 = vmatpush2.msra.mxu0 0.0
    %3595 = vmatprep.mubr.f32.mxu0 0.0
    %3596 = vmatmul.mubr.f32.gmra.mxu0 %v3529
    %v3597 = vpop.f32.mrf.mxu0
    %v3598 = vadd.f32 0.0, %v3597
    %v3599 = vpop.f32.mrf.mxu0
    %3600 = vdwg.mxu0
    %v3602 = vsel %vm1822, %v3079, 0
    %3604 = vmatprep.subr.mxu0 0.0
    %3605 = vmatpush1.msra.mxu0 0.0
    %3606 = vmatprep.subr.mxu0 0.0
    %3607 = vmatpush1.msra.mxu0 0.0
    %3608 = vmatprep.subr.mxu0 0.0
    %3609 = vmatpush1.msra.mxu0 0.0
    %3610 = vmatprep.subr.mxu0 0.0
    %3611 = vmatpush1.msra.mxu0 0.0
    %3612 = vmatprep.subr.mxu0 0.0
    %3613 = vmatpush1.msra.mxu0 0.0
    %3614 = vmatprep.subr.mxu0 0.0
    %3615 = vmatpush1.msra.mxu0 0.0
    %3616 = vmatprep.subr.mxu0 0.0
    %3617 = vmatpush1.msra.mxu0 0.0
    %3618 = vmatprep.subr.mxu0 0.0
    %3619 = vmatpush1.msra.mxu0 0.0
    %3620 = vmatprep.subr.mxu0 0.0
    %3621 = vmatpush1.msra.mxu0 0.0
    %3622 = vmatprep.subr.mxu0 0.0
    %3623 = vmatpush1.msra.mxu0 0.0
    %3624 = vmatprep.subr.mxu0 0.0
    %3625 = vmatpush1.msra.mxu0 0.0
    %3626 = vmatprep.subr.mxu0 0.0
    %3627 = vmatpush1.msra.mxu0 0.0
    %3628 = vmatprep.subr.mxu0 0.0
    %3629 = vmatpush1.msra.mxu0 0.0
    %3630 = vmatprep.subr.mxu0 0.0
    %3631 = vmatpush1.msra.mxu0 0.0
    %3632 = vmatprep.subr.mxu0 0.0
    %3633 = vmatpush1.msra.mxu0 0.0
    %3634 = vmatprep.subr.mxu0 0.0
    %3635 = vmatpush1.msra.mxu0 %v3161
    %3636 = vmatprep.subr.mxu0 0.0
    %3637 = vmatpush2.msra.mxu0 0.0
    %3638 = vmatprep.subr.mxu0 0.0
    %3639 = vmatpush2.msra.mxu0 0.0
    %3640 = vmatprep.subr.mxu0 0.0
    %3641 = vmatpush2.msra.mxu0 0.0
    %3642 = vmatprep.subr.mxu0 0.0
    %3643 = vmatpush2.msra.mxu0 0.0
    %3644 = vmatprep.subr.mxu0 0.0
    %3645 = vmatpush2.msra.mxu0 0.0
    %3646 = vmatprep.subr.mxu0 0.0
    %3647 = vmatpush2.msra.mxu0 0.0
    %3648 = vmatprep.subr.mxu0 0.0
    %3649 = vmatpush2.msra.mxu0 0.0
    %3650 = vmatprep.subr.mxu0 0.0
    %3651 = vmatpush2.msra.mxu0 0.0
    %3652 = vmatprep.subr.mxu0 0.0
    %3653 = vmatpush2.msra.mxu0 0.0
    %3654 = vmatprep.subr.mxu0 0.0
    %3655 = vmatpush2.msra.mxu0 0.0
    %3656 = vmatprep.subr.mxu0 0.0
    %3657 = vmatpush2.msra.mxu0 0.0
    %3658 = vmatprep.subr.mxu0 0.0
    %3659 = vmatpush2.msra.mxu0 0.0
    %3660 = vmatprep.subr.mxu0 0.0
    %3661 = vmatpush2.msra.mxu0 0.0
    %3662 = vmatprep.subr.mxu0 0.0
    %3663 = vmatpush2.msra.mxu0 0.0
    %3664 = vmatprep.subr.mxu0 0.0
    %3665 = vmatpush2.msra.mxu0 0.0
    %3666 = vmatprep.subr.mxu0 0.0
    %3667 = vmatpush2.msra.mxu0 0.0
    %3668 = vmatprep.mubr.f32.mxu0 0.0
    %3669 = vmatmul.mubr.f32.gmra.mxu0 %v3602
    %v3670 = vpop.f32.mrf.mxu0
    %v3671 = vadd.f32 0.0, %v3670
    %v3672 = vpop.f32.mrf.mxu0
    %3673 = vdwg.mxu0
    %v3675 = vsel %vm1822, %v3152, 0
    %3677 = vmatprep.subr.mxu0 0.0
    %3678 = vmatpush1.msra.mxu0 0.0
    %3679 = vmatprep.subr.mxu0 0.0
    %3680 = vmatpush1.msra.mxu0 0.0
    %3681 = vmatprep.subr.mxu0 0.0
    %3682 = vmatpush1.msra.mxu0 0.0
    %3683 = vmatprep.subr.mxu0 0.0
    %3684 = vmatpush1.msra.mxu0 0.0
    %3685 = vmatprep.subr.mxu0 0.0
    %3686 = vmatpush1.msra.mxu0 0.0
    %3687 = vmatprep.subr.mxu0 0.0
    %3688 = vmatpush1.msra.mxu0 0.0
    %3689 = vmatprep.subr.mxu0 0.0
    %3690 = vmatpush1.msra.mxu0 0.0
    %3691 = vmatprep.subr.mxu0 0.0
    %3692 = vmatpush1.msra.mxu0 0.0
    %3693 = vmatprep.subr.mxu0 0.0
    %3694 = vmatpush1.msra.mxu0 0.0
    %3695 = vmatprep.subr.mxu0 0.0
    %3696 = vmatpush1.msra.mxu0 0.0
    %3697 = vmatprep.subr.mxu0 0.0
    %3698 = vmatpush1.msra.mxu0 0.0
    %3699 = vmatprep.subr.mxu0 0.0
    %3700 = vmatpush1.msra.mxu0 0.0
    %3701 = vmatprep.subr.mxu0 0.0
    %3702 = vmatpush1.msra.mxu0 0.0
    %3703 = vmatprep.subr.mxu0 0.0
    %3704 = vmatpush1.msra.mxu0 0.0
    %3705 = vmatprep.subr.mxu0 0.0
    %3706 = vmatpush1.msra.mxu0 0.0
    %3707 = vmatprep.subr.mxu0 0.0
    %3708 = vmatpush1.msra.mxu0 %v3162
    %3709 = vmatprep.subr.mxu0 0.0
    %3710 = vmatpush2.msra.mxu0 0.0
    %3711 = vmatprep.subr.mxu0 0.0
    %3712 = vmatpush2.msra.mxu0 0.0
    %3713 = vmatprep.subr.mxu0 0.0
    %3714 = vmatpush2.msra.mxu0 0.0
    %3715 = vmatprep.subr.mxu0 0.0
    %3716 = vmatpush2.msra.mxu0 0.0
    %3717 = vmatprep.subr.mxu0 0.0
    %3718 = vmatpush2.msra.mxu0 0.0
    %3719 = vmatprep.subr.mxu0 0.0
    %3720 = vmatpush2.msra.mxu0 0.0
    %3721 = vmatprep.subr.mxu0 0.0
    %3722 = vmatpush2.msra.mxu0 0.0
    %3723 = vmatprep.subr.mxu0 0.0
    %3724 = vmatpush2.msra.mxu0 0.0
    %3725 = vmatprep.subr.mxu0 0.0
    %3726 = vmatpush2.msra.mxu0 0.0
    %3727 = vmatprep.subr.mxu0 0.0
    %3728 = vmatpush2.msra.mxu0 0.0
    %3729 = vmatprep.subr.mxu0 0.0
    %3730 = vmatpush2.msra.mxu0 0.0
    %3731 = vmatprep.subr.mxu0 0.0
    %3732 = vmatpush2.msra.mxu0 0.0
    %3733 = vmatprep.subr.mxu0 0.0
    %3734 = vmatpush2.msra.mxu0 0.0
    %3735 = vmatprep.subr.mxu0 0.0
    %3736 = vmatpush2.msra.mxu0 0.0
    %3737 = vmatprep.subr.mxu0 0.0
    %3738 = vmatpush2.msra.mxu0 0.0
    %3739 = vmatprep.subr.mxu0 0.0
    %3740 = vmatpush2.msra.mxu0 0.0
    %3741 = vmatprep.mubr.f32.mxu0 0.0
    %3742 = vmatmul.mubr.f32.gmra.mxu0 %v3675
    %v3743 = vpop.f32.mrf.mxu0
    %v3744 = vadd.f32 0.0, %v3743
    %v3745 = vpop.f32.mrf.mxu0
    %3746 = vdwg.mxu0
    %v3747 = vsel %vm123, %v3233, 0.0
    %v3748 = vsel %vm123, %v3306, 0.0
    %v3749 = vadd.f32 %v3747, %v3748
    %v3750 = vsel %vm123, %v3379, 0.0
    %v3751 = vadd.f32 %v3749, %v3750
    %v3752 = vsel %vm123, %v3452, 0.0
    %v3753 = vadd.f32 %v3751, %v3752
    %v3754 = vsel %vm123, %v3525, 0.0
    %v3755 = vsel %vm123, %v3598, 0.0
    %v3756 = vadd.f32 %v3754, %v3755
    %v3757 = vsel %vm123, %v3671, 0.0
    %v3758 = vadd.f32 %v3756, %v3757
    %v3759 = vsel %vm123, %v3744, 0.0
    %v3760 = vadd.f32 %v3758, %v3759
    %v3761 = vadd.f32 %v3753, %v21
    %v3762 = vadd.f32 %v3760, %v22
    %v3763 = vsel %vm123, %v3761, 0.0
    %3764 = vadd.xlane.f32.xlu0 %v3763
    %v3765 = vpop.xlane.xlu0 %3764
    %v3766 = vsel %vm123, %v3762, 0.0
    %3767 = vadd.xlane.f32.xlu0 %v3766
    %v3768 = vpop.xlane.xlu0 %3767
    %v3769 = vrcp.pop 32.0
    %v3770 = vmul.f32 %v3765, %v3769
    %v3771 = vmul.f32 %v3768, %v3769
    %v3772 = vsub.f32 %v3761, %v3770
    %v3773 = vsub.f32 %v3762, %v3771
    %v3774 = vmul.f32 %v3772, %v3772
    %v3775 = vmul.f32 %v3773, %v3773
    %v3776 = vsel %vm123, %v3774, 0.0
    %3777 = vadd.xlane.f32.xlu0 %v3776
    %v3778 = vpop.xlane.xlu0 %3777
    %v3779 = vsel %vm123, %v3775, 0.0
    %3780 = vadd.xlane.f32.xlu0 %v3779
    %v3781 = vpop.xlane.xlu0 %3780
    %v3782 = vmul.f32 %v3778, %v3769
    %v3783 = vmul.f32 %v3781, %v3769
    %v3784 = vadd.f32 %v3782, 1e-05
    %v3785 = vadd.f32 %v3783, 1e-05
    %v3786 = vrsqrt.pop %v3784
    %v3787 = vrsqrt.pop %v3785
    %v3788 = vmul.f32 %v3772, %v3786
    %v3789 = vmul.f32 %v3773, %v3787
    %3790 = vst.msk [vmem:[#allocation2] sm:$0xff] %vm123, %v3788
    %3791 = vst.msk [vmem:[#allocation2 + $0x8] sm:$0xff] %vm123, %v3789
    // Predicated region
    $region18: #{tpu_custom_call.1} parent=1 // pred_check
      _
    $region19: #{tpu_custom_call.1} parent=1 // pred_check_branch
      %3793 = sbr.rel (0) target = $region21
    $region20: #{tpu_custom_call.1} parent=1 // pred_region
      %s3795 = ssub.s32 256, 256
      %3796 = vsyncadd [#allocation3], %s3795
      %s3797 = sshll.u32 [#allocation2], 4
      %s3798 = int_to_ptr.vmem [resolvable:$true] %s3797
      %3803 = dma.vmem_to_hbm [thread:$0]  %s3798, 256, %s4, [#allocation3], 128, 128, 8
    $region21: #{tpu_custom_call.1} parent=1 // pred_fallthru
      _
    // Predicated region
    $region22: #{tpu_custom_call.1} parent=1 // pred_check
      _
    $region23: #{tpu_custom_call.1} parent=1 // pred_check_branch
      %3805 = sbr.rel (0) target = $region25
    $region24: #{tpu_custom_call.1} parent=1 // pred_region
      %s3807 = ssub.s32 1024, 1024
      %3808 = vsyncadd [#allocation5], %s3807
      %s3809 = sshll.u32 [#allocation4], 4
      %s3810 = int_to_ptr.vmem [resolvable:$true] %s3809
      %3815 = dma.vmem_to_hbm [thread:$0]  %s3810, 1024, %s5, [#allocation5], 128, 128, 8
    $region25: #{tpu_custom_call.1} parent=1 // pred_fallthru
      _
    // Predicated region
    $region26: #{tpu_custom_call.1} parent=1 // pred_check
      _
    $region27: #{tpu_custom_call.1} parent=1 // pred_check_branch
      %3817 = sbr.rel (0) target = $region29
    $region28: #{tpu_custom_call.1} parent=1 // pred_region
      %3818 = dma.done [#allocation3], 256
    $region29: #{tpu_custom_call.1} parent=1 // pred_fallthru
      _
    // Predicated region
    $region30: #{tpu_custom_call.1} parent=1 // pred_check
      _
    $region31: #{tpu_custom_call.1} parent=1 // pred_check_branch
      %3820 = sbr.rel (0) target = $region33
    $region32: #{tpu_custom_call.1} parent=1 // pred_region
      %3821 = dma.done [#allocation5], 1024
    $region33: #{tpu_custom_call.1} parent=1 // pred_fallthru
      _
    %3822 = vsyncpa [#allocation3], 1
    %3823 = vsyncpa [#allocation5], 1

</llo_original>
